<compile_context>
chip_gen: v7x
topology: tpu7x:2x2x1
jax: 0.10.0
libtpu: 0.0.40
codegen_flags: <defaults>
</compile_context>

<pallas_src>
import functools

import jax
import jax.numpy as jnp
from jax.experimental import pallas as pl
from jax.experimental.pallas import tpu as pltpu

_EPS = 1e-5
_LANE = 128


def _round_up(x, m):
    return (x + m - 1) // m * m


def _compiler_params():
    return pltpu.CompilerParams(
        dimension_semantics=("parallel", "parallel"),
        vmem_limit_bytes=32 * 1024 * 1024,
    )


# ----------------------------------------------------------------------------
# kernels
# ----------------------------------------------------------------------------
def _conv_row(stacked, w_ref, wp):
    """stacked: (Wp+2, 3*Cin_p) bf16 (the three kh-rows concatenated on lanes).
    w_ref: (3, 3*Cin_p, Cout_p) bf16.  Returns f32 (Wp, Cout_p)."""
    acc = jnp.zeros((wp, w_ref.shape[2]), jnp.float32)
    for kw in range(3):  # 3 MXU matmuls, K = 3*Cin_p
        acc = acc + jnp.dot(stacked[kw:kw + wp, :], w_ref[kw],
                            preferred_element_type=jnp.float32)
    return acc


def _pool_conv_stats_kernel(x0_ref, x1_ref, x2_ref, w_ref, y_ref, st_ref,
                            *, wp, cin_p):
    # x*_ref: (1, 2, Wp+2, 2*Cin_p) bf16 -- the two un-pooled input rows whose
    #         2x2 max gives padded-pooled row (i-1+d); even/odd input columns
    #         are pre-interleaved along the channel axis (free XLA reshape).
    # w_ref : (3, 3*Cin_p, C1_p) bf16
    # y_ref : (1, 1, Wp, C1_p) bf16   raw conv1 output (pre-BN)
    # st_ref: (1, 1, 2, C1_p) f32     per-block [sum, sum of squares]
    rows = []
    for xr in (x0_ref, x1_ref, x2_ref):
        v = xr[0]                                    # (2, Wp+2, 2*Cin_p)
        m = jnp.maximum(v[0], v[1])                  # max over the 2 rows
        rows.append(jnp.maximum(m[:, :cin_p], m[:, cin_p:]))  # max over 2 cols
    stacked = jnp.concatenate(rows, axis=-1)         # (Wp+2, 3*Cin_p)
    acc = _conv_row(stacked, w_ref, wp)              # (Wp, C1_p) f32
    y_ref[0, 0] = acc.astype(y_ref.dtype)
    st_ref[0, 0] = jnp.concatenate(
        [jnp.sum(acc, axis=0, keepdims=True),
         jnp.sum(acc * acc, axis=0, keepdims=True)], axis=0)


def _conv_stats_kernel(x0_ref, x1_ref, x2_ref, w_ref, y_ref, st_ref, *, wp):
    # x*_ref: (1, 1, Wp+2, C1_p) bf16 -- padded activation rows i, i+1, i+2
    rows = [xr[0, 0] for xr in (x0_ref, x1_ref, x2_ref)]
    stacked = jnp.concatenate(rows, axis=-1)         # (Wp+2, 3*C1_p)
    acc = _conv_row(stacked, w_ref, wp)              # (Wp, C2_p) f32
    y_ref[0, 0] = acc.astype(y_ref.dtype)
    st_ref[0, 0] = jnp.concatenate(
        [jnp.sum(acc, axis=0, keepdims=True),
         jnp.sum(acc * acc, axis=0, keepdims=True)], axis=0)


def _bn_relu_pad_kernel(y_ref, sc_ref, sh_ref, o_ref, *, hp, wp):
    # Applies BN scale/shift + ReLU and writes the zero conv halo directly:
    # output row r of the (Hp+2, Wp+2) padded map.
    r = pl.program_id(1)
    o_ref[...] = jnp.zeros_like(o_ref)

    @pl.when(jnp.logical_and(r >= 1, r <= hp))
    def _():
        y = y_ref[0, 0].astype(jnp.float32)                      # (Wp, C)
        z = jnp.maximum(y * sc_ref[...] + sh_ref[...], 0.0)
        o_ref[0, 0, 1:1 + wp, :] = z.astype(o_ref.dtype)


def _bn_relu_kernel(y_ref, sc_ref, sh_ref, o_ref):
    y = y_ref[0, 0].astype(jnp.float32)
    o_ref[0, 0] = jnp.maximum(y * sc_ref[...] + sh_ref[...],
                              0.0).astype(o_ref.dtype)


# ----------------------------------------------------------------------------
# pallas_call wrappers
# ----------------------------------------------------------------------------
def _conv1_call(xpad2, w1k, n, hp, wp, cin_p, c1p):
    in_specs = [
        pl.BlockSpec((1, 2, wp + 2, 2 * cin_p),
                     lambda ni, i, d=d: (ni, i + d, 0, 0))
        for d in range(3)
    ] + [pl.BlockSpec((3, 3 * cin_p, c1p), lambda ni, i: (0, 0, 0))]
    out_specs = (
        pl.BlockSpec((1, 1, wp, c1p), lambda ni, i: (ni, i, 0, 0)),
        pl.BlockSpec((1, 1, 2, c1p), lambda ni, i: (ni, i, 0, 0)),
    )
    out_shape = (
        jax.ShapeDtypeStruct((n, hp, wp, c1p), jnp.bfloat16),
        jax.ShapeDtypeStruct((n, hp, 2, c1p), jnp.float32),
    )
    return pl.pallas_call(
        functools.partial(_pool_conv_stats_kernel, wp=wp, cin_p=cin_p),
        grid=(n, hp), in_specs=in_specs, out_specs=out_specs,
        out_shape=out_shape, compiler_params=_compiler_params(),
    )(xpad2, xpad2, xpad2, w1k)


def _conv2_call(y1pad, w2k, n, hp, wp, c1p, c2p):
    in_specs = [
        pl.BlockSpec((1, 1, wp + 2, c1p),
                     lambda ni, i, d=d: (ni, i + d, 0, 0))
        for d in range(3)
    ] + [pl.BlockSpec((3, 3 * c1p, c2p), lambda ni, i: (0, 0, 0))]
    out_specs = (
        pl.BlockSpec((1, 1, wp, c2p), lambda ni, i: (ni, i, 0, 0)),
        pl.BlockSpec((1, 1, 2, c2p), lambda ni, i: (ni, i, 0, 0)),
    )
    out_shape = (
        jax.ShapeDtypeStruct((n, hp, wp, c2p), jnp.bfloat16),
        jax.ShapeDtypeStruct((n, hp, 2, c2p), jnp.float32),
    )
    return pl.pallas_call(
        functools.partial(_conv_stats_kernel, wp=wp),
        grid=(n, hp), in_specs=in_specs, out_specs=out_specs,
        out_shape=out_shape, compiler_params=_compiler_params(),
    )(y1pad, y1pad, y1pad, w2k)


def _bn_relu_pad_call(y_raw, scale, shift, n, hp, wp, c):
    in_specs = [
        pl.BlockSpec((1, 1, wp, c),
                     lambda ni, r: (ni, jnp.clip(r - 1, 0, hp - 1), 0, 0)),
        pl.BlockSpec((1, c), lambda ni, r: (0, 0)),
        pl.BlockSpec((1, c), lambda ni, r: (0, 0)),
    ]
    out_spec = pl.BlockSpec((1, 1, wp + 2, c), lambda ni, r: (ni, r, 0, 0))
    return pl.pallas_call(
        functools.partial(_bn_relu_pad_kernel, hp=hp, wp=wp),
        grid=(n, hp + 2), in_specs=in_specs, out_specs=out_spec,
        out_shape=jax.ShapeDtypeStruct((n, hp + 2, wp + 2, c), jnp.bfloat16),
        compiler_params=_compiler_params(),
    )(y_raw, scale, shift)


def _bn_relu_call(y_raw, scale, shift, n, hp, wp, c):
    in_specs = [
        pl.BlockSpec((1, 1, wp, c), lambda ni, r: (ni, r, 0, 0)),
        pl.BlockSpec((1, c), lambda ni, r: (0, 0)),
        pl.BlockSpec((1, c), lambda ni, r: (0, 0)),
    ]
    out_spec = pl.BlockSpec((1, 1, wp, c), lambda ni, r: (ni, r, 0, 0))
    return pl.pallas_call(
        _bn_relu_kernel,
        grid=(n, hp), in_specs=in_specs, out_specs=out_spec,
        out_shape=jax.ShapeDtypeStruct((n, hp, wp, c), jnp.float32),
        compiler_params=_compiler_params(),
    )(y_raw, scale, shift)


# ----------------------------------------------------------------------------
# forward
# ----------------------------------------------------------------------------
def _bn_scale_shift(stats, gamma, beta, count):
    """Fold global batch mean/var (biased) + gamma/beta into scale/shift."""
    tot = jnp.sum(stats, axis=(0, 1))                       # (2, C) f32
    mean = tot[0] / count
    var = jnp.maximum(tot[1] / count - mean * mean, 0.0)
    scale = gamma * jax.lax.rsqrt(var + _EPS)               # (1, C)
    shift = beta - mean * scale
    return scale, shift


def down_forward(x_nchw, params, *, out_ch):
    """Down(in_ch, out_ch) forward.  x_nchw: (N, Cin, H, W) float32.
    Returns (N, out_ch, H//2, W//2) float32 (same NCHW convention as PyTorch)."""
    n, cin, h, w = x_nchw.shape
    hp, wp = h // 2, w // 2
    w1k, w2k = params["w1k"], params["w2k"]
    cin_p = w1k.shape[1] // 3
    c1p = w1k.shape[2]
    c2p = w2k.shape[2]
    count = float(n * hp * wp)

    # NCHW -> NHWC, zero-pad (2 rows/cols each side: pool + conv halo in one
    # pass), zero-pad channels to a lane multiple, cast to bf16 for the MXU.
    x = jnp.transpose(x_nchw, (0, 2, 3, 1)).astype(jnp.float32)
    x = jnp.pad(x, ((0, 0), (2, 2), (2, 2), (0, cin_p - cin)))
    x = x.astype(jnp.bfloat16)
    # interleave even/odd columns along the channel axis (free reshape) so the
    # 2x2-max of the pooling window is a pure lane-aligned elementwise max.
    x = x.reshape(n, h + 4, wp + 2, 2 * cin_p)

    # conv1 (MaxPool fused) + partial BN statistics
    y1_raw, st1 = _conv1_call(x, w1k, n, hp, wp, cin_p, c1p)
    sc1, sh1 = _bn_scale_shift(st1, params["g1"], params["b1"], count)
    # BN1 apply + ReLU, written directly with its conv-pad halo for conv2
    y1_pad = _bn_relu_pad_call(y1_raw, sc1, sh1, n, hp, wp, c1p)

    # conv2 + partial BN statistics
    y2_raw, st2 = _conv2_call(y1_pad, w2k, n, hp, wp, c1p, c2p)
    sc2, sh2 = _bn_scale_shift(st2, params["g2"], params["b2"], count)
    y2 = _bn_relu_call(y2_raw, sc2, sh2, n, hp, wp, c2p)

    # drop channel padding, back to NCHW
    return jnp.transpose(y2[..., :out_ch], (0, 3, 1, 2))


# ----------------------------------------------------------------------------
# params + pure-JAX reference
# ----------------------------------------------------------------------------
def init_params(key, in_ch, out_ch):
    """Conv weights mimic PyTorch Conv2d default init (U(+-1/sqrt(fan_in)),
    fan_in = C_in*9); BN gamma=1, beta=0 (fresh module).  Conv biases omitted:
    they cancel exactly under training-mode BatchNorm."""
    mid_ch = out_ch
    k1, k2 = jax.random.split(key)
    b1 = 1.0 / float((in_ch * 9) ** 0.5)
    b2 = 1.0 / float((mid_ch * 9) ** 0.5)
    # layout [kh, kw, c_in, c_out]  (== torch weight[o, c, kh, kw] transposed)
    w1 = jax.random.uniform(k1, (3, 3, in_ch, mid_ch), jnp.float32, -b1, b1)
    w2 = jax.random.uniform(k2, (3, 3, mid_ch, out_ch), jnp.float32, -b2, b2)

    cin_p = _round_up(in_ch, _LANE)
    c1p = _round_up(mid_ch, _LANE)
    c2p = _round_up(out_ch, _LANE)

    # kernel layout: wk[kw, kh*Cin_p + c, o] = torch_W[o, c, kh, kw]
    w1k = jnp.zeros((3, 3 * cin_p, c1p), jnp.float32)
    w2k = jnp.zeros((3, 3 * c1p, c2p), jnp.float32)
    for kh in range(3):
        w1k = w1k.at[:, kh * cin_p:kh * cin_p + in_ch, :mid_ch].set(w1[kh])
        w2k = w2k.at[:, kh * c1p:kh * c1p + mid_ch, :out_ch].set(w2[kh])

    params = dict(
        w1k=w1k.astype(jnp.bfloat16), w2k=w2k.astype(jnp.bfloat16),
        g1=jnp.ones((1, c1p), jnp.float32), b1=jnp.zeros((1, c1p), jnp.float32),
        g2=jnp.ones((1, c2p), jnp.float32), b2=jnp.zeros((1, c2p), jnp.float32),
    )
    return params, w1, w2


def _ref_forward(x_nchw, w1, w2):
    """Pure-JAX f32 reference of Down.forward (training-mode BN, bias-free)."""
    x = jnp.transpose(x_nchw, (0, 2, 3, 1)).astype(jnp.float32)
    n, h, w, c = x.shape
    x = x.reshape(n, h // 2, 2, w // 2, 2, c).max(axis=(2, 4))

    def conv_bn_relu(feat, wk):
        nn, hh, ww, _ = feat.shape
        cout = wk.shape[-1]
        fp = jnp.pad(feat, ((0, 0), (1, 1), (1, 1), (0, 0)))
        out = jnp.zeros((nn, hh, ww, cout), jnp.float32)
        for kh in range(3):
            for kw in range(3):
                tap = fp[:, kh:kh + hh, kw:kw + ww, :]
                out = out + jnp.einsum("nhwc,co->nhwo", tap, wk[kh, kw],
                                       precision=jax.lax.Precision.HIGHEST)
        mean = out.mean(axis=(0, 1, 2))
        var = ((out - mean) ** 2).mean(axis=(0, 1, 2))
        return jnp.maximum((out - mean) * jax.lax.rsqrt(var + _EPS), 0.0)

    y = conv_bn_relu(conv_bn_relu(x, w1), w2)
    return jnp.transpose(y, (0, 3, 1, 2))


if __name__ == "__main__":
    key = jax.random.PRNGKey(0)
    kx, kp = jax.random.split(key)

    N, Cin, H, W = 2, 4, 16, 16      # Down(4, 8)
    Cout = 8
    x = jax.random.normal(kx, (N, Cin, H, W), dtype=jnp.float32)
    params, w1_f32, w2_f32 = init_params(kp, Cin, Cout)

    fwd = jax.jit(functools.partial(down_forward, out_ch=Cout))
    y = jax.block_until_ready(fwd(x, params))

    assert y.shape == (N, Cout, H // 2, W // 2), y.shape
    assert bool(jnp.all(jnp.isfinite(y)))
    # loose tolerance: the Pallas path runs the convs in bf16 on the MXU
    y_ref = _ref_forward(x, w1_f32, w2_f32)
    err = float(jnp.max(jnp.abs(y - y_ref)))
    assert err < 0.2, err
    print("KERNEL_OK")
</pallas_src>

<mosaic_0001>
module attributes {stable_mosaic.version = 11 : i64} {
  func.func @_pool_conv_stats_kernel(%arg0: i32, %arg1: i32, %arg2: memref<1x2x10x256xbf16, #tpu.memory_space<vmem>>, %arg3: memref<1x2x10x256xbf16, #tpu.memory_space<vmem>>, %arg4: memref<1x2x10x256xbf16, #tpu.memory_space<vmem>>, %arg5: memref<3x384x128xbf16, #tpu.memory_space<vmem>>, %arg6: memref<1x1x8x128xbf16, #tpu.memory_space<vmem>>, %arg7: memref<1x1x2x128xf32, #tpu.memory_space<vmem>>) attributes {dimension_semantics = [#tpu.dimension_semantics<parallel>, #tpu.dimension_semantics<parallel>], iteration_bounds = array<i64: 2, 8>, scalar_prefetch = 0 : i64, scratch_operands = 0 : i64, tpu.core_type = #tpu.core_type<tc>, window_params = [{transform_indices = @transform_0, window_bounds = array<i64: 1, 2, 10, 256>}, {transform_indices = @transform_1, window_bounds = array<i64: 1, 2, 10, 256>}, {transform_indices = @transform_2, window_bounds = array<i64: 1, 2, 10, 256>}, {pipeline_mode = #tpu.pipeline_mode<synchronous>, transform_indices = @transform_3, window_bounds = array<i64: 3, 384, 128>}, {transform_indices = @transform_4, window_bounds = array<i64: 1, 1, 8, 128>}, {transform_indices = @transform_5, window_bounds = array<i64: 1, 1, 2, 128>}]} {
    %c0 = arith.constant 0 : index
    %c0_0 = arith.constant 0 : index
    %c0_1 = arith.constant 0 : index
    %c0_2 = arith.constant 0 : index
    %0 = vector.load %arg2[%c0, %c0_0, %c0_1, %c0_2] : memref<1x2x10x256xbf16, #tpu.memory_space<vmem>>, vector<1x2x10x256xbf16>
    %1 = vector.shape_cast %0 : vector<1x2x10x256xbf16> to vector<2x10x256xbf16>
    %2 = vector.extract_strided_slice %1 {offsets = [0, 0, 0], sizes = [1, 10, 256], strides = [1, 1, 1]} : vector<2x10x256xbf16> to vector<1x10x256xbf16>
    %3 = vector.shape_cast %2 : vector<1x10x256xbf16> to vector<10x256xbf16>
    %4 = vector.extract_strided_slice %1 {offsets = [1, 0, 0], sizes = [1, 10, 256], strides = [1, 1, 1]} : vector<2x10x256xbf16> to vector<1x10x256xbf16>
    %5 = vector.shape_cast %4 : vector<1x10x256xbf16> to vector<10x256xbf16>
    %6 = arith.maximumf %3, %5 : vector<10x256xbf16>
    %7 = vector.extract_strided_slice %6 {offsets = [0, 0], sizes = [10, 128], strides = [1, 1]} : vector<10x256xbf16> to vector<10x128xbf16>
    %8 = vector.extract_strided_slice %6 {offsets = [0, 128], sizes = [10, 128], strides = [1, 1]} : vector<10x256xbf16> to vector<10x128xbf16>
    %9 = arith.maximumf %7, %8 : vector<10x128xbf16>
    %c0_3 = arith.constant 0 : index
    %c0_4 = arith.constant 0 : index
    %c0_5 = arith.constant 0 : index
    %c0_6 = arith.constant 0 : index
    %10 = vector.load %arg3[%c0_3, %c0_4, %c0_5, %c0_6] : memref<1x2x10x256xbf16, #tpu.memory_space<vmem>>, vector<1x2x10x256xbf16>
    %11 = vector.shape_cast %10 : vector<1x2x10x256xbf16> to vector<2x10x256xbf16>
    %12 = vector.extract_strided_slice %11 {offsets = [0, 0, 0], sizes = [1, 10, 256], strides = [1, 1, 1]} : vector<2x10x256xbf16> to vector<1x10x256xbf16>
    %13 = vector.shape_cast %12 : vector<1x10x256xbf16> to vector<10x256xbf16>
    %14 = vector.extract_strided_slice %11 {offsets = [1, 0, 0], sizes = [1, 10, 256], strides = [1, 1, 1]} : vector<2x10x256xbf16> to vector<1x10x256xbf16>
    %15 = vector.shape_cast %14 : vector<1x10x256xbf16> to vector<10x256xbf16>
    %16 = arith.maximumf %13, %15 : vector<10x256xbf16>
    %17 = vector.extract_strided_slice %16 {offsets = [0, 0], sizes = [10, 128], strides = [1, 1]} : vector<10x256xbf16> to vector<10x128xbf16>
    %18 = vector.extract_strided_slice %16 {offsets = [0, 128], sizes = [10, 128], strides = [1, 1]} : vector<10x256xbf16> to vector<10x128xbf16>
    %19 = arith.maximumf %17, %18 : vector<10x128xbf16>
    %c0_7 = arith.constant 0 : index
    %c0_8 = arith.constant 0 : index
    %c0_9 = arith.constant 0 : index
    %c0_10 = arith.constant 0 : index
    %20 = vector.load %arg4[%c0_7, %c0_8, %c0_9, %c0_10] : memref<1x2x10x256xbf16, #tpu.memory_space<vmem>>, vector<1x2x10x256xbf16>
    %21 = vector.shape_cast %20 : vector<1x2x10x256xbf16> to vector<2x10x256xbf16>
    %22 = vector.extract_strided_slice %21 {offsets = [0, 0, 0], sizes = [1, 10, 256], strides = [1, 1, 1]} : vector<2x10x256xbf16> to vector<1x10x256xbf16>
    %23 = vector.shape_cast %22 : vector<1x10x256xbf16> to vector<10x256xbf16>
    %24 = vector.extract_strided_slice %21 {offsets = [1, 0, 0], sizes = [1, 10, 256], strides = [1, 1, 1]} : vector<2x10x256xbf16> to vector<1x10x256xbf16>
    %25 = vector.shape_cast %24 : vector<1x10x256xbf16> to vector<10x256xbf16>
    %26 = arith.maximumf %23, %25 : vector<10x256xbf16>
    %27 = vector.extract_strided_slice %26 {offsets = [0, 0], sizes = [10, 128], strides = [1, 1]} : vector<10x256xbf16> to vector<10x128xbf16>
    %28 = vector.extract_strided_slice %26 {offsets = [0, 128], sizes = [10, 128], strides = [1, 1]} : vector<10x256xbf16> to vector<10x128xbf16>
    %29 = arith.maximumf %27, %28 : vector<10x128xbf16>
    %30 = tpu.concatenate %9, %19, %29 in 1 : vector<10x128xbf16>, vector<10x128xbf16>, vector<10x128xbf16> -> vector<10x384xbf16>
    %cst = arith.constant 0.000000e+00 : f32
    %31 = vector.broadcast %cst : f32 to vector<8x128xf32>
    %32 = vector.extract_strided_slice %30 {offsets = [0, 0], sizes = [8, 384], strides = [1, 1]} : vector<10x384xbf16> to vector<8x384xbf16>
    %c0_11 = arith.constant 0 : index
    %c0_12 = arith.constant 0 : index
    %c0_13 = arith.constant 0 : index
    %33 = vector.load %arg5[%c0_11, %c0_12, %c0_13] : memref<3x384x128xbf16, #tpu.memory_space<vmem>>, vector<1x384x128xbf16>
    %34 = vector.shape_cast %33 : vector<1x384x128xbf16> to vector<384x128xbf16>
    %cst_14 = arith.constant dense<0.000000e+00> : vector<8x128xf32>
    %35 = tpu.matmul %32, %34, %cst_14 {dimension_numbers = #tpu.dot_dimension_numbers<[1], [0], [0], [1], [0, 0, 1, 1], [], []>} : vector<8x384xbf16>, vector<384x128xbf16>, vector<8x128xf32> -> vector<8x128xf32>
    %36 = arith.addf %31, %35 : vector<8x128xf32>
    %37 = vector.extract_strided_slice %30 {offsets = [1, 0], sizes = [8, 384], strides = [1, 1]} : vector<10x384xbf16> to vector<8x384xbf16>
    %c1 = arith.constant 1 : index
    %c0_15 = arith.constant 0 : index
    %c0_16 = arith.constant 0 : index
    %38 = vector.load %arg5[%c1, %c0_15, %c0_16] : memref<3x384x128xbf16, #tpu.memory_space<vmem>>, vector<1x384x128xbf16>
    %39 = vector.shape_cast %38 : vector<1x384x128xbf16> to vector<384x128xbf16>
    %cst_17 = arith.constant dense<0.000000e+00> : vector<8x128xf32>
    %40 = tpu.matmul %37, %39, %cst_17 {dimension_numbers = #tpu.dot_dimension_numbers<[1], [0], [0], [1], [0, 0, 1, 1], [], []>} : vector<8x384xbf16>, vector<384x128xbf16>, vector<8x128xf32> -> vector<8x128xf32>
    %41 = arith.addf %36, %40 : vector<8x128xf32>
    %42 = vector.extract_strided_slice %30 {offsets = [2, 0], sizes = [8, 384], strides = [1, 1]} : vector<10x384xbf16> to vector<8x384xbf16>
    %c2 = arith.constant 2 : index
    %c0_18 = arith.constant 0 : index
    %c0_19 = arith.constant 0 : index
    %43 = vector.load %arg5[%c2, %c0_18, %c0_19] : memref<3x384x128xbf16, #tpu.memory_space<vmem>>, vector<1x384x128xbf16>
    %44 = vector.shape_cast %43 : vector<1x384x128xbf16> to vector<384x128xbf16>
    %cst_20 = arith.constant dense<0.000000e+00> : vector<8x128xf32>
    %45 = tpu.matmul %42, %44, %cst_20 {dimension_numbers = #tpu.dot_dimension_numbers<[1], [0], [0], [1], [0, 0, 1, 1], [], []>} : vector<8x384xbf16>, vector<384x128xbf16>, vector<8x128xf32> -> vector<8x128xf32>
    %46 = arith.addf %41, %45 : vector<8x128xf32>
    %47 = arith.truncf %46 : vector<8x128xf32> to vector<8x128xbf16>
    %c0_21 = arith.constant 0 : index
    %c0_22 = arith.constant 0 : index
    %c0_23 = arith.constant 0 : index
    %c0_24 = arith.constant 0 : index
    %48 = vector.load %arg6[%c0_21, %c0_22, %c0_23, %c0_24] : memref<1x1x8x128xbf16, #tpu.memory_space<vmem>>, vector<1x1x8x128xbf16>
    %49 = vector.shape_cast %48 : vector<1x1x8x128xbf16> to vector<8x128xbf16>
    %50 = vector.shape_cast %47 : vector<8x128xbf16> to vector<1x1x8x128xbf16>
    tpu.vector_store %arg6[%c0_21, %c0_22, %c0_23, %c0_24], %50 {strides = array<i32>} : memref<1x1x8x128xbf16, #tpu.memory_space<vmem>>, vector<1x1x8x128xbf16>,
    %cst_25 = arith.constant dense<0.000000e+00> : vector<128xf32>
    %51 = vector.multi_reduction <add>, %46, %cst_25 [0] : vector<8x128xf32> to vector<128xf32>
    %52 = vector.shape_cast %51 : vector<128xf32> to vector<1x128xf32>
    %53 = arith.mulf %46, %46 : vector<8x128xf32>
    %cst_26 = arith.constant dense<0.000000e+00> : vector<128xf32>
    %54 = vector.multi_reduction <add>, %53, %cst_26 [0] : vector<8x128xf32> to vector<128xf32>
    %55 = vector.shape_cast %54 : vector<128xf32> to vector<1x128xf32>
    %56 = tpu.concatenate %52, %55 in 0 : vector<1x128xf32>, vector<1x128xf32> -> vector<2x128xf32>
    %c0_27 = arith.constant 0 : index
    %c0_28 = arith.constant 0 : index
    %c0_29 = arith.constant 0 : index
    %c0_30 = arith.constant 0 : index
    %57 = vector.load %arg7[%c0_27, %c0_28, %c0_29, %c0_30] : memref<1x1x2x128xf32, #tpu.memory_space<vmem>>, vector<1x1x2x128xf32>
    %58 = vector.shape_cast %57 : vector<1x1x2x128xf32> to vector<2x128xf32>
    %59 = vector.shape_cast %56 : vector<2x128xf32> to vector<1x1x2x128xf32>
    tpu.vector_store %arg7[%c0_27, %c0_28, %c0_29, %c0_30], %59 {strides = array<i32>} : memref<1x1x2x128xf32, #tpu.memory_space<vmem>>, vector<1x1x2x128xf32>,
    return
  }
  func.func @transform_0(%arg0: i32, %arg1: i32) -> (i32, i32, i32, i32) {
    %c0_i32 = arith.constant 0 : i32
    %0 = arith.addi %arg1, %c0_i32 : i32
    %c0_i32_0 = arith.constant 0 : i32
    %c0_i32_1 = arith.constant 0 : i32
    %c0_i32_2 = arith.constant 0 : i32
    return %arg0, %0, %c0_i32_0, %c0_i32_1 : i32, i32, i32, i32
  }
  func.func @transform_1(%arg0: i32, %arg1: i32) -> (i32, i32, i32, i32) {
    %c1_i32 = arith.constant 1 : i32
    %0 = arith.addi %arg1, %c1_i32 : i32
    %c0_i32 = arith.constant 0 : i32
    %c0_i32_0 = arith.constant 0 : i32
    %c0_i32_1 = arith.constant 0 : i32
    return %arg0, %0, %c0_i32, %c0_i32_0 : i32, i32, i32, i32
  }
  func.func @transform_2(%arg0: i32, %arg1: i32) -> (i32, i32, i32, i32) {
    %c2_i32 = arith.constant 2 : i32
    %0 = arith.addi %arg1, %c2_i32 : i32
    %c0_i32 = arith.constant 0 : i32
    %c0_i32_0 = arith.constant 0 : i32
    %c0_i32_1 = arith.constant 0 : i32
    return %arg0, %0, %c0_i32, %c0_i32_0 : i32, i32, i32, i32
  }
  func.func @transform_3(%arg0: i32, %arg1: i32) -> (i32, i32, i32) {
    %c0_i32 = arith.constant 0 : i32
    %c0_i32_0 = arith.constant 0 : i32
    %c0_i32_1 = arith.constant 0 : i32
    %c0_i32_2 = arith.constant 0 : i32
    return %c0_i32, %c0_i32_0, %c0_i32_1 : i32, i32, i32
  }
  func.func @transform_4(%arg0: i32, %arg1: i32) -> (i32, i32, i32, i32) {
    %c0_i32 = arith.constant 0 : i32
    %c0_i32_0 = arith.constant 0 : i32
    %c0_i32_1 = arith.constant 0 : i32
    return %arg0, %arg1, %c0_i32, %c0_i32_0 : i32, i32, i32, i32
  }
  func.func @transform_5(%arg0: i32, %arg1: i32) -> (i32, i32, i32, i32) {
    %c0_i32 = arith.constant 0 : i32
    %c0_i32_0 = arith.constant 0 : i32
    %c0_i32_1 = arith.constant 0 : i32
    return %arg0, %arg1, %c0_i32, %c0_i32_0 : i32, i32, i32, i32
  }
}

module attributes {stable_mosaic.version = 11 : i64} {
  func.func @_bn_relu_pad_kernel(%arg0: i32, %arg1: i32, %arg2: memref<1x1x8x128xbf16, #tpu.memory_space<vmem>>, %arg3: memref<1x128xf32, #tpu.memory_space<vmem>>, %arg4: memref<1x128xf32, #tpu.memory_space<vmem>>, %arg5: memref<1x1x10x128xbf16, #tpu.memory_space<vmem>>) attributes {dimension_semantics = [#tpu.dimension_semantics<parallel>, #tpu.dimension_semantics<parallel>], iteration_bounds = array<i64: 2, 10>, scalar_prefetch = 0 : i64, scratch_operands = 0 : i64, tpu.core_type = #tpu.core_type<tc>, window_params = [{transform_indices = @transform_0, window_bounds = array<i64: 1, 1, 8, 128>}, {pipeline_mode = #tpu.pipeline_mode<synchronous>, transform_indices = @transform_1, window_bounds = array<i64: 1, 128>}, {pipeline_mode = #tpu.pipeline_mode<synchronous>, transform_indices = @transform_2, window_bounds = array<i64: 1, 128>}, {transform_indices = @transform_3, window_bounds = array<i64: 1, 1, 10, 128>}]} {
    %cst = arith.constant 0.000000e+00 : bf16
    %0 = vector.broadcast %cst : bf16 to vector<1x1x10x128xbf16>
    %c0 = arith.constant 0 : index
    %c0_0 = arith.constant 0 : index
    %c0_1 = arith.constant 0 : index
    %c0_2 = arith.constant 0 : index
    %1 = vector.load %arg5[%c0, %c0_0, %c0_1, %c0_2] : memref<1x1x10x128xbf16, #tpu.memory_space<vmem>>, vector<1x1x10x128xbf16>
    tpu.vector_store %arg5[%c0, %c0_0, %c0_1, %c0_2], %0 {strides = array<i32>} : memref<1x1x10x128xbf16, #tpu.memory_space<vmem>>, vector<1x1x10x128xbf16>,
    %c1_i32 = arith.constant 1 : i32
    %2 = arith.cmpi sge, %arg1, %c1_i32 : i32
    %c8_i32 = arith.constant 8 : i32
    %3 = arith.cmpi sle, %arg1, %c8_i32 : i32
    %4 = arith.andi %2, %3 : i1
    %5 = arith.extui %4 : i1 to i32
    %c0_i32 = arith.constant 0 : i32
    %6 = arith.cmpi ne, %5, %c0_i32 : i32
    scf.if %6 {
      %c0_3 = arith.constant 0 : index
      %c0_4 = arith.constant 0 : index
      %c0_5 = arith.constant 0 : index
      %c0_6 = arith.constant 0 : index
      %7 = vector.load %arg2[%c0_3, %c0_4, %c0_5, %c0_6] : memref<1x1x8x128xbf16, #tpu.memory_space<vmem>>, vector<1x1x8x128xbf16>
      %8 = vector.shape_cast %7 : vector<1x1x8x128xbf16> to vector<8x128xbf16>
      %9 = arith.extf %8 : vector<8x128xbf16> to vector<8x128xf32>
      %c0_7 = arith.constant 0 : index
      %c0_8 = arith.constant 0 : index
      %10 = vector.load %arg3[%c0_7, %c0_8] : memref<1x128xf32, #tpu.memory_space<vmem>>, vector<1x128xf32>
      %11 = vector.broadcast %10 : vector<1x128xf32> to vector<8x128xf32>
      %12 = arith.mulf %9, %11 : vector<8x128xf32>
      %c0_9 = arith.constant 0 : index
      %c0_10 = arith.constant 0 : index
      %13 = vector.load %arg4[%c0_9, %c0_10] : memref<1x128xf32, #tpu.memory_space<vmem>>, vector<1x128xf32>
      %14 = vector.broadcast %13 : vector<1x128xf32> to vector<8x128xf32>
      %15 = arith.addf %12, %14 : vector<8x128xf32>
      %cst_11 = arith.constant 0.000000e+00 : f32
      %16 = vector.broadcast %cst_11 : f32 to vector<8x128xf32>
      %17 = arith.maximumf %15, %16 : vector<8x128xf32>
      %18 = arith.truncf %17 : vector<8x128xf32> to vector<8x128xbf16>
      %c0_12 = arith.constant 0 : index
      %c0_13 = arith.constant 0 : index
      %c1 = arith.constant 1 : index
      %c0_14 = arith.constant 0 : index
      %19 = vector.load %arg5[%c0_12, %c0_13, %c1, %c0_14] : memref<1x1x10x128xbf16, #tpu.memory_space<vmem>>, vector<1x1x8x128xbf16>
      %20 = vector.shape_cast %19 : vector<1x1x8x128xbf16> to vector<8x128xbf16>
      %21 = vector.shape_cast %18 : vector<8x128xbf16> to vector<1x1x8x128xbf16>
      tpu.vector_store %arg5[%c0_12, %c0_13, %c1, %c0_14], %21 {strides = array<i32>} : memref<1x1x10x128xbf16, #tpu.memory_space<vmem>>, vector<1x1x8x128xbf16>,
    } else {
    }
    return
  }
  func.func @transform_0(%arg0: i32, %arg1: i32) -> (i32, i32, i32, i32) {
    %c1_i32 = arith.constant 1 : i32
    %0 = arith.subi %arg1, %c1_i32 : i32
    %c0_i32 = arith.constant 0 : i32
    %c7_i32 = arith.constant 7 : i32
    %1 = arith.maxsi %c0_i32, %0 : i32
    %2 = arith.minsi %c7_i32, %1 : i32
    %c0_i32_0 = arith.constant 0 : i32
    %c0_i32_1 = arith.constant 0 : i32
    %c0_i32_2 = arith.constant 0 : i32
    return %arg0, %2, %c0_i32_0, %c0_i32_1 : i32, i32, i32, i32
  }
  func.func @transform_1(%arg0: i32, %arg1: i32) -> (i32, i32) {
    %c0_i32 = arith.constant 0 : i32
    %c0_i32_0 = arith.constant 0 : i32
    %c0_i32_1 = arith.constant 0 : i32
    return %c0_i32, %c0_i32_0 : i32, i32
  }
  func.func @transform_2(%arg0: i32, %arg1: i32) -> (i32, i32) {
    %c0_i32 = arith.constant 0 : i32
    %c0_i32_0 = arith.constant 0 : i32
    %c0_i32_1 = arith.constant 0 : i32
    return %c0_i32, %c0_i32_0 : i32, i32
  }
  func.func @transform_3(%arg0: i32, %arg1: i32) -> (i32, i32, i32, i32) {
    %c0_i32 = arith.constant 0 : i32
    %c0_i32_0 = arith.constant 0 : i32
    %c0_i32_1 = arith.constant 0 : i32
    return %arg0, %arg1, %c0_i32, %c0_i32_0 : i32, i32, i32, i32
  }
}

module attributes {stable_mosaic.version = 11 : i64} {
  func.func @_conv_stats_kernel(%arg0: i32, %arg1: i32, %arg2: memref<1x1x10x128xbf16, #tpu.memory_space<vmem>>, %arg3: memref<1x1x10x128xbf16, #tpu.memory_space<vmem>>, %arg4: memref<1x1x10x128xbf16, #tpu.memory_space<vmem>>, %arg5: memref<3x384x128xbf16, #tpu.memory_space<vmem>>, %arg6: memref<1x1x8x128xbf16, #tpu.memory_space<vmem>>, %arg7: memref<1x1x2x128xf32, #tpu.memory_space<vmem>>) attributes {dimension_semantics = [#tpu.dimension_semantics<parallel>, #tpu.dimension_semantics<parallel>], iteration_bounds = array<i64: 2, 8>, scalar_prefetch = 0 : i64, scratch_operands = 0 : i64, tpu.core_type = #tpu.core_type<tc>, window_params = [{transform_indices = @transform_0, window_bounds = array<i64: 1, 1, 10, 128>}, {transform_indices = @transform_1, window_bounds = array<i64: 1, 1, 10, 128>}, {transform_indices = @transform_2, window_bounds = array<i64: 1, 1, 10, 128>}, {pipeline_mode = #tpu.pipeline_mode<synchronous>, transform_indices = @transform_3, window_bounds = array<i64: 3, 384, 128>}, {transform_indices = @transform_4, window_bounds = array<i64: 1, 1, 8, 128>}, {transform_indices = @transform_5, window_bounds = array<i64: 1, 1, 2, 128>}]} {
    %c0 = arith.constant 0 : index
    %c0_0 = arith.constant 0 : index
    %c0_1 = arith.constant 0 : index
    %c0_2 = arith.constant 0 : index
    %0 = vector.load %arg2[%c0, %c0_0, %c0_1, %c0_2] : memref<1x1x10x128xbf16, #tpu.memory_space<vmem>>, vector<1x1x10x128xbf16>
    %1 = vector.shape_cast %0 : vector<1x1x10x128xbf16> to vector<10x128xbf16>
    %c0_3 = arith.constant 0 : index
    %c0_4 = arith.constant 0 : index
    %c0_5 = arith.constant 0 : index
    %c0_6 = arith.constant 0 : index
    %2 = vector.load %arg3[%c0_3, %c0_4, %c0_5, %c0_6] : memref<1x1x10x128xbf16, #tpu.memory_space<vmem>>, vector<1x1x10x128xbf16>
    %3 = vector.shape_cast %2 : vector<1x1x10x128xbf16> to vector<10x128xbf16>
    %c0_7 = arith.constant 0 : index
    %c0_8 = arith.constant 0 : index
    %c0_9 = arith.constant 0 : index
    %c0_10 = arith.constant 0 : index
    %4 = vector.load %arg4[%c0_7, %c0_8, %c0_9, %c0_10] : memref<1x1x10x128xbf16, #tpu.memory_space<vmem>>, vector<1x1x10x128xbf16>
    %5 = vector.shape_cast %4 : vector<1x1x10x128xbf16> to vector<10x128xbf16>
    %6 = tpu.concatenate %1, %3, %5 in 1 : vector<10x128xbf16>, vector<10x128xbf16>, vector<10x128xbf16> -> vector<10x384xbf16>
    %cst = arith.constant 0.000000e+00 : f32
    %7 = vector.broadcast %cst : f32 to vector<8x128xf32>
    %8 = vector.extract_strided_slice %6 {offsets = [0, 0], sizes = [8, 384], strides = [1, 1]} : vector<10x384xbf16> to vector<8x384xbf16>
    %c0_11 = arith.constant 0 : index
    %c0_12 = arith.constant 0 : index
    %c0_13 = arith.constant 0 : index
    %9 = vector.load %arg5[%c0_11, %c0_12, %c0_13] : memref<3x384x128xbf16, #tpu.memory_space<vmem>>, vector<1x384x128xbf16>
    %10 = vector.shape_cast %9 : vector<1x384x128xbf16> to vector<384x128xbf16>
    %cst_14 = arith.constant dense<0.000000e+00> : vector<8x128xf32>
    %11 = tpu.matmul %8, %10, %cst_14 {dimension_numbers = #tpu.dot_dimension_numbers<[1], [0], [0], [1], [0, 0, 1, 1], [], []>} : vector<8x384xbf16>, vector<384x128xbf16>, vector<8x128xf32> -> vector<8x128xf32>
    %12 = arith.addf %7, %11 : vector<8x128xf32>
    %13 = vector.extract_strided_slice %6 {offsets = [1, 0], sizes = [8, 384], strides = [1, 1]} : vector<10x384xbf16> to vector<8x384xbf16>
    %c1 = arith.constant 1 : index
    %c0_15 = arith.constant 0 : index
    %c0_16 = arith.constant 0 : index
    %14 = vector.load %arg5[%c1, %c0_15, %c0_16] : memref<3x384x128xbf16, #tpu.memory_space<vmem>>, vector<1x384x128xbf16>
    %15 = vector.shape_cast %14 : vector<1x384x128xbf16> to vector<384x128xbf16>
    %cst_17 = arith.constant dense<0.000000e+00> : vector<8x128xf32>
    %16 = tpu.matmul %13, %15, %cst_17 {dimension_numbers = #tpu.dot_dimension_numbers<[1], [0], [0], [1], [0, 0, 1, 1], [], []>} : vector<8x384xbf16>, vector<384x128xbf16>, vector<8x128xf32> -> vector<8x128xf32>
    %17 = arith.addf %12, %16 : vector<8x128xf32>
    %18 = vector.extract_strided_slice %6 {offsets = [2, 0], sizes = [8, 384], strides = [1, 1]} : vector<10x384xbf16> to vector<8x384xbf16>
    %c2 = arith.constant 2 : index
    %c0_18 = arith.constant 0 : index
    %c0_19 = arith.constant 0 : index
    %19 = vector.load %arg5[%c2, %c0_18, %c0_19] : memref<3x384x128xbf16, #tpu.memory_space<vmem>>, vector<1x384x128xbf16>
    %20 = vector.shape_cast %19 : vector<1x384x128xbf16> to vector<384x128xbf16>
    %cst_20 = arith.constant dense<0.000000e+00> : vector<8x128xf32>
    %21 = tpu.matmul %18, %20, %cst_20 {dimension_numbers = #tpu.dot_dimension_numbers<[1], [0], [0], [1], [0, 0, 1, 1], [], []>} : vector<8x384xbf16>, vector<384x128xbf16>, vector<8x128xf32> -> vector<8x128xf32>
    %22 = arith.addf %17, %21 : vector<8x128xf32>
    %23 = arith.truncf %22 : vector<8x128xf32> to vector<8x128xbf16>
    %c0_21 = arith.constant 0 : index
    %c0_22 = arith.constant 0 : index
    %c0_23 = arith.constant 0 : index
    %c0_24 = arith.constant 0 : index
    %24 = vector.load %arg6[%c0_21, %c0_22, %c0_23, %c0_24] : memref<1x1x8x128xbf16, #tpu.memory_space<vmem>>, vector<1x1x8x128xbf16>
    %25 = vector.shape_cast %24 : vector<1x1x8x128xbf16> to vector<8x128xbf16>
    %26 = vector.shape_cast %23 : vector<8x128xbf16> to vector<1x1x8x128xbf16>
    tpu.vector_store %arg6[%c0_21, %c0_22, %c0_23, %c0_24], %26 {strides = array<i32>} : memref<1x1x8x128xbf16, #tpu.memory_space<vmem>>, vector<1x1x8x128xbf16>,
    %cst_25 = arith.constant dense<0.000000e+00> : vector<128xf32>
    %27 = vector.multi_reduction <add>, %22, %cst_25 [0] : vector<8x128xf32> to vector<128xf32>
    %28 = vector.shape_cast %27 : vector<128xf32> to vector<1x128xf32>
    %29 = arith.mulf %22, %22 : vector<8x128xf32>
    %cst_26 = arith.constant dense<0.000000e+00> : vector<128xf32>
    %30 = vector.multi_reduction <add>, %29, %cst_26 [0] : vector<8x128xf32> to vector<128xf32>
    %31 = vector.shape_cast %30 : vector<128xf32> to vector<1x128xf32>
    %32 = tpu.concatenate %28, %31 in 0 : vector<1x128xf32>, vector<1x128xf32> -> vector<2x128xf32>
    %c0_27 = arith.constant 0 : index
    %c0_28 = arith.constant 0 : index
    %c0_29 = arith.constant 0 : index
    %c0_30 = arith.constant 0 : index
    %33 = vector.load %arg7[%c0_27, %c0_28, %c0_29, %c0_30] : memref<1x1x2x128xf32, #tpu.memory_space<vmem>>, vector<1x1x2x128xf32>
    %34 = vector.shape_cast %33 : vector<1x1x2x128xf32> to vector<2x128xf32>
    %35 = vector.shape_cast %32 : vector<2x128xf32> to vector<1x1x2x128xf32>
    tpu.vector_store %arg7[%c0_27, %c0_28, %c0_29, %c0_30], %35 {strides = array<i32>} : memref<1x1x2x128xf32, #tpu.memory_space<vmem>>, vector<1x1x2x128xf32>,
    return
  }
  func.func @transform_0(%arg0: i32, %arg1: i32) -> (i32, i32, i32, i32) {
    %c0_i32 = arith.constant 0 : i32
    %0 = arith.addi %arg1, %c0_i32 : i32
    %c0_i32_0 = arith.constant 0 : i32
    %c0_i32_1 = arith.constant 0 : i32
    %c0_i32_2 = arith.constant 0 : i32
    return %arg0, %0, %c0_i32_0, %c0_i32_1 : i32, i32, i32, i32
  }
  func.func @transform_1(%arg0: i32, %arg1: i32) -> (i32, i32, i32, i32) {
    %c1_i32 = arith.constant 1 : i32
    %0 = arith.addi %arg1, %c1_i32 : i32
    %c0_i32 = arith.constant 0 : i32
    %c0_i32_0 = arith.constant 0 : i32
    %c0_i32_1 = arith.constant 0 : i32
    return %arg0, %0, %c0_i32, %c0_i32_0 : i32, i32, i32, i32
  }
  func.func @transform_2(%arg0: i32, %arg1: i32) -> (i32, i32, i32, i32) {
    %c2_i32 = arith.constant 2 : i32
    %0 = arith.addi %arg1, %c2_i32 : i32
    %c0_i32 = arith.constant 0 : i32
    %c0_i32_0 = arith.constant 0 : i32
    %c0_i32_1 = arith.constant 0 : i32
    return %arg0, %0, %c0_i32, %c0_i32_0 : i32, i32, i32, i32
  }
  func.func @transform_3(%arg0: i32, %arg1: i32) -> (i32, i32, i32) {
    %c0_i32 = arith.constant 0 : i32
    %c0_i32_0 = arith.constant 0 : i32
    %c0_i32_1 = arith.constant 0 : i32
    %c0_i32_2 = arith.constant 0 : i32
    return %c0_i32, %c0_i32_0, %c0_i32_1 : i32, i32, i32
  }
  func.func @transform_4(%arg0: i32, %arg1: i32) -> (i32, i32, i32, i32) {
    %c0_i32 = arith.constant 0 : i32
    %c0_i32_0 = arith.constant 0 : i32
    %c0_i32_1 = arith.constant 0 : i32
    return %arg0, %arg1, %c0_i32, %c0_i32_0 : i32, i32, i32, i32
  }
  func.func @transform_5(%arg0: i32, %arg1: i32) -> (i32, i32, i32, i32) {
    %c0_i32 = arith.constant 0 : i32
    %c0_i32_0 = arith.constant 0 : i32
    %c0_i32_1 = arith.constant 0 : i32
    return %arg0, %arg1, %c0_i32, %c0_i32_0 : i32, i32, i32, i32
  }
}

module attributes {stable_mosaic.version = 11 : i64} {
  func.func @_bn_relu_kernel(%arg0: i32, %arg1: i32, %arg2: memref<1x1x8x128xbf16, #tpu.memory_space<vmem>>, %arg3: memref<1x128xf32, #tpu.memory_space<vmem>>, %arg4: memref<1x128xf32, #tpu.memory_space<vmem>>, %arg5: memref<1x1x8x128xf32, #tpu.memory_space<vmem>>) attributes {dimension_semantics = [#tpu.dimension_semantics<parallel>, #tpu.dimension_semantics<parallel>], iteration_bounds = array<i64: 2, 8>, scalar_prefetch = 0 : i64, scratch_operands = 0 : i64, tpu.core_type = #tpu.core_type<tc>, window_params = [{transform_indices = @transform_0, window_bounds = array<i64: 1, 1, 8, 128>}, {pipeline_mode = #tpu.pipeline_mode<synchronous>, transform_indices = @transform_1, window_bounds = array<i64: 1, 128>}, {pipeline_mode = #tpu.pipeline_mode<synchronous>, transform_indices = @transform_2, window_bounds = array<i64: 1, 128>}, {transform_indices = @transform_3, window_bounds = array<i64: 1, 1, 8, 128>}]} {
    %c0 = arith.constant 0 : index
    %c0_0 = arith.constant 0 : index
    %c0_1 = arith.constant 0 : index
    %c0_2 = arith.constant 0 : index
    %0 = vector.load %arg2[%c0, %c0_0, %c0_1, %c0_2] : memref<1x1x8x128xbf16, #tpu.memory_space<vmem>>, vector<1x1x8x128xbf16>
    %1 = vector.shape_cast %0 : vector<1x1x8x128xbf16> to vector<8x128xbf16>
    %2 = arith.extf %1 : vector<8x128xbf16> to vector<8x128xf32>
    %c0_3 = arith.constant 0 : index
    %c0_4 = arith.constant 0 : index
    %3 = vector.load %arg3[%c0_3, %c0_4] : memref<1x128xf32, #tpu.memory_space<vmem>>, vector<1x128xf32>
    %4 = vector.broadcast %3 : vector<1x128xf32> to vector<8x128xf32>
    %5 = arith.mulf %2, %4 : vector<8x128xf32>
    %c0_5 = arith.constant 0 : index
    %c0_6 = arith.constant 0 : index
    %6 = vector.load %arg4[%c0_5, %c0_6] : memref<1x128xf32, #tpu.memory_space<vmem>>, vector<1x128xf32>
    %7 = vector.broadcast %6 : vector<1x128xf32> to vector<8x128xf32>
    %8 = arith.addf %5, %7 : vector<8x128xf32>
    %cst = arith.constant 0.000000e+00 : f32
    %9 = vector.broadcast %cst : f32 to vector<8x128xf32>
    %10 = arith.maximumf %8, %9 : vector<8x128xf32>
    %c0_7 = arith.constant 0 : index
    %c0_8 = arith.constant 0 : index
    %c0_9 = arith.constant 0 : index
    %c0_10 = arith.constant 0 : index
    %11 = vector.load %arg5[%c0_7, %c0_8, %c0_9, %c0_10] : memref<1x1x8x128xf32, #tpu.memory_space<vmem>>, vector<1x1x8x128xf32>
    %12 = vector.shape_cast %11 : vector<1x1x8x128xf32> to vector<8x128xf32>
    %13 = vector.shape_cast %10 : vector<8x128xf32> to vector<1x1x8x128xf32>
    tpu.vector_store %arg5[%c0_7, %c0_8, %c0_9, %c0_10], %13 {strides = array<i32>} : memref<1x1x8x128xf32, #tpu.memory_space<vmem>>, vector<1x1x8x128xf32>,
    return
  }
  func.func @transform_0(%arg0: i32, %arg1: i32) -> (i32, i32, i32, i32) {
    %c0_i32 = arith.constant 0 : i32
    %c0_i32_0 = arith.constant 0 : i32
    %c0_i32_1 = arith.constant 0 : i32
    return %arg0, %arg1, %c0_i32, %c0_i32_0 : i32, i32, i32, i32
  }
  func.func @transform_1(%arg0: i32, %arg1: i32) -> (i32, i32) {
    %c0_i32 = arith.constant 0 : i32
    %c0_i32_0 = arith.constant 0 : i32
    %c0_i32_1 = arith.constant 0 : i32
    return %c0_i32, %c0_i32_0 : i32, i32
  }
  func.func @transform_2(%arg0: i32, %arg1: i32) -> (i32, i32) {
    %c0_i32 = arith.constant 0 : i32
    %c0_i32_0 = arith.constant 0 : i32
    %c0_i32_1 = arith.constant 0 : i32
    return %c0_i32, %c0_i32_0 : i32, i32
  }
  func.func @transform_3(%arg0: i32, %arg1: i32) -> (i32, i32, i32, i32) {
    %c0_i32 = arith.constant 0 : i32
    %c0_i32_0 = arith.constant 0 : i32
    %c0_i32_1 = arith.constant 0 : i32
    return %arg0, %arg1, %c0_i32, %c0_i32_0 : i32, i32, i32, i32
  }
}

</mosaic_0001>

<llo_original>
// kernel: down_forward.5
$region0: #{down_forward.5}
  #allocation0 [shape = 'u32[]', space=smem, size = 0x4, offset = 0x4, fixed_abs, tag = 'smem constant byte address 0x4 - core index']
  #allocation1 [shape = 'u32[144,128]{1,0:T(1,128)}', space=vmem, size = 0x12000, scoped, tag = 'internal scratch']
  %s0 = inlined_call_operand.vmem [shape: bf16[2,8,8,128], index: 0, kind: input, shape index: {}]
  %s1 = inlined_call_operand.vmem [shape: f32[1,128], index: 1, kind: input, shape index: {}]
  %s2 = inlined_call_operand.vmem [shape: f32[1,128], index: 2, kind: input, shape index: {}]
  %s3 = inlined_call_operand.vmem [shape: bf16[2,10,10,128], index: 3, kind: output, shape index: {}]
  %s4 = sld [smem:[#allocation0]]
  $region49: #{down_forward.5} parent=0
    _
  %s6 = ssub.s32 1, %s4
  %s7 = scalar_select 0, %s6, %s4
  loop: start=0, step=1, limit=22
  $region2: #{down_forward.5} parent=0 // loop_pre_header
    _
  $region3: #{down_forward.5} parent=0 // loop_header
    %s9 = sphi 0, %s13
    %p10 = scmp.ge.s32.totalorder %s9, 22
    %s16 = sphi 0, %s28
    %s17 = sphi 0, %s24
    %s18 = sphi 0, %s16
    %s19 = sphi 0, %s17
    %s20 = sphi 0, %s18
    %s21 = sphi 0, %s19
    %s43 = sphi 0, %s45
    %s46 = sphi 0, %s43
    %s47 = sphi 0, %s46
    %s63 = sphi 0, %s47
    %s67 = sphi 0, %s67
    %s69 = sphi 0, %s67
    %s70 = sphi 0, %s69
    %s84 = sphi 0, %s70
    %s88 = sphi 0, %s88
    %s90 = sphi 0, %s88
    %s91 = sphi 0, %s90
    %s105 = sphi 0, %s91
    %s113 = sphi 0, %s115
    %s116 = sphi 0, %s113
    %s117 = sphi 0, %s116
    %s133 = sphi 0, %s117
  $region4: #{down_forward.5} parent=0 // loop_header_branch
    %12 = sbr.rel (%p10) target = $region8
  $region5: #{down_forward.5} parent=0 // loop_body
    %s14 = ssub.s32 %s9, 1
    %s15 = ssub.s32 %s9, 2
    %s22 = sadd.s32 1, %s17
    %p23 = scmp.ge.s32.totalorder %s22, 10
    %s24 = scalar_select %p23, 0, %s22
    %s25 = sadd.s32 1, %s16
    %s26 = scalar_select %p23, %s25, %s16
    %p27 = scmp.ge.s32.totalorder %s26, 2
    %s28 = scalar_select %p27, 0, %s26
    %s29 = ssub.s32 %s17, 1
    %p30 = scmp.gt.s32.totalorder %s29, 0
    %s31 = scalar_select %p30, %s29, 0
    %p32 = scmp.lt.s32.totalorder %s31, 7
    %s33 = scalar_select %p32, %s31, 7
    %s34 = ssub.s32 %s24, 1
    %p35 = scmp.gt.s32.totalorder %s34, 0
    %s36 = scalar_select %p35, %s34, 0
    %p37 = scmp.lt.s32.totalorder %s36, 7
    %s38 = scalar_select %p37, %s36, 7
    %s39 = ssub.s32 %s16, %s28
    %s40 = ssub.s32 %s33, %s38
    %s41 = sor.u32 %s39, %s40
    %p42 = scmp.eq.s32.totalorder %s41, 0
    %s44 = sadd.s32 %s43, 1
    %s45 = scalar_select %p42, %s43, %s44
    %p48 = pneg %p42
    %p49 = scmp.eq.s32.totalorder %s9, 19
    %p50 = por %p48, %p49
    %p51 = scmp.ne.s32.totalorder %s43, %s46
    %p52 = scmp.eq.s32.totalorder %s9, 0
    %p53 = por %p51, %p52
    %p54 = scmp.ne.s32.totalorder %s43, %s46
    %p55 = scmp.eq.s32.totalorder %s14, 19
    %p56 = por %p54, %p55
    %p57 = scmp.ne.s32.totalorder %s46, %s47
    %p58 = scmp.eq.s32.totalorder %s14, 0
    %p59 = por %p57, %p58
    %p60 = scmp.ne.s32.totalorder %s46, %s47
    %p61 = scmp.eq.s32.totalorder %s15, 19
    %p62 = por %p60, %p61
    %p64 = scmp.ne.s32.totalorder %s47, %s63
    %p65 = scmp.eq.s32.totalorder %s15, 0
    %p66 = por %p64, %p65
    %s68 = sadd.s32 %s67, 1
    %p71 = scmp.eq.s32.totalorder %s9, 19
    %p72 = scmp.ne.s32.totalorder %s67, %s69
    %p73 = scmp.eq.s32.totalorder %s9, 0
    %p74 = por %p72, %p73
    %p75 = scmp.ne.s32.totalorder %s67, %s69
    %p76 = scmp.eq.s32.totalorder %s14, 19
    %p77 = por %p75, %p76
    %p78 = scmp.ne.s32.totalorder %s69, %s70
    %p79 = scmp.eq.s32.totalorder %s14, 0
    %p80 = por %p78, %p79
    %p81 = scmp.ne.s32.totalorder %s69, %s70
    %p82 = scmp.eq.s32.totalorder %s15, 19
    %p83 = por %p81, %p82
    %p85 = scmp.ne.s32.totalorder %s70, %s84
    %p86 = scmp.eq.s32.totalorder %s15, 0
    %p87 = por %p85, %p86
    %s89 = sadd.s32 %s88, 1
    %p92 = scmp.eq.s32.totalorder %s9, 19
    %p93 = scmp.ne.s32.totalorder %s88, %s90
    %p94 = scmp.eq.s32.totalorder %s9, 0
    %p95 = por %p93, %p94
    %p96 = scmp.ne.s32.totalorder %s88, %s90
    %p97 = scmp.eq.s32.totalorder %s14, 19
    %p98 = por %p96, %p97
    %p99 = scmp.ne.s32.totalorder %s90, %s91
    %p100 = scmp.eq.s32.totalorder %s14, 0
    %p101 = por %p99, %p100
    %p102 = scmp.ne.s32.totalorder %s90, %s91
    %p103 = scmp.eq.s32.totalorder %s15, 19
    %p104 = por %p102, %p103
    %p106 = scmp.ne.s32.totalorder %s91, %s105
    %p107 = scmp.eq.s32.totalorder %s15, 0
    %p108 = por %p106, %p107
    %s109 = ssub.s32 %s16, %s28
    %s110 = ssub.s32 %s17, %s24
    %s111 = sor.u32 %s109, %s110
    %p112 = scmp.eq.s32.totalorder %s111, 0
    %s114 = sadd.s32 %s113, 1
    %s115 = scalar_select %p112, %s113, %s114
    %p118 = pneg %p112
    %p119 = scmp.eq.s32.totalorder %s9, 19
    %p120 = por %p118, %p119
    %p121 = scmp.ne.s32.totalorder %s113, %s116
    %p122 = scmp.eq.s32.totalorder %s9, 0
    %p123 = por %p121, %p122
    %p124 = scmp.ne.s32.totalorder %s113, %s116
    %p125 = scmp.eq.s32.totalorder %s14, 19
    %p126 = por %p124, %p125
    %p127 = scmp.ne.s32.totalorder %s116, %s117
    %p128 = scmp.eq.s32.totalorder %s14, 0
    %p129 = por %p127, %p128
    %p130 = scmp.ne.s32.totalorder %s116, %s117
    %p131 = scmp.eq.s32.totalorder %s15, 19
    %p132 = por %p130, %p131
    %p134 = scmp.ne.s32.totalorder %s117, %s133
    %p135 = scmp.eq.s32.totalorder %s15, 0
    %p136 = por %p134, %p135
    %p137 = scmp.le.s32.totalorder 1, %s9
    %p138 = scmp.lt.s32.totalorder %s9, 21
    %p139 = pnand %p137, %p138
    %p140 = pneg %p139
    // Predicated region
    $region9: #{down_forward.5} parent=5 // pred_check
      _
    $region10: #{down_forward.5} parent=5 // pred_check_branch
      %142 = sbr.rel (%p139) target = $region12
    $region11: #{down_forward.5} parent=5 // pred_region
      %s143 = ssub.s32 %s9, 1
      // Predicated region
      $region13: #{down_forward.5} parent=11 // pred_check
        %p144 = pneg %p80
      $region14: #{down_forward.5} parent=11 // pred_check_branch
        %146 = sbr.rel (%p144) target = $region16
      $region15: #{down_forward.5} parent=11 // pred_region
        _
      $region16: #{down_forward.5} parent=11 // pred_fallthru
        _
      // Predicated region
      $region17: #{down_forward.5} parent=11 // pred_check
        %p147 = pneg %p101
      $region18: #{down_forward.5} parent=11 // pred_check_branch
        %149 = sbr.rel (%p147) target = $region20
      $region19: #{down_forward.5} parent=11 // pred_region
        _
      $region20: #{down_forward.5} parent=11 // pred_fallthru
        _
    $region12: #{down_forward.5} parent=5 // pred_fallthru
      _
    %p150 = scmp.lt.s32.totalorder %s9, 20
    // Predicated region
    $region21: #{down_forward.5} parent=5 // pred_check
      %p151 = pneg %p150
    $region22: #{down_forward.5} parent=5 // pred_check_branch
      %153 = sbr.rel (%p151) target = $region24
    $region23: #{down_forward.5} parent=5 // pred_region
      // Predicated region
      $region25: #{down_forward.5} parent=23 // pred_check
        %p154 = pneg %p53
      $region26: #{down_forward.5} parent=23 // pred_check_branch
        %156 = sbr.rel (%p154) target = $region28
      $region27: #{down_forward.5} parent=23 // pred_region
        %s157 = ssub.s32 %s17, 1
        %p158 = scmp.gt.s32.totalorder %s157, 0
        %s159 = scalar_select %p158, %s157, 0
        %p160 = scmp.lt.s32.totalorder %s159, 7
        %s161 = scalar_select %p160, %s159, 7
        %p162 = scmp.lt.s32.totalorder %s16, 1
        %s163 = scalar_select %p162, %s16, 1
        %p164 = scmp.lt.s32.totalorder %s161, 7
        %s165 = scalar_select %p164, %s161, 7
        %s166 = smul.addr %s163, 8
        %s167 = sadd.s32 %s165, %s166
        %s168 = smul.addr %s167, 4
        %s169 = scalar_lea.vmem %s0, %s168
        %s170 = ssub.s32 %s17, 1
        %p171 = scmp.gt.s32.totalorder %s170, 0
        %s172 = scalar_select %p171, %s170, 0
        %p173 = scmp.lt.s32.totalorder %s172, 7
        %s174 = scalar_select %p173, %s172, 7
      $region28: #{down_forward.5} parent=23 // pred_fallthru
        _
    $region24: #{down_forward.5} parent=5 // pred_fallthru
      _
    %p175 = scmp.le.s32.totalorder 1, %s9
    %p176 = scmp.lt.s32.totalorder %s9, 21
    %p177 = pnand %p175, %p176
    %p178 = pneg %p177
    // Predicated region
    $region29: #{down_forward.5} parent=5 // pred_check
      _
    $region30: #{down_forward.5} parent=5 // pred_check_branch
      %180 = sbr.rel (%p177) target = $region32
    $region31: #{down_forward.5} parent=5 // pred_region
      %s181 = ssub.s32 %s9, 1
      %s182 = ssub.s32 %s19, 1
      %p183 = scmp.gt.s32.totalorder %s182, 0
      %s184 = scalar_select %p183, %s182, 0
      %p185 = scmp.lt.s32.totalorder %s184, 7
      %s186 = scalar_select %p185, %s184, 7
      %p187 = scmp.lt.s32.totalorder %s18, 1
      %s188 = scalar_select %p187, %s18, 1
      %p189 = scmp.lt.s32.totalorder %s186, 7
      %s190 = scalar_select %p189, %s186, 7
      %s191 = smul.addr %s188, 8
      %s192 = sadd.s32 %s190, %s191
      %s193 = smul.addr %s192, 4
      %s194 = scalar_lea.vmem %s0, %s193
      %p195 = pneg %p59
      %p196 = pneg %p56
      %p197 = pneg %p80
      %p198 = pneg %p77
      %p199 = pneg %p101
      %p200 = pneg %p98
      %p201 = pneg %p129
      %p202 = pneg %p126
      %p203 = scmp.lt.s32.totalorder %s18, 1
      %s204 = scalar_select %p203, %s18, 1
      %p205 = scmp.lt.s32.totalorder %s19, 9
      %s206 = scalar_select %p205, %s19, 9
      %s207 = smul.addr %s206, 2
      %s208 = smul.addr %s204, 20
      %s209 = sadd.s32 %s207, %s208
      %s210 = smul.addr %s209, 4
      %s211 = scalar_lea.vmem %s3, %s210
      %s212 = ssub.s32 %s19, 1
      %p213 = scmp.gt.s32.totalorder %s212, 0
      %s214 = scalar_select %p213, %s212, 0
      %p215 = scmp.lt.s32.totalorder %s214, 7
      %s216 = scalar_select %p215, %s214, 7
      %p217 = scmp.lt.s32.totalorder %s18, 1
      %s218 = scalar_select %p217, %s18, 1
      %p219 = scmp.lt.s32.totalorder %s216, 7
      %s220 = scalar_select %p219, %s216, 7
      %s221 = smul.addr %s218, 8
      %s222 = sadd.s32 %s220, %s221
      %s223 = smul.addr %s222, 4
      %s224 = scalar_lea.vmem %s0, %s223
      %s225 = ssub.s32 %s19, 1
      %p226 = scmp.gt.s32.totalorder %s225, 0
      %s227 = scalar_select %p226, %s225, 0
      %p228 = scmp.lt.s32.totalorder %s227, 7
      %s229 = scalar_select %p228, %s227, 7
      %p230 = scmp.lt.s32.totalorder %s18, 1
      %s231 = scalar_select %p230, %s18, 1
      %p232 = scmp.lt.s32.totalorder %s19, 9
      %s233 = scalar_select %p232, %s19, 9
      %s234 = smul.addr %s233, 2
      %s235 = smul.addr %s231, 20
      %s236 = sadd.s32 %s234, %s235
      %s237 = smul.addr %s236, 4
      %s238 = scalar_lea.vmem %s3, %s237
      %240 = vst [vmem:[%s238] sm:$0xf] 0
      %241 = vst [vmem:[%s238 + $0x4] sm:$0x1] 0
      %p242 = scmp.ge.s32.totalorder %s19, 1
      %p243 = scmp.le.s32.totalorder %s19, 8
      %p244 = pnand %p242, %p243
      %p245 = pneg %p244
      // Predicated region
      $region33: #{down_forward.5} parent=31 // pred_check
        _
      $region34: #{down_forward.5} parent=31 // pred_check_branch
        %247 = sbr.rel (%p244) target = $region36
      $region35: #{down_forward.5} parent=31 // pred_region
        %v248 = vld [vmem:[%s224] sm:$0xf]
        %v249 = vunpack.c.l.bf16 %v248
        %v250 = vld [vmem:[%s1] sm:$0x1]
        %v252 = vlaneseq
        %v253 = vshrl.u32 %v252, 7
        %v254 = vsub.s32 0, %v253
        %v255 = vrot.slane %v250, %v254
        %v257 = vmul.f32 %v249, %v255
        %v258 = vld [vmem:[%s2] sm:$0x1]
        %v260 = vlaneseq
        %v261 = vshrl.u32 %v260, 7
        %v262 = vsub.s32 0, %v261
        %v263 = vrot.slane %v258, %v262
        %v265 = vadd.f32 %v257, %v263
        %v266 = vmax.f32 %v265, 0.0
        %v267 = vpack.c.bf16 %v266, %v266
        %v269 = vunpack.c.l.b16 %v267
        %v270 = vpack.c.b16 %v269, %v269
        %v272 = vshrl.u32 %v270, 16
        %v274 = vrot.slane %v272, 7
        %v275 = vshll.u32 %v270, 16
        %v277 = vor.u32 %v274, %v275
        %v278 = vrot.slane %v274, 4
        %vm281 = vcmask 1043456
        %vm282 = vsmask.f32 7938
        %vm283 = vmand %vm281, %vm282
        %v284 = vld [vmem:[%s238] sm:$0xf]
        %v285 = vsel %vm283, %v277, %v284
        %286 = vst [vmem:[%s238] sm:$0xf] %v285
        %vm287 = vcmask 1040384
        %vm288 = vsmask.f32 256
        %vm289 = vmand %vm287, %vm288
        %v290 = vld [vmem:[%s238 + $0x4] sm:$0x1]
        %v291 = vsel %vm289, %v278, %v290
        %292 = vst [vmem:[%s238 + $0x4] sm:$0x1] %v291
      $region36: #{down_forward.5} parent=31 // pred_fallthru
        _
      %p293 = scmp.lt.s32.totalorder %s18, 1
      %s294 = scalar_select %p293, %s18, 1
      %p295 = scmp.lt.s32.totalorder %s19, 9
      %s296 = scalar_select %p295, %s19, 9
      %s297 = smul.addr %s296, 2
      %s298 = smul.addr %s294, 20
      %s299 = sadd.s32 %s297, %s298
      %s300 = smul.addr %s299, 4
      %s301 = scalar_lea.vmem %s3, %s300
      // Predicated region
      $region37: #{down_forward.5} parent=31 // pred_check
        %p302 = pneg %p126
      $region38: #{down_forward.5} parent=31 // pred_check_branch
        %304 = sbr.rel (%p302) target = $region40
      $region39: #{down_forward.5} parent=31 // pred_region
        _
      $region40: #{down_forward.5} parent=31 // pred_fallthru
        _
    $region32: #{down_forward.5} parent=5 // pred_fallthru
      _
    %p305 = scmp.le.s32.totalorder 2, %s9
    // Predicated region
    $region41: #{down_forward.5} parent=5 // pred_check
      %p306 = pneg %p305
    $region42: #{down_forward.5} parent=5 // pred_check_branch
      %308 = sbr.rel (%p306) target = $region44
    $region43: #{down_forward.5} parent=5 // pred_region
      %s309 = ssub.s32 %s9, 2
      // Predicated region
      $region45: #{down_forward.5} parent=43 // pred_check
        %p310 = pneg %p132
      $region46: #{down_forward.5} parent=43 // pred_check_branch
        %312 = sbr.rel (%p310) target = $region48
      $region47: #{down_forward.5} parent=43 // pred_region
        %p313 = scmp.lt.s32.totalorder %s20, 1
        %s314 = scalar_select %p313, %s20, 1
        %p315 = scmp.lt.s32.totalorder %s21, 9
        %s316 = scalar_select %p315, %s21, 9
        %s317 = smul.addr %s316, 2
        %s318 = smul.addr %s314, 20
        %s319 = sadd.s32 %s317, %s318
        %s320 = smul.addr %s319, 4
        %s321 = scalar_lea.vmem %s3, %s320
      $region48: #{down_forward.5} parent=43 // pred_fallthru
        _
    $region44: #{down_forward.5} parent=5 // pred_fallthru
      _
  $region6: #{down_forward.5} parent=0 // loop_footer
    %s13 = sadd.s32 1, %s9
  $region7: #{down_forward.5} parent=0 // loop_footer_branch
    %8 = sbr.rel target = $region3
  $region8: #{down_forward.5} parent=0 // loop_exit
    _

// kernel: down_forward.7
$region0: #{down_forward.7}
  #allocation0 [shape = 'u32[]', space=smem, size = 0x4, offset = 0x4, fixed_abs, tag = 'smem constant byte address 0x4 - core index']
  #allocation1 [shape = 'u32[144,128]{1,0:T(1,128)}', space=vmem, size = 0x12000, scoped, tag = 'internal scratch']
  %s0 = inlined_call_operand.vmem [shape: bf16[2,8,8,128], index: 0, kind: input, shape index: {}]
  %s1 = inlined_call_operand.vmem [shape: f32[1,128], index: 1, kind: input, shape index: {}]
  %s2 = inlined_call_operand.vmem [shape: f32[1,128], index: 2, kind: input, shape index: {}]
  %s3 = inlined_call_operand.vmem [shape: f32[2,8,8,128], index: 3, kind: output, shape index: {}]
  %s4 = sld [smem:[#allocation0]]
  $region45: #{down_forward.7} parent=0
    _
  %s6 = ssub.s32 1, %s4
  %s7 = scalar_select 0, %s6, %s4
  loop: start=0, step=1, limit=18
  $region2: #{down_forward.7} parent=0 // loop_pre_header
    _
  $region3: #{down_forward.7} parent=0 // loop_header
    %s9 = sphi 0, %s13
    %p10 = scmp.ge.s32.totalorder %s9, 18
    %s16 = sphi 0, %s28
    %s17 = sphi 0, %s24
    %s18 = sphi 0, %s16
    %s19 = sphi 0, %s17
    %s20 = sphi 0, %s18
    %s21 = sphi 0, %s19
    %s33 = sphi 0, %s35
    %s36 = sphi 0, %s33
    %s37 = sphi 0, %s36
    %s53 = sphi 0, %s37
    %s57 = sphi 0, %s57
    %s59 = sphi 0, %s57
    %s60 = sphi 0, %s59
    %s74 = sphi 0, %s60
    %s78 = sphi 0, %s78
    %s80 = sphi 0, %s78
    %s81 = sphi 0, %s80
    %s95 = sphi 0, %s81
    %s103 = sphi 0, %s105
    %s106 = sphi 0, %s103
    %s107 = sphi 0, %s106
    %s123 = sphi 0, %s107
  $region4: #{down_forward.7} parent=0 // loop_header_branch
    %12 = sbr.rel (%p10) target = $region8
  $region5: #{down_forward.7} parent=0 // loop_body
    %s14 = ssub.s32 %s9, 1
    %s15 = ssub.s32 %s9, 2
    %s22 = sadd.s32 1, %s17
    %p23 = scmp.ge.s32.totalorder %s22, 8
    %s24 = scalar_select %p23, 0, %s22
    %s25 = sadd.s32 1, %s16
    %s26 = scalar_select %p23, %s25, %s16
    %p27 = scmp.ge.s32.totalorder %s26, 2
    %s28 = scalar_select %p27, 0, %s26
    %s29 = ssub.s32 %s16, %s28
    %s30 = ssub.s32 %s17, %s24
    %s31 = sor.u32 %s29, %s30
    %p32 = scmp.eq.s32.totalorder %s31, 0
    %s34 = sadd.s32 %s33, 1
    %s35 = scalar_select %p32, %s33, %s34
    %p38 = pneg %p32
    %p39 = scmp.eq.s32.totalorder %s9, 15
    %p40 = por %p38, %p39
    %p41 = scmp.ne.s32.totalorder %s33, %s36
    %p42 = scmp.eq.s32.totalorder %s9, 0
    %p43 = por %p41, %p42
    %p44 = scmp.ne.s32.totalorder %s33, %s36
    %p45 = scmp.eq.s32.totalorder %s14, 15
    %p46 = por %p44, %p45
    %p47 = scmp.ne.s32.totalorder %s36, %s37
    %p48 = scmp.eq.s32.totalorder %s14, 0
    %p49 = por %p47, %p48
    %p50 = scmp.ne.s32.totalorder %s36, %s37
    %p51 = scmp.eq.s32.totalorder %s15, 15
    %p52 = por %p50, %p51
    %p54 = scmp.ne.s32.totalorder %s37, %s53
    %p55 = scmp.eq.s32.totalorder %s15, 0
    %p56 = por %p54, %p55
    %s58 = sadd.s32 %s57, 1
    %p61 = scmp.eq.s32.totalorder %s9, 15
    %p62 = scmp.ne.s32.totalorder %s57, %s59
    %p63 = scmp.eq.s32.totalorder %s9, 0
    %p64 = por %p62, %p63
    %p65 = scmp.ne.s32.totalorder %s57, %s59
    %p66 = scmp.eq.s32.totalorder %s14, 15
    %p67 = por %p65, %p66
    %p68 = scmp.ne.s32.totalorder %s59, %s60
    %p69 = scmp.eq.s32.totalorder %s14, 0
    %p70 = por %p68, %p69
    %p71 = scmp.ne.s32.totalorder %s59, %s60
    %p72 = scmp.eq.s32.totalorder %s15, 15
    %p73 = por %p71, %p72
    %p75 = scmp.ne.s32.totalorder %s60, %s74
    %p76 = scmp.eq.s32.totalorder %s15, 0
    %p77 = por %p75, %p76
    %s79 = sadd.s32 %s78, 1
    %p82 = scmp.eq.s32.totalorder %s9, 15
    %p83 = scmp.ne.s32.totalorder %s78, %s80
    %p84 = scmp.eq.s32.totalorder %s9, 0
    %p85 = por %p83, %p84
    %p86 = scmp.ne.s32.totalorder %s78, %s80
    %p87 = scmp.eq.s32.totalorder %s14, 15
    %p88 = por %p86, %p87
    %p89 = scmp.ne.s32.totalorder %s80, %s81
    %p90 = scmp.eq.s32.totalorder %s14, 0
    %p91 = por %p89, %p90
    %p92 = scmp.ne.s32.totalorder %s80, %s81
    %p93 = scmp.eq.s32.totalorder %s15, 15
    %p94 = por %p92, %p93
    %p96 = scmp.ne.s32.totalorder %s81, %s95
    %p97 = scmp.eq.s32.totalorder %s15, 0
    %p98 = por %p96, %p97
    %s99 = ssub.s32 %s16, %s28
    %s100 = ssub.s32 %s17, %s24
    %s101 = sor.u32 %s99, %s100
    %p102 = scmp.eq.s32.totalorder %s101, 0
    %s104 = sadd.s32 %s103, 1
    %s105 = scalar_select %p102, %s103, %s104
    %p108 = pneg %p102
    %p109 = scmp.eq.s32.totalorder %s9, 15
    %p110 = por %p108, %p109
    %p111 = scmp.ne.s32.totalorder %s103, %s106
    %p112 = scmp.eq.s32.totalorder %s9, 0
    %p113 = por %p111, %p112
    %p114 = scmp.ne.s32.totalorder %s103, %s106
    %p115 = scmp.eq.s32.totalorder %s14, 15
    %p116 = por %p114, %p115
    %p117 = scmp.ne.s32.totalorder %s106, %s107
    %p118 = scmp.eq.s32.totalorder %s14, 0
    %p119 = por %p117, %p118
    %p120 = scmp.ne.s32.totalorder %s106, %s107
    %p121 = scmp.eq.s32.totalorder %s15, 15
    %p122 = por %p120, %p121
    %p124 = scmp.ne.s32.totalorder %s107, %s123
    %p125 = scmp.eq.s32.totalorder %s15, 0
    %p126 = por %p124, %p125
    %p127 = scmp.le.s32.totalorder 1, %s9
    %p128 = scmp.lt.s32.totalorder %s9, 17
    %p129 = pnand %p127, %p128
    %p130 = pneg %p129
    // Predicated region
    $region9: #{down_forward.7} parent=5 // pred_check
      _
    $region10: #{down_forward.7} parent=5 // pred_check_branch
      %132 = sbr.rel (%p129) target = $region12
    $region11: #{down_forward.7} parent=5 // pred_region
      %s133 = ssub.s32 %s9, 1
      // Predicated region
      $region13: #{down_forward.7} parent=11 // pred_check
        %p134 = pneg %p70
      $region14: #{down_forward.7} parent=11 // pred_check_branch
        %136 = sbr.rel (%p134) target = $region16
      $region15: #{down_forward.7} parent=11 // pred_region
        _
      $region16: #{down_forward.7} parent=11 // pred_fallthru
        _
      // Predicated region
      $region17: #{down_forward.7} parent=11 // pred_check
        %p137 = pneg %p91
      $region18: #{down_forward.7} parent=11 // pred_check_branch
        %139 = sbr.rel (%p137) target = $region20
      $region19: #{down_forward.7} parent=11 // pred_region
        _
      $region20: #{down_forward.7} parent=11 // pred_fallthru
        _
    $region12: #{down_forward.7} parent=5 // pred_fallthru
      _
    %p140 = scmp.lt.s32.totalorder %s9, 16
    // Predicated region
    $region21: #{down_forward.7} parent=5 // pred_check
      %p141 = pneg %p140
    $region22: #{down_forward.7} parent=5 // pred_check_branch
      %143 = sbr.rel (%p141) target = $region24
    $region23: #{down_forward.7} parent=5 // pred_region
      // Predicated region
      $region25: #{down_forward.7} parent=23 // pred_check
        %p144 = pneg %p43
      $region26: #{down_forward.7} parent=23 // pred_check_branch
        %146 = sbr.rel (%p144) target = $region28
      $region27: #{down_forward.7} parent=23 // pred_region
        %p147 = scmp.lt.s32.totalorder %s16, 1
        %s148 = scalar_select %p147, %s16, 1
        %p149 = scmp.lt.s32.totalorder %s17, 7
        %s150 = scalar_select %p149, %s17, 7
        %s151 = smul.addr %s148, 8
        %s152 = sadd.s32 %s150, %s151
        %s153 = smul.addr %s152, 4
        %s154 = scalar_lea.vmem %s0, %s153
      $region28: #{down_forward.7} parent=23 // pred_fallthru
        _
    $region24: #{down_forward.7} parent=5 // pred_fallthru
      _
    %p155 = scmp.le.s32.totalorder 1, %s9
    %p156 = scmp.lt.s32.totalorder %s9, 17
    %p157 = pnand %p155, %p156
    %p158 = pneg %p157
    // Predicated region
    $region29: #{down_forward.7} parent=5 // pred_check
      _
    $region30: #{down_forward.7} parent=5 // pred_check_branch
      %160 = sbr.rel (%p157) target = $region32
    $region31: #{down_forward.7} parent=5 // pred_region
      %s161 = ssub.s32 %s9, 1
      %p162 = scmp.lt.s32.totalorder %s18, 1
      %s163 = scalar_select %p162, %s18, 1
      %p164 = scmp.lt.s32.totalorder %s19, 7
      %s165 = scalar_select %p164, %s19, 7
      %s166 = smul.addr %s163, 8
      %s167 = sadd.s32 %s165, %s166
      %s168 = smul.addr %s167, 4
      %s169 = scalar_lea.vmem %s0, %s168
      %p170 = pneg %p49
      %p171 = pneg %p46
      %p172 = pneg %p70
      %p173 = pneg %p67
      %p174 = pneg %p91
      %p175 = pneg %p88
      %p176 = pneg %p119
      %p177 = pneg %p116
      %p178 = scmp.lt.s32.totalorder %s18, 1
      %s179 = scalar_select %p178, %s18, 1
      %p180 = scmp.lt.s32.totalorder %s19, 7
      %s181 = scalar_select %p180, %s19, 7
      %s182 = smul.addr %s179, 8
      %s183 = sadd.s32 %s181, %s182
      %s184 = smul.addr %s183, 8
      %s185 = scalar_lea.vmem %s3, %s184
      %p186 = scmp.lt.s32.totalorder %s18, 1
      %s187 = scalar_select %p186, %s18, 1
      %p188 = scmp.lt.s32.totalorder %s19, 7
      %s189 = scalar_select %p188, %s19, 7
      %s190 = smul.addr %s187, 8
      %s191 = sadd.s32 %s189, %s190
      %s192 = smul.addr %s191, 4
      %s193 = scalar_lea.vmem %s0, %s192
      %p194 = scmp.lt.s32.totalorder %s18, 1
      %s195 = scalar_select %p194, %s18, 1
      %p196 = scmp.lt.s32.totalorder %s19, 7
      %s197 = scalar_select %p196, %s19, 7
      %s198 = smul.addr %s195, 8
      %s199 = sadd.s32 %s197, %s198
      %s200 = smul.addr %s199, 8
      %s201 = scalar_lea.vmem %s3, %s200
      %v202 = vld [vmem:[%s193] sm:$0xf]
      %v203 = vunpack.c.l.bf16 %v202
      %v204 = vld [vmem:[%s1] sm:$0x1]
      %v206 = vlaneseq
      %v207 = vshrl.u32 %v206, 7
      %v208 = vsub.s32 0, %v207
      %v209 = vrot.slane %v204, %v208
      %v211 = vmul.f32 %v203, %v209
      %v212 = vld [vmem:[%s2] sm:$0x1]
      %v214 = vlaneseq
      %v215 = vshrl.u32 %v214, 7
      %v216 = vsub.s32 0, %v215
      %v217 = vrot.slane %v212, %v216
      %v219 = vadd.f32 %v211, %v217
      %v220 = vmax.f32 %v219, 0.0
      %221 = vst [vmem:[%s201] sm:$0xff] %v220
      %p222 = scmp.lt.s32.totalorder %s18, 1
      %s223 = scalar_select %p222, %s18, 1
      %p224 = scmp.lt.s32.totalorder %s19, 7
      %s225 = scalar_select %p224, %s19, 7
      %s226 = smul.addr %s223, 8
      %s227 = sadd.s32 %s225, %s226
      %s228 = smul.addr %s227, 8
      %s229 = scalar_lea.vmem %s3, %s228
      // Predicated region
      $region33: #{down_forward.7} parent=31 // pred_check
        %p230 = pneg %p116
      $region34: #{down_forward.7} parent=31 // pred_check_branch
        %232 = sbr.rel (%p230) target = $region36
      $region35: #{down_forward.7} parent=31 // pred_region
        _
      $region36: #{down_forward.7} parent=31 // pred_fallthru
        _
    $region32: #{down_forward.7} parent=5 // pred_fallthru
      _
    %p233 = scmp.le.s32.totalorder 2, %s9
    // Predicated region
    $region37: #{down_forward.7} parent=5 // pred_check
      %p234 = pneg %p233
    $region38: #{down_forward.7} parent=5 // pred_check_branch
      %236 = sbr.rel (%p234) target = $region40
    $region39: #{down_forward.7} parent=5 // pred_region
      %s237 = ssub.s32 %s9, 2
      // Predicated region
      $region41: #{down_forward.7} parent=39 // pred_check
        %p238 = pneg %p122
      $region42: #{down_forward.7} parent=39 // pred_check_branch
        %240 = sbr.rel (%p238) target = $region44
      $region43: #{down_forward.7} parent=39 // pred_region
        %p241 = scmp.lt.s32.totalorder %s20, 1
        %s242 = scalar_select %p241, %s20, 1
        %p243 = scmp.lt.s32.totalorder %s21, 7
        %s244 = scalar_select %p243, %s21, 7
        %s245 = smul.addr %s242, 8
        %s246 = sadd.s32 %s244, %s245
        %s247 = smul.addr %s246, 8
        %s248 = scalar_lea.vmem %s3, %s247
      $region44: #{down_forward.7} parent=39 // pred_fallthru
        _
    $region40: #{down_forward.7} parent=5 // pred_fallthru
      _
  $region6: #{down_forward.7} parent=0 // loop_footer
    %s13 = sadd.s32 1, %s9
  $region7: #{down_forward.7} parent=0 // loop_footer_branch
    %8 = sbr.rel target = $region3
  $region8: #{down_forward.7} parent=0 // loop_exit
    _

// kernel: down_forward.4
$region0: #{down_forward.4}
  #allocation0 [shape = 'u32[]', space=smem, size = 0x4, offset = 0x4, fixed_abs, tag = 'smem constant byte address 0x4 - core index']
  #allocation1 [shape = 'u32[144,128]{1,0:T(1,128)}', space=vmem, size = 0x12000, scoped, tag = 'internal scratch']
  %s0 = inlined_call_operand.vmem [shape: bf16[2,20,10,256], index: 0, kind: input, shape index: {}, may-alias: {0,1,2}]
  %s1 = inlined_call_operand.vmem [shape: bf16[2,20,10,256], index: 1, kind: input, shape index: {}, may-alias: {0,1,2}]
  %s2 = inlined_call_operand.vmem [shape: bf16[2,20,10,256], index: 2, kind: input, shape index: {}, may-alias: {0,1,2}]
  %s3 = inlined_call_operand.vmem [shape: bf16[3,384,128], index: 3, kind: input, shape index: {}]
  %s4 = inlined_call_operand.vmem [shape: bf16[2,8,8,128], index: 4, kind: output, shape index: {0}]
  %s5 = inlined_call_operand.vmem [shape: f32[2,8,2,128], index: 5, kind: output, shape index: {1}]
  %6 = xla_tuple %s4, %s5
  %s7 = sld [smem:[#allocation0]]
  $region57: #{down_forward.4} parent=0
    _
  %s9 = ssub.s32 1, %s7
  %s10 = scalar_select 0, %s9, %s7
  loop: start=0, step=1, limit=18
  $region2: #{down_forward.4} parent=0 // loop_pre_header
    _
  $region3: #{down_forward.4} parent=0 // loop_header
    %s12 = sphi 0, %s16
    %p13 = scmp.ge.s32.totalorder %s12, 18
    %s19 = sphi 0, %s31
    %s20 = sphi 0, %s27
    %s21 = sphi 0, %s19
    %s22 = sphi 0, %s20
    %s23 = sphi 0, %s21
    %s24 = sphi 0, %s22
    %s36 = sphi 0, %s38
    %s39 = sphi 0, %s36
    %s40 = sphi 0, %s39
    %s56 = sphi 0, %s40
    %s66 = sphi 0, %s68
    %s69 = sphi 0, %s66
    %s70 = sphi 0, %s69
    %s86 = sphi 0, %s70
    %s96 = sphi 0, %s98
    %s99 = sphi 0, %s96
    %s100 = sphi 0, %s99
    %s116 = sphi 0, %s100
    %s120 = sphi 0, %s120
    %s122 = sphi 0, %s120
    %s123 = sphi 0, %s122
    %s137 = sphi 0, %s123
    %s145 = sphi 0, %s147
    %s148 = sphi 0, %s145
    %s149 = sphi 0, %s148
    %s165 = sphi 0, %s149
    %s173 = sphi 0, %s175
    %s176 = sphi 0, %s173
    %s177 = sphi 0, %s176
    %s193 = sphi 0, %s177
  $region4: #{down_forward.4} parent=0 // loop_header_branch
    %15 = sbr.rel (%p13) target = $region8
  $region5: #{down_forward.4} parent=0 // loop_body
    %s17 = ssub.s32 %s12, 1
    %s18 = ssub.s32 %s12, 2
    %s25 = sadd.s32 1, %s20
    %p26 = scmp.ge.s32.totalorder %s25, 8
    %s27 = scalar_select %p26, 0, %s25
    %s28 = sadd.s32 1, %s19
    %s29 = scalar_select %p26, %s28, %s19
    %p30 = scmp.ge.s32.totalorder %s29, 2
    %s31 = scalar_select %p30, 0, %s29
    %s32 = ssub.s32 %s19, %s31
    %s33 = ssub.s32 %s20, %s27
    %s34 = sor.u32 %s32, %s33
    %p35 = scmp.eq.s32.totalorder %s34, 0
    %s37 = sadd.s32 %s36, 1
    %s38 = scalar_select %p35, %s36, %s37
    %p41 = pneg %p35
    %p42 = scmp.eq.s32.totalorder %s12, 15
    %p43 = por %p41, %p42
    %p44 = scmp.ne.s32.totalorder %s36, %s39
    %p45 = scmp.eq.s32.totalorder %s12, 0
    %p46 = por %p44, %p45
    %p47 = scmp.ne.s32.totalorder %s36, %s39
    %p48 = scmp.eq.s32.totalorder %s17, 15
    %p49 = por %p47, %p48
    %p50 = scmp.ne.s32.totalorder %s39, %s40
    %p51 = scmp.eq.s32.totalorder %s17, 0
    %p52 = por %p50, %p51
    %p53 = scmp.ne.s32.totalorder %s39, %s40
    %p54 = scmp.eq.s32.totalorder %s18, 15
    %p55 = por %p53, %p54
    %p57 = scmp.ne.s32.totalorder %s40, %s56
    %p58 = scmp.eq.s32.totalorder %s18, 0
    %p59 = por %p57, %p58
    %s60 = sadd.s32 %s20, 1
    %s61 = sadd.s32 %s27, 1
    %s62 = ssub.s32 %s19, %s31
    %s63 = ssub.s32 %s60, %s61
    %s64 = sor.u32 %s62, %s63
    %p65 = scmp.eq.s32.totalorder %s64, 0
    %s67 = sadd.s32 %s66, 1
    %s68 = scalar_select %p65, %s66, %s67
    %p71 = pneg %p65
    %p72 = scmp.eq.s32.totalorder %s12, 15
    %p73 = por %p71, %p72
    %p74 = scmp.ne.s32.totalorder %s66, %s69
    %p75 = scmp.eq.s32.totalorder %s12, 0
    %p76 = por %p74, %p75
    %p77 = scmp.ne.s32.totalorder %s66, %s69
    %p78 = scmp.eq.s32.totalorder %s17, 15
    %p79 = por %p77, %p78
    %p80 = scmp.ne.s32.totalorder %s69, %s70
    %p81 = scmp.eq.s32.totalorder %s17, 0
    %p82 = por %p80, %p81
    %p83 = scmp.ne.s32.totalorder %s69, %s70
    %p84 = scmp.eq.s32.totalorder %s18, 15
    %p85 = por %p83, %p84
    %p87 = scmp.ne.s32.totalorder %s70, %s86
    %p88 = scmp.eq.s32.totalorder %s18, 0
    %p89 = por %p87, %p88
    %s90 = sadd.s32 %s20, 2
    %s91 = sadd.s32 %s27, 2
    %s92 = ssub.s32 %s19, %s31
    %s93 = ssub.s32 %s90, %s91
    %s94 = sor.u32 %s92, %s93
    %p95 = scmp.eq.s32.totalorder %s94, 0
    %s97 = sadd.s32 %s96, 1
    %s98 = scalar_select %p95, %s96, %s97
    %p101 = pneg %p95
    %p102 = scmp.eq.s32.totalorder %s12, 15
    %p103 = por %p101, %p102
    %p104 = scmp.ne.s32.totalorder %s96, %s99
    %p105 = scmp.eq.s32.totalorder %s12, 0
    %p106 = por %p104, %p105
    %p107 = scmp.ne.s32.totalorder %s96, %s99
    %p108 = scmp.eq.s32.totalorder %s17, 15
    %p109 = por %p107, %p108
    %p110 = scmp.ne.s32.totalorder %s99, %s100
    %p111 = scmp.eq.s32.totalorder %s17, 0
    %p112 = por %p110, %p111
    %p113 = scmp.ne.s32.totalorder %s99, %s100
    %p114 = scmp.eq.s32.totalorder %s18, 15
    %p115 = por %p113, %p114
    %p117 = scmp.ne.s32.totalorder %s100, %s116
    %p118 = scmp.eq.s32.totalorder %s18, 0
    %p119 = por %p117, %p118
    %s121 = sadd.s32 %s120, 1
    %p124 = scmp.eq.s32.totalorder %s12, 15
    %p125 = scmp.ne.s32.totalorder %s120, %s122
    %p126 = scmp.eq.s32.totalorder %s12, 0
    %p127 = por %p125, %p126
    %p128 = scmp.ne.s32.totalorder %s120, %s122
    %p129 = scmp.eq.s32.totalorder %s17, 15
    %p130 = por %p128, %p129
    %p131 = scmp.ne.s32.totalorder %s122, %s123
    %p132 = scmp.eq.s32.totalorder %s17, 0
    %p133 = por %p131, %p132
    %p134 = scmp.ne.s32.totalorder %s122, %s123
    %p135 = scmp.eq.s32.totalorder %s18, 15
    %p136 = por %p134, %p135
    %p138 = scmp.ne.s32.totalorder %s123, %s137
    %p139 = scmp.eq.s32.totalorder %s18, 0
    %p140 = por %p138, %p139
    %s141 = ssub.s32 %s19, %s31
    %s142 = ssub.s32 %s20, %s27
    %s143 = sor.u32 %s141, %s142
    %p144 = scmp.eq.s32.totalorder %s143, 0
    %s146 = sadd.s32 %s145, 1
    %s147 = scalar_select %p144, %s145, %s146
    %p150 = pneg %p144
    %p151 = scmp.eq.s32.totalorder %s12, 15
    %p152 = por %p150, %p151
    %p153 = scmp.ne.s32.totalorder %s145, %s148
    %p154 = scmp.eq.s32.totalorder %s12, 0
    %p155 = por %p153, %p154
    %p156 = scmp.ne.s32.totalorder %s145, %s148
    %p157 = scmp.eq.s32.totalorder %s17, 15
    %p158 = por %p156, %p157
    %p159 = scmp.ne.s32.totalorder %s148, %s149
    %p160 = scmp.eq.s32.totalorder %s17, 0
    %p161 = por %p159, %p160
    %p162 = scmp.ne.s32.totalorder %s148, %s149
    %p163 = scmp.eq.s32.totalorder %s18, 15
    %p164 = por %p162, %p163
    %p166 = scmp.ne.s32.totalorder %s149, %s165
    %p167 = scmp.eq.s32.totalorder %s18, 0
    %p168 = por %p166, %p167
    %s169 = ssub.s32 %s19, %s31
    %s170 = ssub.s32 %s20, %s27
    %s171 = sor.u32 %s169, %s170
    %p172 = scmp.eq.s32.totalorder %s171, 0
    %s174 = sadd.s32 %s173, 1
    %s175 = scalar_select %p172, %s173, %s174
    %p178 = pneg %p172
    %p179 = scmp.eq.s32.totalorder %s12, 15
    %p180 = por %p178, %p179
    %p181 = scmp.ne.s32.totalorder %s173, %s176
    %p182 = scmp.eq.s32.totalorder %s12, 0
    %p183 = por %p181, %p182
    %p184 = scmp.ne.s32.totalorder %s173, %s176
    %p185 = scmp.eq.s32.totalorder %s17, 15
    %p186 = por %p184, %p185
    %p187 = scmp.ne.s32.totalorder %s176, %s177
    %p188 = scmp.eq.s32.totalorder %s17, 0
    %p189 = por %p187, %p188
    %p190 = scmp.ne.s32.totalorder %s176, %s177
    %p191 = scmp.eq.s32.totalorder %s18, 15
    %p192 = por %p190, %p191
    %p194 = scmp.ne.s32.totalorder %s177, %s193
    %p195 = scmp.eq.s32.totalorder %s18, 0
    %p196 = por %p194, %p195
    %p197 = scmp.le.s32.totalorder 1, %s12
    %p198 = scmp.lt.s32.totalorder %s12, 17
    %p199 = pnand %p197, %p198
    %p200 = pneg %p199
    // Predicated region
    $region9: #{down_forward.4} parent=5 // pred_check
      _
    $region10: #{down_forward.4} parent=5 // pred_check_branch
      %202 = sbr.rel (%p199) target = $region12
    $region11: #{down_forward.4} parent=5 // pred_region
      %s203 = ssub.s32 %s12, 1
      // Predicated region
      $region13: #{down_forward.4} parent=11 // pred_check
        %p204 = pneg %p133
      $region14: #{down_forward.4} parent=11 // pred_check_branch
        %206 = sbr.rel (%p204) target = $region16
      $region15: #{down_forward.4} parent=11 // pred_region
        _
      $region16: #{down_forward.4} parent=11 // pred_fallthru
        _
    $region12: #{down_forward.4} parent=5 // pred_fallthru
      _
    %p207 = scmp.lt.s32.totalorder %s12, 16
    // Predicated region
    $region17: #{down_forward.4} parent=5 // pred_check
      %p208 = pneg %p207
    $region18: #{down_forward.4} parent=5 // pred_check_branch
      %210 = sbr.rel (%p208) target = $region20
    $region19: #{down_forward.4} parent=5 // pred_region
      // Predicated region
      $region21: #{down_forward.4} parent=19 // pred_check
        %p211 = pneg %p46
      $region22: #{down_forward.4} parent=19 // pred_check_branch
        %213 = sbr.rel (%p211) target = $region24
      $region23: #{down_forward.4} parent=19 // pred_region
        %s214 = smul.u32 2, %s20
        %p215 = scmp.lt.s32.totalorder %s19, 1
        %s216 = scalar_select %p215, %s19, 1
        %p217 = scmp.lt.s32.totalorder %s214, 19
        %s218 = scalar_select %p217, %s214, 19
        %s219 = smul.addr %s218, 4
        %s220 = smul.addr %s216, 80
        %s221 = sadd.s32 %s219, %s220
        %s222 = smul.addr %s221, 4
        %s223 = scalar_lea.vmem %s0, %s222
        %s224 = smul.u32 2, %s20
      $region24: #{down_forward.4} parent=19 // pred_fallthru
        _
      // Predicated region
      $region25: #{down_forward.4} parent=19 // pred_check
        %p225 = pneg %p76
      $region26: #{down_forward.4} parent=19 // pred_check_branch
        %227 = sbr.rel (%p225) target = $region28
      $region27: #{down_forward.4} parent=19 // pred_region
        %s228 = sadd.s32 %s20, 1
        %s229 = smul.u32 2, %s228
        %p230 = scmp.lt.s32.totalorder %s19, 1
        %s231 = scalar_select %p230, %s19, 1
        %p232 = scmp.lt.s32.totalorder %s229, 19
        %s233 = scalar_select %p232, %s229, 19
        %s234 = smul.addr %s233, 4
        %s235 = smul.addr %s231, 80
        %s236 = sadd.s32 %s234, %s235
        %s237 = smul.addr %s236, 4
        %s238 = scalar_lea.vmem %s1, %s237
        %s239 = sadd.s32 %s20, 1
        %s240 = smul.u32 2, %s239
      $region28: #{down_forward.4} parent=19 // pred_fallthru
        _
      // Predicated region
      $region29: #{down_forward.4} parent=19 // pred_check
        %p241 = pneg %p106
      $region30: #{down_forward.4} parent=19 // pred_check_branch
        %243 = sbr.rel (%p241) target = $region32
      $region31: #{down_forward.4} parent=19 // pred_region
        %s244 = sadd.s32 %s20, 2
        %s245 = smul.u32 2, %s244
        %p246 = scmp.lt.s32.totalorder %s19, 1
        %s247 = scalar_select %p246, %s19, 1
        %p248 = scmp.lt.s32.totalorder %s245, 19
        %s249 = scalar_select %p248, %s245, 19
        %s250 = smul.addr %s249, 4
        %s251 = smul.addr %s247, 80
        %s252 = sadd.s32 %s250, %s251
        %s253 = smul.addr %s252, 4
        %s254 = scalar_lea.vmem %s2, %s253
        %s255 = sadd.s32 %s20, 2
        %s256 = smul.u32 2, %s255
      $region32: #{down_forward.4} parent=19 // pred_fallthru
        _
    $region20: #{down_forward.4} parent=5 // pred_fallthru
      _
    %p257 = scmp.le.s32.totalorder 1, %s12
    %p258 = scmp.lt.s32.totalorder %s12, 17
    %p259 = pnand %p257, %p258
    %p260 = pneg %p259
    // Predicated region
    $region33: #{down_forward.4} parent=5 // pred_check
      _
    $region34: #{down_forward.4} parent=5 // pred_check_branch
      %262 = sbr.rel (%p259) target = $region36
    $region35: #{down_forward.4} parent=5 // pred_region
      %s263 = ssub.s32 %s12, 1
      %s264 = smul.u32 2, %s22
      %p265 = scmp.lt.s32.totalorder %s21, 1
      %s266 = scalar_select %p265, %s21, 1
      %p267 = scmp.lt.s32.totalorder %s264, 19
      %s268 = scalar_select %p267, %s264, 19
      %s269 = smul.addr %s268, 4
      %s270 = smul.addr %s266, 80
      %s271 = sadd.s32 %s269, %s270
      %s272 = smul.addr %s271, 4
      %s273 = scalar_lea.vmem %s0, %s272
      %p274 = pneg %p52
      %p275 = pneg %p49
      %s276 = sadd.s32 %s22, 1
      %s277 = smul.u32 2, %s276
      %p278 = scmp.lt.s32.totalorder %s21, 1
      %s279 = scalar_select %p278, %s21, 1
      %p280 = scmp.lt.s32.totalorder %s277, 19
      %s281 = scalar_select %p280, %s277, 19
      %s282 = smul.addr %s281, 4
      %s283 = smul.addr %s279, 80
      %s284 = sadd.s32 %s282, %s283
      %s285 = smul.addr %s284, 4
      %s286 = scalar_lea.vmem %s1, %s285
      %p287 = pneg %p82
      %p288 = pneg %p79
      %s289 = sadd.s32 %s22, 2
      %s290 = smul.u32 2, %s289
      %p291 = scmp.lt.s32.totalorder %s21, 1
      %s292 = scalar_select %p291, %s21, 1
      %p293 = scmp.lt.s32.totalorder %s290, 19
      %s294 = scalar_select %p293, %s290, 19
      %s295 = smul.addr %s294, 4
      %s296 = smul.addr %s292, 80
      %s297 = sadd.s32 %s295, %s296
      %s298 = smul.addr %s297, 4
      %s299 = scalar_lea.vmem %s2, %s298
      %p300 = pneg %p112
      %p301 = pneg %p109
      %p302 = pneg %p133
      %p303 = pneg %p130
      %p304 = pneg %p161
      %p305 = pneg %p158
      %p306 = scmp.lt.s32.totalorder %s21, 1
      %s307 = scalar_select %p306, %s21, 1
      %p308 = scmp.lt.s32.totalorder %s22, 7
      %s309 = scalar_select %p308, %s22, 7
      %s310 = smul.addr %s307, 8
      %s311 = sadd.s32 %s309, %s310
      %s312 = smul.addr %s311, 4
      %s313 = scalar_lea.vmem %s4, %s312
      %p314 = pneg %p189
      %p315 = pneg %p186
      %p316 = scmp.lt.s32.totalorder %s21, 1
      %s317 = scalar_select %p316, %s21, 1
      %p318 = scmp.lt.s32.totalorder %s22, 7
      %s319 = scalar_select %p318, %s22, 7
      %s320 = smul.addr %s317, 8
      %s321 = sadd.s32 %s319, %s320
      %s322 = smul.addr %s321, 2
      %s323 = scalar_lea.vmem %s5, %s322
      %s324 = smul.u32 2, %s22
      %p325 = scmp.lt.s32.totalorder %s21, 1
      %s326 = scalar_select %p325, %s21, 1
      %p327 = scmp.lt.s32.totalorder %s324, 19
      %s328 = scalar_select %p327, %s324, 19
      %s329 = smul.addr %s328, 4
      %s330 = smul.addr %s326, 80
      %s331 = sadd.s32 %s329, %s330
      %s332 = smul.addr %s331, 4
      %s333 = scalar_lea.vmem %s0, %s332
      %s334 = smul.u32 2, %s22
      %s335 = sadd.s32 %s22, 1
      %s336 = smul.u32 2, %s335
      %p337 = scmp.lt.s32.totalorder %s21, 1
      %s338 = scalar_select %p337, %s21, 1
      %p339 = scmp.lt.s32.totalorder %s336, 19
      %s340 = scalar_select %p339, %s336, 19
      %s341 = smul.addr %s340, 4
      %s342 = smul.addr %s338, 80
      %s343 = sadd.s32 %s341, %s342
      %s344 = smul.addr %s343, 4
      %s345 = scalar_lea.vmem %s1, %s344
      %s346 = sadd.s32 %s22, 1
      %s347 = smul.u32 2, %s346
      %s348 = sadd.s32 %s22, 2
      %s349 = smul.u32 2, %s348
      %p350 = scmp.lt.s32.totalorder %s21, 1
      %s351 = scalar_select %p350, %s21, 1
      %p352 = scmp.lt.s32.totalorder %s349, 19
      %s353 = scalar_select %p352, %s349, 19
      %s354 = smul.addr %s353, 4
      %s355 = smul.addr %s351, 80
      %s356 = sadd.s32 %s354, %s355
      %s357 = smul.addr %s356, 4
      %s358 = scalar_lea.vmem %s2, %s357
      %s359 = sadd.s32 %s22, 2
      %s360 = smul.u32 2, %s359
      %p361 = scmp.lt.s32.totalorder %s21, 1
      %s362 = scalar_select %p361, %s21, 1
      %p363 = scmp.lt.s32.totalorder %s22, 7
      %s364 = scalar_select %p363, %s22, 7
      %s365 = smul.addr %s362, 8
      %s366 = sadd.s32 %s364, %s365
      %s367 = smul.addr %s366, 4
      %s368 = scalar_lea.vmem %s4, %s367
      %p369 = scmp.lt.s32.totalorder %s21, 1
      %s370 = scalar_select %p369, %s21, 1
      %p371 = scmp.lt.s32.totalorder %s22, 7
      %s372 = scalar_select %p371, %s22, 7
      %s373 = smul.addr %s370, 8
      %s374 = sadd.s32 %s372, %s373
      %s375 = smul.addr %s374, 2
      %s376 = scalar_lea.vmem %s5, %s375
      %v378 = vld [vmem:[%s333] sm:$0xff]
      %v379 = vld [vmem:[%s333 + $0x8] sm:$0x11]
      %v380 = vld [vmem:[%s333 + $0x10] sm:$0xff]
      %v381 = vld [vmem:[%s333 + $0x18] sm:$0x11]
      %v382 = vmax.bf16 %v378, %v380
      %v383 = vmax.bf16 %v379, %v381
      %v386 = vrot.slane %v382, 4
      %v387 = vrot.slane %v383, 4
      %v390 = vmax.bf16 %v382, %v386
      %v391 = vmax.bf16 %v383, %v387
      %v392 = vld [vmem:[%s345] sm:$0xff]
      %v393 = vld [vmem:[%s345 + $0x8] sm:$0x11]
      %v394 = vld [vmem:[%s345 + $0x10] sm:$0xff]
      %v395 = vld [vmem:[%s345 + $0x18] sm:$0x11]
      %v396 = vmax.bf16 %v392, %v394
      %v397 = vmax.bf16 %v393, %v395
      %v400 = vrot.slane %v396, 4
      %v401 = vrot.slane %v397, 4
      %v404 = vmax.bf16 %v396, %v400
      %v405 = vmax.bf16 %v397, %v401
      %v406 = vld [vmem:[%s358] sm:$0xff]
      %v407 = vld [vmem:[%s358 + $0x8] sm:$0x11]
      %v408 = vld [vmem:[%s358 + $0x10] sm:$0xff]
      %v409 = vld [vmem:[%s358 + $0x18] sm:$0x11]
      %v410 = vmax.bf16 %v406, %v408
      %v411 = vmax.bf16 %v407, %v409
      %v414 = vrot.slane %v410, 4
      %v415 = vrot.slane %v411, 4
      %v418 = vmax.bf16 %v410, %v414
      %v419 = vmax.bf16 %v411, %v415
      %v422 = vunpack.c.l.b16 %v390
      %v423 = vunpack.c.l.b16 %v391
      %v424 = vpack.c.b16 %v423, %v422
      %v428 = vunpack.c.l.b16 %v404
      %v429 = vunpack.c.l.b16 %v405
      %v430 = vpack.c.b16 %v429, %v428
      %v434 = vunpack.c.l.b16 %v418
      %v435 = vunpack.c.l.b16 %v419
      %v436 = vpack.c.b16 %v435, %v434
      %v438 = vld [vmem:[%s3] sm:$0xf]
      %v439 = vld [vmem:[%s3 + $0x4] sm:$0xf]
      %v440 = vld [vmem:[%s3 + $0x8] sm:$0xf]
      %v441 = vld [vmem:[%s3 + $0xc] sm:$0xf]
      %v442 = vld [vmem:[%s3 + $0x10] sm:$0xf]
      %v443 = vld [vmem:[%s3 + $0x14] sm:$0xf]
      %v444 = vld [vmem:[%s3 + $0x18] sm:$0xf]
      %v445 = vld [vmem:[%s3 + $0x1c] sm:$0xf]
      %v446 = vld [vmem:[%s3 + $0x20] sm:$0xf]
      %v447 = vld [vmem:[%s3 + $0x24] sm:$0xf]
      %v448 = vld [vmem:[%s3 + $0x28] sm:$0xf]
      %v449 = vld [vmem:[%s3 + $0x2c] sm:$0xf]
      %v450 = vld [vmem:[%s3 + $0x30] sm:$0xf]
      %v451 = vld [vmem:[%s3 + $0x34] sm:$0xf]
      %v452 = vld [vmem:[%s3 + $0x38] sm:$0xf]
      %v453 = vld [vmem:[%s3 + $0x3c] sm:$0xf]
      %v454 = vld [vmem:[%s3 + $0x40] sm:$0xf]
      %v455 = vld [vmem:[%s3 + $0x44] sm:$0xf]
      %v456 = vld [vmem:[%s3 + $0x48] sm:$0xf]
      %v457 = vld [vmem:[%s3 + $0x4c] sm:$0xf]
      %v458 = vld [vmem:[%s3 + $0x50] sm:$0xf]
      %v459 = vld [vmem:[%s3 + $0x54] sm:$0xf]
      %v460 = vld [vmem:[%s3 + $0x58] sm:$0xf]
      %v461 = vld [vmem:[%s3 + $0x5c] sm:$0xf]
      %v462 = vld [vmem:[%s3 + $0x60] sm:$0xf]
      %v463 = vld [vmem:[%s3 + $0x64] sm:$0xf]
      %v464 = vld [vmem:[%s3 + $0x68] sm:$0xf]
      %v465 = vld [vmem:[%s3 + $0x6c] sm:$0xf]
      %v466 = vld [vmem:[%s3 + $0x70] sm:$0xf]
      %v467 = vld [vmem:[%s3 + $0x74] sm:$0xf]
      %v468 = vld [vmem:[%s3 + $0x78] sm:$0xf]
      %v469 = vld [vmem:[%s3 + $0x7c] sm:$0xf]
      %v470 = vld [vmem:[%s3 + $0x80] sm:$0xf]
      %v471 = vld [vmem:[%s3 + $0x84] sm:$0xf]
      %v472 = vld [vmem:[%s3 + $0x88] sm:$0xf]
      %v473 = vld [vmem:[%s3 + $0x8c] sm:$0xf]
      %v474 = vld [vmem:[%s3 + $0x90] sm:$0xf]
      %v475 = vld [vmem:[%s3 + $0x94] sm:$0xf]
      %v476 = vld [vmem:[%s3 + $0x98] sm:$0xf]
      %v477 = vld [vmem:[%s3 + $0x9c] sm:$0xf]
      %v478 = vld [vmem:[%s3 + $0xa0] sm:$0xf]
      %v479 = vld [vmem:[%s3 + $0xa4] sm:$0xf]
      %v480 = vld [vmem:[%s3 + $0xa8] sm:$0xf]
      %v481 = vld [vmem:[%s3 + $0xac] sm:$0xf]
      %v482 = vld [vmem:[%s3 + $0xb0] sm:$0xf]
      %v483 = vld [vmem:[%s3 + $0xb4] sm:$0xf]
      %v484 = vld [vmem:[%s3 + $0xb8] sm:$0xf]
      %v485 = vld [vmem:[%s3 + $0xbc] sm:$0xf]
      %s486 = scalar_lea.vmem %s3, 192
      %v487 = vld [vmem:[%s486] sm:$0xf]
      %v488 = vld [vmem:[%s486 + $0x4] sm:$0xf]
      %v489 = vld [vmem:[%s486 + $0x8] sm:$0xf]
      %v490 = vld [vmem:[%s486 + $0xc] sm:$0xf]
      %v491 = vld [vmem:[%s486 + $0x10] sm:$0xf]
      %v492 = vld [vmem:[%s486 + $0x14] sm:$0xf]
      %v493 = vld [vmem:[%s486 + $0x18] sm:$0xf]
      %v494 = vld [vmem:[%s486 + $0x1c] sm:$0xf]
      %v495 = vld [vmem:[%s486 + $0x20] sm:$0xf]
      %v496 = vld [vmem:[%s486 + $0x24] sm:$0xf]
      %v497 = vld [vmem:[%s486 + $0x28] sm:$0xf]
      %v498 = vld [vmem:[%s486 + $0x2c] sm:$0xf]
      %v499 = vld [vmem:[%s486 + $0x30] sm:$0xf]
      %v500 = vld [vmem:[%s486 + $0x34] sm:$0xf]
      %v501 = vld [vmem:[%s486 + $0x38] sm:$0xf]
      %v502 = vld [vmem:[%s486 + $0x3c] sm:$0xf]
      %v503 = vld [vmem:[%s486 + $0x40] sm:$0xf]
      %v504 = vld [vmem:[%s486 + $0x44] sm:$0xf]
      %v505 = vld [vmem:[%s486 + $0x48] sm:$0xf]
      %v506 = vld [vmem:[%s486 + $0x4c] sm:$0xf]
      %v507 = vld [vmem:[%s486 + $0x50] sm:$0xf]
      %v508 = vld [vmem:[%s486 + $0x54] sm:$0xf]
      %v509 = vld [vmem:[%s486 + $0x58] sm:$0xf]
      %v510 = vld [vmem:[%s486 + $0x5c] sm:$0xf]
      %v511 = vld [vmem:[%s486 + $0x60] sm:$0xf]
      %v512 = vld [vmem:[%s486 + $0x64] sm:$0xf]
      %v513 = vld [vmem:[%s486 + $0x68] sm:$0xf]
      %v514 = vld [vmem:[%s486 + $0x6c] sm:$0xf]
      %v515 = vld [vmem:[%s486 + $0x70] sm:$0xf]
      %v516 = vld [vmem:[%s486 + $0x74] sm:$0xf]
      %v517 = vld [vmem:[%s486 + $0x78] sm:$0xf]
      %v518 = vld [vmem:[%s486 + $0x7c] sm:$0xf]
      %v519 = vld [vmem:[%s486 + $0x80] sm:$0xf]
      %v520 = vld [vmem:[%s486 + $0x84] sm:$0xf]
      %v521 = vld [vmem:[%s486 + $0x88] sm:$0xf]
      %v522 = vld [vmem:[%s486 + $0x8c] sm:$0xf]
      %v523 = vld [vmem:[%s486 + $0x90] sm:$0xf]
      %v524 = vld [vmem:[%s486 + $0x94] sm:$0xf]
      %v525 = vld [vmem:[%s486 + $0x98] sm:$0xf]
      %v526 = vld [vmem:[%s486 + $0x9c] sm:$0xf]
      %v527 = vld [vmem:[%s486 + $0xa0] sm:$0xf]
      %v528 = vld [vmem:[%s486 + $0xa4] sm:$0xf]
      %v529 = vld [vmem:[%s486 + $0xa8] sm:$0xf]
      %v530 = vld [vmem:[%s486 + $0xac] sm:$0xf]
      %v531 = vld [vmem:[%s486 + $0xb0] sm:$0xf]
      %v532 = vld [vmem:[%s486 + $0xb4] sm:$0xf]
      %v533 = vld [vmem:[%s486 + $0xb8] sm:$0xf]
      %v534 = vld [vmem:[%s486 + $0xbc] sm:$0xf]
      %v536 = vshrl.u32 %v424, 16
      %v538 = vshll.u32 %v424, 16
      %v540 = vrot.slane %v538, 1
      %v541 = vor.u32 %v536, %v540
      %v543 = vshrl.u32 %v430, 16
      %v545 = vshll.u32 %v430, 16
      %v547 = vrot.slane %v545, 1
      %v548 = vor.u32 %v543, %v547
      %v550 = vshrl.u32 %v436, 16
      %v552 = vshll.u32 %v436, 16
      %v554 = vrot.slane %v552, 1
      %v555 = vor.u32 %v550, %v554
      %v607 = vunpack.c.l.b16 %v487
      %v608 = vunpack.c.l.b16 %v488
      %v609 = vunpack.c.l.b16 %v489
      %v610 = vunpack.c.l.b16 %v490
      %v611 = vunpack.c.l.b16 %v491
      %v612 = vunpack.c.l.b16 %v492
      %v613 = vunpack.c.l.b16 %v493
      %v614 = vunpack.c.l.b16 %v494
      %v615 = vunpack.c.l.b16 %v495
      %v616 = vunpack.c.l.b16 %v496
      %v617 = vunpack.c.l.b16 %v497
      %v618 = vunpack.c.l.b16 %v498
      %v619 = vunpack.c.l.b16 %v499
      %v620 = vunpack.c.l.b16 %v500
      %v621 = vunpack.c.l.b16 %v501
      %v622 = vunpack.c.l.b16 %v502
      %v623 = vunpack.c.l.b16 %v503
      %v624 = vunpack.c.l.b16 %v504
      %v625 = vunpack.c.l.b16 %v505
      %v626 = vunpack.c.l.b16 %v506
      %v627 = vunpack.c.l.b16 %v507
      %v628 = vunpack.c.l.b16 %v508
      %v629 = vunpack.c.l.b16 %v509
      %v630 = vunpack.c.l.b16 %v510
      %v631 = vunpack.c.l.b16 %v511
      %v632 = vunpack.c.l.b16 %v512
      %v633 = vunpack.c.l.b16 %v513
      %v634 = vunpack.c.l.b16 %v514
      %v635 = vunpack.c.l.b16 %v515
      %v636 = vunpack.c.l.b16 %v516
      %v637 = vunpack.c.l.b16 %v517
      %v638 = vunpack.c.l.b16 %v518
      %v639 = vunpack.c.l.b16 %v519
      %v640 = vunpack.c.l.b16 %v520
      %v641 = vunpack.c.l.b16 %v521
      %v642 = vunpack.c.l.b16 %v522
      %v643 = vunpack.c.l.b16 %v523
      %v644 = vunpack.c.l.b16 %v524
      %v645 = vunpack.c.l.b16 %v525
      %v646 = vunpack.c.l.b16 %v526
      %v647 = vunpack.c.l.b16 %v527
      %v648 = vunpack.c.l.b16 %v528
      %v649 = vunpack.c.l.b16 %v529
      %v650 = vunpack.c.l.b16 %v530
      %v651 = vunpack.c.l.b16 %v531
      %v652 = vunpack.c.l.b16 %v532
      %v653 = vunpack.c.l.b16 %v533
      %v654 = vunpack.c.l.b16 %v534
      %v655 = vpack.c.b16 %v608, %v607
      %v656 = vpack.c.b16 %v610, %v609
      %v657 = vpack.c.b16 %v612, %v611
      %v658 = vpack.c.b16 %v614, %v613
      %v659 = vpack.c.b16 %v616, %v615
      %v660 = vpack.c.b16 %v618, %v617
      %v661 = vpack.c.b16 %v620, %v619
      %v662 = vpack.c.b16 %v622, %v621
      %v663 = vpack.c.b16 %v624, %v623
      %v664 = vpack.c.b16 %v626, %v625
      %v665 = vpack.c.b16 %v628, %v627
      %v666 = vpack.c.b16 %v630, %v629
      %v667 = vpack.c.b16 %v632, %v631
      %v668 = vpack.c.b16 %v634, %v633
      %v669 = vpack.c.b16 %v636, %v635
      %v670 = vpack.c.b16 %v638, %v637
      %v671 = vpack.c.b16 %v640, %v639
      %v672 = vpack.c.b16 %v642, %v641
      %v673 = vpack.c.b16 %v644, %v643
      %v674 = vpack.c.b16 %v646, %v645
      %v675 = vpack.c.b16 %v648, %v647
      %v676 = vpack.c.b16 %v650, %v649
      %v677 = vpack.c.b16 %v652, %v651
      %v678 = vpack.c.b16 %v654, %v653
      %703 = vmatprep.subr.bf16.mxu0 0
      %704 = vmatpush1.bf16.msra.mxu0 %v655
      %705 = vmatprep.subr.bf16.mxu0 0
      %706 = vmatpush1.bf16.msra.mxu0 %v656
      %707 = vmatprep.subr.bf16.mxu0 0
      %708 = vmatpush1.bf16.msra.mxu0 %v657
      %709 = vmatprep.subr.bf16.mxu0 0
      %710 = vmatpush1.bf16.msra.mxu0 %v658
      %711 = vmatprep.subr.bf16.mxu0 0
      %712 = vmatpush1.bf16.msra.mxu0 %v659
      %713 = vmatprep.subr.bf16.mxu0 0
      %714 = vmatpush1.bf16.msra.mxu0 %v660
      %715 = vmatprep.subr.bf16.mxu0 0
      %716 = vmatpush1.bf16.msra.mxu0 %v661
      %717 = vmatprep.subr.bf16.mxu0 0
      %718 = vmatpush1.bf16.msra.mxu0 %v662
      %719 = vmatprep.subr.bf16.mxu0 0
      %720 = vmatpush1.bf16.msra.mxu0 %v663
      %721 = vmatprep.subr.bf16.mxu0 0
      %722 = vmatpush1.bf16.msra.mxu0 %v664
      %723 = vmatprep.subr.bf16.mxu0 0
      %724 = vmatpush1.bf16.msra.mxu0 %v665
      %725 = vmatprep.subr.bf16.mxu0 0
      %726 = vmatpush1.bf16.msra.mxu0 %v666
      %727 = vmatprep.subr.bf16.mxu0 0
      %728 = vmatpush1.bf16.msra.mxu0 %v667
      %729 = vmatprep.subr.bf16.mxu0 0
      %730 = vmatpush1.bf16.msra.mxu0 %v668
      %731 = vmatprep.subr.bf16.mxu0 0
      %732 = vmatpush1.bf16.msra.mxu0 %v669
      %733 = vmatprep.subr.bf16.mxu0 0
      %734 = vmatpush1.bf16.msra.mxu0 %v670
      %735 = vmatprep.mubr.bf16.mxu0 %v548
      %736 = vmatmul.mubr.bf16.gmra.mrb[0].mxu0 %v541
      %v737 = vpop.f32.mrb[0].mxu0
      %v738 = vadd.f32 0.0, %v737
      %v739 = vpop.f32.mrb[0].mxu0
      %v740 = vpop.f32.mrb[0].mxu0
      %v741 = vpop.f32.mrb[0].mxu0
      %742 = vdwg.mxu0
      %743 = vmatprep.subr.bf16.mxu0 0
      %744 = vmatpush1.bf16.msra.mxu0 %v671
      %745 = vmatprep.subr.bf16.mxu0 0
      %746 = vmatpush1.bf16.msra.mxu0 %v672
      %747 = vmatprep.subr.bf16.mxu0 0
      %748 = vmatpush1.bf16.msra.mxu0 %v673
      %749 = vmatprep.subr.bf16.mxu0 0
      %750 = vmatpush1.bf16.msra.mxu0 %v674
      %751 = vmatprep.subr.bf16.mxu0 0
      %752 = vmatpush1.bf16.msra.mxu0 %v675
      %753 = vmatprep.subr.bf16.mxu0 0
      %754 = vmatpush1.bf16.msra.mxu0 %v676
      %755 = vmatprep.subr.bf16.mxu0 0
      %756 = vmatpush1.bf16.msra.mxu0 %v677
      %757 = vmatprep.subr.bf16.mxu0 0
      %758 = vmatpush1.bf16.msra.mxu0 %v678
      %759 = vmatprep.subr.bf16.mxu0 0
      %760 = vmatpush1.bf16.msra.mxu0 0
      %761 = vmatprep.subr.bf16.mxu0 0
      %762 = vmatpush1.bf16.msra.mxu0 0
      %763 = vmatprep.subr.bf16.mxu0 0
      %764 = vmatpush1.bf16.msra.mxu0 0
      %765 = vmatprep.subr.bf16.mxu0 0
      %766 = vmatpush1.bf16.msra.mxu0 0
      %767 = vmatprep.subr.bf16.mxu0 0
      %768 = vmatpush1.bf16.msra.mxu0 0
      %769 = vmatprep.subr.bf16.mxu0 0
      %770 = vmatpush1.bf16.msra.mxu0 0
      %771 = vmatprep.subr.bf16.mxu0 0
      %772 = vmatpush1.bf16.msra.mxu0 0
      %773 = vmatprep.subr.bf16.mxu0 0
      %774 = vmatpush1.bf16.msra.mxu0 0
      %775 = vmatprep.mubr.bf16.mxu0 0
      %776 = vmatmul.mubr.bf16.gmra.mrb[0].mxu0 %v555
      %v777 = vpop.f32.mrb[0].mxu0
      %v778 = vadd.f32 %v738, %v777
      %v779 = vpop.f32.mrb[0].mxu0
      %v780 = vpop.f32.mrb[0].mxu0
      %v781 = vpop.f32.mrb[0].mxu0
      %782 = vdwg.mxu0
      %v831 = vunpack.c.l.b16 %v438
      %v832 = vunpack.c.l.b16 %v439
      %v833 = vunpack.c.l.b16 %v440
      %v834 = vunpack.c.l.b16 %v441
      %v835 = vunpack.c.l.b16 %v442
      %v836 = vunpack.c.l.b16 %v443
      %v837 = vunpack.c.l.b16 %v444
      %v838 = vunpack.c.l.b16 %v445
      %v839 = vunpack.c.l.b16 %v446
      %v840 = vunpack.c.l.b16 %v447
      %v841 = vunpack.c.l.b16 %v448
      %v842 = vunpack.c.l.b16 %v449
      %v843 = vunpack.c.l.b16 %v450
      %v844 = vunpack.c.l.b16 %v451
      %v845 = vunpack.c.l.b16 %v452
      %v846 = vunpack.c.l.b16 %v453
      %v847 = vunpack.c.l.b16 %v454
      %v848 = vunpack.c.l.b16 %v455
      %v849 = vunpack.c.l.b16 %v456
      %v850 = vunpack.c.l.b16 %v457
      %v851 = vunpack.c.l.b16 %v458
      %v852 = vunpack.c.l.b16 %v459
      %v853 = vunpack.c.l.b16 %v460
      %v854 = vunpack.c.l.b16 %v461
      %v855 = vunpack.c.l.b16 %v462
      %v856 = vunpack.c.l.b16 %v463
      %v857 = vunpack.c.l.b16 %v464
      %v858 = vunpack.c.l.b16 %v465
      %v859 = vunpack.c.l.b16 %v466
      %v860 = vunpack.c.l.b16 %v467
      %v861 = vunpack.c.l.b16 %v468
      %v862 = vunpack.c.l.b16 %v469
      %v863 = vunpack.c.l.b16 %v470
      %v864 = vunpack.c.l.b16 %v471
      %v865 = vunpack.c.l.b16 %v472
      %v866 = vunpack.c.l.b16 %v473
      %v867 = vunpack.c.l.b16 %v474
      %v868 = vunpack.c.l.b16 %v475
      %v869 = vunpack.c.l.b16 %v476
      %v870 = vunpack.c.l.b16 %v477
      %v871 = vunpack.c.l.b16 %v478
      %v872 = vunpack.c.l.b16 %v479
      %v873 = vunpack.c.l.b16 %v480
      %v874 = vunpack.c.l.b16 %v481
      %v875 = vunpack.c.l.b16 %v482
      %v876 = vunpack.c.l.b16 %v483
      %v877 = vunpack.c.l.b16 %v484
      %v878 = vunpack.c.l.b16 %v485
      %v879 = vpack.c.b16 %v832, %v831
      %v880 = vpack.c.b16 %v834, %v833
      %v881 = vpack.c.b16 %v836, %v835
      %v882 = vpack.c.b16 %v838, %v837
      %v883 = vpack.c.b16 %v840, %v839
      %v884 = vpack.c.b16 %v842, %v841
      %v885 = vpack.c.b16 %v844, %v843
      %v886 = vpack.c.b16 %v846, %v845
      %v887 = vpack.c.b16 %v848, %v847
      %v888 = vpack.c.b16 %v850, %v849
      %v889 = vpack.c.b16 %v852, %v851
      %v890 = vpack.c.b16 %v854, %v853
      %v891 = vpack.c.b16 %v856, %v855
      %v892 = vpack.c.b16 %v858, %v857
      %v893 = vpack.c.b16 %v860, %v859
      %v894 = vpack.c.b16 %v862, %v861
      %v895 = vpack.c.b16 %v864, %v863
      %v896 = vpack.c.b16 %v866, %v865
      %v897 = vpack.c.b16 %v868, %v867
      %v898 = vpack.c.b16 %v870, %v869
      %v899 = vpack.c.b16 %v872, %v871
      %v900 = vpack.c.b16 %v874, %v873
      %v901 = vpack.c.b16 %v876, %v875
      %v902 = vpack.c.b16 %v878, %v877
      %927 = vmatprep.subr.bf16.mxu0 0
      %928 = vmatpush1.bf16.msra.mxu0 %v879
      %929 = vmatprep.subr.bf16.mxu0 0
      %930 = vmatpush1.bf16.msra.mxu0 %v880
      %931 = vmatprep.subr.bf16.mxu0 0
      %932 = vmatpush1.bf16.msra.mxu0 %v881
      %933 = vmatprep.subr.bf16.mxu0 0
      %934 = vmatpush1.bf16.msra.mxu0 %v882
      %935 = vmatprep.subr.bf16.mxu0 0
      %936 = vmatpush1.bf16.msra.mxu0 %v883
      %937 = vmatprep.subr.bf16.mxu0 0
      %938 = vmatpush1.bf16.msra.mxu0 %v884
      %939 = vmatprep.subr.bf16.mxu0 0
      %940 = vmatpush1.bf16.msra.mxu0 %v885
      %941 = vmatprep.subr.bf16.mxu0 0
      %942 = vmatpush1.bf16.msra.mxu0 %v886
      %943 = vmatprep.subr.bf16.mxu0 0
      %944 = vmatpush1.bf16.msra.mxu0 %v887
      %945 = vmatprep.subr.bf16.mxu0 0
      %946 = vmatpush1.bf16.msra.mxu0 %v888
      %947 = vmatprep.subr.bf16.mxu0 0
      %948 = vmatpush1.bf16.msra.mxu0 %v889
      %949 = vmatprep.subr.bf16.mxu0 0
      %950 = vmatpush1.bf16.msra.mxu0 %v890
      %951 = vmatprep.subr.bf16.mxu0 0
      %952 = vmatpush1.bf16.msra.mxu0 %v891
      %953 = vmatprep.subr.bf16.mxu0 0
      %954 = vmatpush1.bf16.msra.mxu0 %v892
      %955 = vmatprep.subr.bf16.mxu0 0
      %956 = vmatpush1.bf16.msra.mxu0 %v893
      %957 = vmatprep.subr.bf16.mxu0 0
      %958 = vmatpush1.bf16.msra.mxu0 %v894
      %959 = vmatprep.mubr.bf16.mxu0 %v430
      %960 = vmatmul.mubr.bf16.gmra.mrb[0].mxu0 %v424
      %v961 = vpop.f32.mrb[0].mxu0
      %v962 = vadd.f32 %v778, %v961
      %v963 = vpop.f32.mrb[0].mxu0
      %v964 = vpop.f32.mrb[0].mxu0
      %v965 = vpop.f32.mrb[0].mxu0
      %966 = vdwg.mxu0
      %967 = vmatprep.subr.bf16.mxu0 0
      %968 = vmatpush1.bf16.msra.mxu0 %v895
      %969 = vmatprep.subr.bf16.mxu0 0
      %970 = vmatpush1.bf16.msra.mxu0 %v896
      %971 = vmatprep.subr.bf16.mxu0 0
      %972 = vmatpush1.bf16.msra.mxu0 %v897
      %973 = vmatprep.subr.bf16.mxu0 0
      %974 = vmatpush1.bf16.msra.mxu0 %v898
      %975 = vmatprep.subr.bf16.mxu0 0
      %976 = vmatpush1.bf16.msra.mxu0 %v899
      %977 = vmatprep.subr.bf16.mxu0 0
      %978 = vmatpush1.bf16.msra.mxu0 %v900
      %979 = vmatprep.subr.bf16.mxu0 0
      %980 = vmatpush1.bf16.msra.mxu0 %v901
      %981 = vmatprep.subr.bf16.mxu0 0
      %982 = vmatpush1.bf16.msra.mxu0 %v902
      %983 = vmatprep.subr.bf16.mxu0 0
      %984 = vmatpush1.bf16.msra.mxu0 0
      %985 = vmatprep.subr.bf16.mxu0 0
      %986 = vmatpush1.bf16.msra.mxu0 0
      %987 = vmatprep.subr.bf16.mxu0 0
      %988 = vmatpush1.bf16.msra.mxu0 0
      %989 = vmatprep.subr.bf16.mxu0 0
      %990 = vmatpush1.bf16.msra.mxu0 0
      %991 = vmatprep.subr.bf16.mxu0 0
      %992 = vmatpush1.bf16.msra.mxu0 0
      %993 = vmatprep.subr.bf16.mxu0 0
      %994 = vmatpush1.bf16.msra.mxu0 0
      %995 = vmatprep.subr.bf16.mxu0 0
      %996 = vmatpush1.bf16.msra.mxu0 0
      %997 = vmatprep.subr.bf16.mxu0 0
      %998 = vmatpush1.bf16.msra.mxu0 0
      %999 = vmatprep.mubr.bf16.mxu0 0
      %1000 = vmatmul.mubr.bf16.gmra.mrb[0].mxu0 %v436
      %v1001 = vpop.f32.mrb[0].mxu0
      %v1002 = vadd.f32 %v962, %v1001
      %v1003 = vpop.f32.mrb[0].mxu0
      %v1004 = vpop.f32.mrb[0].mxu0
      %v1005 = vpop.f32.mrb[0].mxu0
      %1006 = vdwg.mxu0
      %s1007 = scalar_lea.vmem %s3, 384
      %v1008 = vld [vmem:[%s1007] sm:$0xf]
      %v1009 = vld [vmem:[%s1007 + $0x4] sm:$0xf]
      %v1010 = vld [vmem:[%s1007 + $0x8] sm:$0xf]
      %v1011 = vld [vmem:[%s1007 + $0xc] sm:$0xf]
      %v1012 = vld [vmem:[%s1007 + $0x10] sm:$0xf]
      %v1013 = vld [vmem:[%s1007 + $0x14] sm:$0xf]
      %v1014 = vld [vmem:[%s1007 + $0x18] sm:$0xf]
      %v1015 = vld [vmem:[%s1007 + $0x1c] sm:$0xf]
      %v1016 = vld [vmem:[%s1007 + $0x20] sm:$0xf]
      %v1017 = vld [vmem:[%s1007 + $0x24] sm:$0xf]
      %v1018 = vld [vmem:[%s1007 + $0x28] sm:$0xf]
      %v1019 = vld [vmem:[%s1007 + $0x2c] sm:$0xf]
      %v1020 = vld [vmem:[%s1007 + $0x30] sm:$0xf]
      %v1021 = vld [vmem:[%s1007 + $0x34] sm:$0xf]
      %v1022 = vld [vmem:[%s1007 + $0x38] sm:$0xf]
      %v1023 = vld [vmem:[%s1007 + $0x3c] sm:$0xf]
      %v1024 = vld [vmem:[%s1007 + $0x40] sm:$0xf]
      %v1025 = vld [vmem:[%s1007 + $0x44] sm:$0xf]
      %v1026 = vld [vmem:[%s1007 + $0x48] sm:$0xf]
      %v1027 = vld [vmem:[%s1007 + $0x4c] sm:$0xf]
      %v1028 = vld [vmem:[%s1007 + $0x50] sm:$0xf]
      %v1029 = vld [vmem:[%s1007 + $0x54] sm:$0xf]
      %v1030 = vld [vmem:[%s1007 + $0x58] sm:$0xf]
      %v1031 = vld [vmem:[%s1007 + $0x5c] sm:$0xf]
      %v1032 = vld [vmem:[%s1007 + $0x60] sm:$0xf]
      %v1033 = vld [vmem:[%s1007 + $0x64] sm:$0xf]
      %v1034 = vld [vmem:[%s1007 + $0x68] sm:$0xf]
      %v1035 = vld [vmem:[%s1007 + $0x6c] sm:$0xf]
      %v1036 = vld [vmem:[%s1007 + $0x70] sm:$0xf]
      %v1037 = vld [vmem:[%s1007 + $0x74] sm:$0xf]
      %v1038 = vld [vmem:[%s1007 + $0x78] sm:$0xf]
      %v1039 = vld [vmem:[%s1007 + $0x7c] sm:$0xf]
      %v1040 = vld [vmem:[%s1007 + $0x80] sm:$0xf]
      %v1041 = vld [vmem:[%s1007 + $0x84] sm:$0xf]
      %v1042 = vld [vmem:[%s1007 + $0x88] sm:$0xf]
      %v1043 = vld [vmem:[%s1007 + $0x8c] sm:$0xf]
      %v1044 = vld [vmem:[%s1007 + $0x90] sm:$0xf]
      %v1045 = vld [vmem:[%s1007 + $0x94] sm:$0xf]
      %v1046 = vld [vmem:[%s1007 + $0x98] sm:$0xf]
      %v1047 = vld [vmem:[%s1007 + $0x9c] sm:$0xf]
      %v1048 = vld [vmem:[%s1007 + $0xa0] sm:$0xf]
      %v1049 = vld [vmem:[%s1007 + $0xa4] sm:$0xf]
      %v1050 = vld [vmem:[%s1007 + $0xa8] sm:$0xf]
      %v1051 = vld [vmem:[%s1007 + $0xac] sm:$0xf]
      %v1052 = vld [vmem:[%s1007 + $0xb0] sm:$0xf]
      %v1053 = vld [vmem:[%s1007 + $0xb4] sm:$0xf]
      %v1054 = vld [vmem:[%s1007 + $0xb8] sm:$0xf]
      %v1055 = vld [vmem:[%s1007 + $0xbc] sm:$0xf]
      %v1056 = vrot.slane %v424, 1
      %v1057 = vrot.slane %v430, 1
      %v1058 = vrot.slane %v436, 1
      %v1110 = vunpack.c.l.b16 %v1008
      %v1111 = vunpack.c.l.b16 %v1009
      %v1112 = vunpack.c.l.b16 %v1010
      %v1113 = vunpack.c.l.b16 %v1011
      %v1114 = vunpack.c.l.b16 %v1012
      %v1115 = vunpack.c.l.b16 %v1013
      %v1116 = vunpack.c.l.b16 %v1014
      %v1117 = vunpack.c.l.b16 %v1015
      %v1118 = vunpack.c.l.b16 %v1016
      %v1119 = vunpack.c.l.b16 %v1017
      %v1120 = vunpack.c.l.b16 %v1018
      %v1121 = vunpack.c.l.b16 %v1019
      %v1122 = vunpack.c.l.b16 %v1020
      %v1123 = vunpack.c.l.b16 %v1021
      %v1124 = vunpack.c.l.b16 %v1022
      %v1125 = vunpack.c.l.b16 %v1023
      %v1126 = vunpack.c.l.b16 %v1024
      %v1127 = vunpack.c.l.b16 %v1025
      %v1128 = vunpack.c.l.b16 %v1026
      %v1129 = vunpack.c.l.b16 %v1027
      %v1130 = vunpack.c.l.b16 %v1028
      %v1131 = vunpack.c.l.b16 %v1029
      %v1132 = vunpack.c.l.b16 %v1030
      %v1133 = vunpack.c.l.b16 %v1031
      %v1134 = vunpack.c.l.b16 %v1032
      %v1135 = vunpack.c.l.b16 %v1033
      %v1136 = vunpack.c.l.b16 %v1034
      %v1137 = vunpack.c.l.b16 %v1035
      %v1138 = vunpack.c.l.b16 %v1036
      %v1139 = vunpack.c.l.b16 %v1037
      %v1140 = vunpack.c.l.b16 %v1038
      %v1141 = vunpack.c.l.b16 %v1039
      %v1142 = vunpack.c.l.b16 %v1040
      %v1143 = vunpack.c.l.b16 %v1041
      %v1144 = vunpack.c.l.b16 %v1042
      %v1145 = vunpack.c.l.b16 %v1043
      %v1146 = vunpack.c.l.b16 %v1044
      %v1147 = vunpack.c.l.b16 %v1045
      %v1148 = vunpack.c.l.b16 %v1046
      %v1149 = vunpack.c.l.b16 %v1047
      %v1150 = vunpack.c.l.b16 %v1048
      %v1151 = vunpack.c.l.b16 %v1049
      %v1152 = vunpack.c.l.b16 %v1050
      %v1153 = vunpack.c.l.b16 %v1051
      %v1154 = vunpack.c.l.b16 %v1052
      %v1155 = vunpack.c.l.b16 %v1053
      %v1156 = vunpack.c.l.b16 %v1054
      %v1157 = vunpack.c.l.b16 %v1055
      %v1158 = vpack.c.b16 %v1111, %v1110
      %v1159 = vpack.c.b16 %v1113, %v1112
      %v1160 = vpack.c.b16 %v1115, %v1114
      %v1161 = vpack.c.b16 %v1117, %v1116
      %v1162 = vpack.c.b16 %v1119, %v1118
      %v1163 = vpack.c.b16 %v1121, %v1120
      %v1164 = vpack.c.b16 %v1123, %v1122
      %v1165 = vpack.c.b16 %v1125, %v1124
      %v1166 = vpack.c.b16 %v1127, %v1126
      %v1167 = vpack.c.b16 %v1129, %v1128
      %v1168 = vpack.c.b16 %v1131, %v1130
      %v1169 = vpack.c.b16 %v1133, %v1132
      %v1170 = vpack.c.b16 %v1135, %v1134
      %v1171 = vpack.c.b16 %v1137, %v1136
      %v1172 = vpack.c.b16 %v1139, %v1138
      %v1173 = vpack.c.b16 %v1141, %v1140
      %v1174 = vpack.c.b16 %v1143, %v1142
      %v1175 = vpack.c.b16 %v1145, %v1144
      %v1176 = vpack.c.b16 %v1147, %v1146
      %v1177 = vpack.c.b16 %v1149, %v1148
      %v1178 = vpack.c.b16 %v1151, %v1150
      %v1179 = vpack.c.b16 %v1153, %v1152
      %v1180 = vpack.c.b16 %v1155, %v1154
      %v1181 = vpack.c.b16 %v1157, %v1156
      %1206 = vmatprep.subr.bf16.mxu0 0
      %1207 = vmatpush1.bf16.msra.mxu0 %v1158
      %1208 = vmatprep.subr.bf16.mxu0 0
      %1209 = vmatpush1.bf16.msra.mxu0 %v1159
      %1210 = vmatprep.subr.bf16.mxu0 0
      %1211 = vmatpush1.bf16.msra.mxu0 %v1160
      %1212 = vmatprep.subr.bf16.mxu0 0
      %1213 = vmatpush1.bf16.msra.mxu0 %v1161
      %1214 = vmatprep.subr.bf16.mxu0 0
      %1215 = vmatpush1.bf16.msra.mxu0 %v1162
      %1216 = vmatprep.subr.bf16.mxu0 0
      %1217 = vmatpush1.bf16.msra.mxu0 %v1163
      %1218 = vmatprep.subr.bf16.mxu0 0
      %1219 = vmatpush1.bf16.msra.mxu0 %v1164
      %1220 = vmatprep.subr.bf16.mxu0 0
      %1221 = vmatpush1.bf16.msra.mxu0 %v1165
      %1222 = vmatprep.subr.bf16.mxu0 0
      %1223 = vmatpush1.bf16.msra.mxu0 %v1166
      %1224 = vmatprep.subr.bf16.mxu0 0
      %1225 = vmatpush1.bf16.msra.mxu0 %v1167
      %1226 = vmatprep.subr.bf16.mxu0 0
      %1227 = vmatpush1.bf16.msra.mxu0 %v1168
      %1228 = vmatprep.subr.bf16.mxu0 0
      %1229 = vmatpush1.bf16.msra.mxu0 %v1169
      %1230 = vmatprep.subr.bf16.mxu0 0
      %1231 = vmatpush1.bf16.msra.mxu0 %v1170
      %1232 = vmatprep.subr.bf16.mxu0 0
      %1233 = vmatpush1.bf16.msra.mxu0 %v1171
      %1234 = vmatprep.subr.bf16.mxu0 0
      %1235 = vmatpush1.bf16.msra.mxu0 %v1172
      %1236 = vmatprep.subr.bf16.mxu0 0
      %1237 = vmatpush1.bf16.msra.mxu0 %v1173
      %1238 = vmatprep.mubr.bf16.mxu0 %v1057
      %1239 = vmatmul.mubr.bf16.gmra.mrb[0].mxu0 %v1056
      %v1240 = vpop.f32.mrb[0].mxu0
      %v1241 = vadd.f32 0.0, %v1240
      %v1242 = vpop.f32.mrb[0].mxu0
      %v1243 = vpop.f32.mrb[0].mxu0
      %v1244 = vpop.f32.mrb[0].mxu0
      %1245 = vdwg.mxu0
      %1246 = vmatprep.subr.bf16.mxu0 0
      %1247 = vmatpush1.bf16.msra.mxu0 %v1174
      %1248 = vmatprep.subr.bf16.mxu0 0
      %1249 = vmatpush1.bf16.msra.mxu0 %v1175
      %1250 = vmatprep.subr.bf16.mxu0 0
      %1251 = vmatpush1.bf16.msra.mxu0 %v1176
      %1252 = vmatprep.subr.bf16.mxu0 0
      %1253 = vmatpush1.bf16.msra.mxu0 %v1177
      %1254 = vmatprep.subr.bf16.mxu0 0
      %1255 = vmatpush1.bf16.msra.mxu0 %v1178
      %1256 = vmatprep.subr.bf16.mxu0 0
      %1257 = vmatpush1.bf16.msra.mxu0 %v1179
      %1258 = vmatprep.subr.bf16.mxu0 0
      %1259 = vmatpush1.bf16.msra.mxu0 %v1180
      %1260 = vmatprep.subr.bf16.mxu0 0
      %1261 = vmatpush1.bf16.msra.mxu0 %v1181
      %1262 = vmatprep.subr.bf16.mxu0 0
      %1263 = vmatpush1.bf16.msra.mxu0 0
      %1264 = vmatprep.subr.bf16.mxu0 0
      %1265 = vmatpush1.bf16.msra.mxu0 0
      %1266 = vmatprep.subr.bf16.mxu0 0
      %1267 = vmatpush1.bf16.msra.mxu0 0
      %1268 = vmatprep.subr.bf16.mxu0 0
      %1269 = vmatpush1.bf16.msra.mxu0 0
      %1270 = vmatprep.subr.bf16.mxu0 0
      %1271 = vmatpush1.bf16.msra.mxu0 0
      %1272 = vmatprep.subr.bf16.mxu0 0
      %1273 = vmatpush1.bf16.msra.mxu0 0
      %1274 = vmatprep.subr.bf16.mxu0 0
      %1275 = vmatpush1.bf16.msra.mxu0 0
      %1276 = vmatprep.subr.bf16.mxu0 0
      %1277 = vmatpush1.bf16.msra.mxu0 0
      %1278 = vmatprep.mubr.bf16.mxu0 0
      %1279 = vmatmul.mubr.bf16.gmra.mrb[0].mxu0 %v1058
      %v1280 = vpop.f32.mrb[0].mxu0
      %v1281 = vadd.f32 %v1241, %v1280
      %v1282 = vpop.f32.mrb[0].mxu0
      %v1283 = vpop.f32.mrb[0].mxu0
      %v1284 = vpop.f32.mrb[0].mxu0
      %1285 = vdwg.mxu0
      %v1286 = vadd.f32 %v1002, %v1281
      %v1287 = vpack.c.bf16 %v1286, %v1286
      %1288 = vst [vmem:[%s368] sm:$0xf] %v1287
      %v1289 = vrot.slane %v1286, 4
      %v1290 = vadd.f32 %v1286, %v1289
      %v1291 = vrot.slane %v1290, 2
      %v1292 = vadd.f32 %v1290, %v1291
      %v1293 = vrot.slane %v1292, 1
      %v1294 = vadd.f32 %v1292, %v1293
      %v1295 = vmul.f32 %v1286, %v1286
      %v1296 = vrot.slane %v1295, 4
      %v1297 = vadd.f32 %v1295, %v1296
      %v1298 = vrot.slane %v1297, 2
      %v1299 = vadd.f32 %v1297, %v1298
      %v1300 = vrot.slane %v1299, 1
      %v1301 = vadd.f32 %v1299, %v1300
      %vm1302 = vcmask 1040384
      %v1303 = vsel %vm1302, %v1294, %v1301
      %1304 = vst [vmem:[%s376] sm:$0x3] %v1303
      %p1305 = scmp.lt.s32.totalorder %s21, 1
      %s1306 = scalar_select %p1305, %s21, 1
      %p1307 = scmp.lt.s32.totalorder %s22, 7
      %s1308 = scalar_select %p1307, %s22, 7
      %s1309 = smul.addr %s1306, 8
      %s1310 = sadd.s32 %s1308, %s1309
      %s1311 = smul.addr %s1310, 4
      %s1312 = scalar_lea.vmem %s4, %s1311
      %p1313 = scmp.lt.s32.totalorder %s21, 1
      %s1314 = scalar_select %p1313, %s21, 1
      %p1315 = scmp.lt.s32.totalorder %s22, 7
      %s1316 = scalar_select %p1315, %s22, 7
      %s1317 = smul.addr %s1314, 8
      %s1318 = sadd.s32 %s1316, %s1317
      %s1319 = smul.addr %s1318, 2
      %s1320 = scalar_lea.vmem %s5, %s1319
      // Predicated region
      $region37: #{down_forward.4} parent=35 // pred_check
        %p1321 = pneg %p158
      $region38: #{down_forward.4} parent=35 // pred_check_branch
        %1323 = sbr.rel (%p1321) target = $region40
      $region39: #{down_forward.4} parent=35 // pred_region
        _
      $region40: #{down_forward.4} parent=35 // pred_fallthru
        _
      // Predicated region
      $region41: #{down_forward.4} parent=35 // pred_check
        %p1324 = pneg %p186
      $region42: #{down_forward.4} parent=35 // pred_check_branch
        %1326 = sbr.rel (%p1324) target = $region44
      $region43: #{down_forward.4} parent=35 // pred_region
        _
      $region44: #{down_forward.4} parent=35 // pred_fallthru
        _
    $region36: #{down_forward.4} parent=5 // pred_fallthru
      _
    %p1327 = scmp.le.s32.totalorder 2, %s12
    // Predicated region
    $region45: #{down_forward.4} parent=5 // pred_check
      %p1328 = pneg %p1327
    $region46: #{down_forward.4} parent=5 // pred_check_branch
      %1330 = sbr.rel (%p1328) target = $region48
    $region47: #{down_forward.4} parent=5 // pred_region
      %s1331 = ssub.s32 %s12, 2
      // Predicated region
      $region49: #{down_forward.4} parent=47 // pred_check
        %p1332 = pneg %p164
      $region50: #{down_forward.4} parent=47 // pred_check_branch
        %1334 = sbr.rel (%p1332) target = $region52
      $region51: #{down_forward.4} parent=47 // pred_region
        %p1335 = scmp.lt.s32.totalorder %s23, 1
        %s1336 = scalar_select %p1335, %s23, 1
        %p1337 = scmp.lt.s32.totalorder %s24, 7
        %s1338 = scalar_select %p1337, %s24, 7
        %s1339 = smul.addr %s1336, 8
        %s1340 = sadd.s32 %s1338, %s1339
        %s1341 = smul.addr %s1340, 4
        %s1342 = scalar_lea.vmem %s4, %s1341
      $region52: #{down_forward.4} parent=47 // pred_fallthru
        _
      // Predicated region
      $region53: #{down_forward.4} parent=47 // pred_check
        %p1343 = pneg %p192
      $region54: #{down_forward.4} parent=47 // pred_check_branch
        %1345 = sbr.rel (%p1343) target = $region56
      $region55: #{down_forward.4} parent=47 // pred_region
        %p1346 = scmp.lt.s32.totalorder %s23, 1
        %s1347 = scalar_select %p1346, %s23, 1
        %p1348 = scmp.lt.s32.totalorder %s24, 7
        %s1349 = scalar_select %p1348, %s24, 7
        %s1350 = smul.addr %s1347, 8
        %s1351 = sadd.s32 %s1349, %s1350
        %s1352 = smul.addr %s1351, 2
        %s1353 = scalar_lea.vmem %s5, %s1352
      $region56: #{down_forward.4} parent=47 // pred_fallthru
        _
    $region48: #{down_forward.4} parent=5 // pred_fallthru
      _
  $region6: #{down_forward.4} parent=0 // loop_footer
    %s16 = sadd.s32 1, %s12
  $region7: #{down_forward.4} parent=0 // loop_footer_branch
    %11 = sbr.rel target = $region3
  $region8: #{down_forward.4} parent=0 // loop_exit
    _

// kernel: down_forward.6
$region0: #{down_forward.6}
  #allocation0 [shape = 'u32[]', space=smem, size = 0x4, offset = 0x4, fixed_abs, tag = 'smem constant byte address 0x4 - core index']
  #allocation1 [shape = 'u32[144,128]{1,0:T(1,128)}', space=vmem, size = 0x12000, scoped, tag = 'internal scratch']
  %s0 = inlined_call_operand.vmem [shape: bf16[2,10,10,128], index: 0, kind: input, shape index: {}, may-alias: {0,1,2}]
  %s1 = inlined_call_operand.vmem [shape: bf16[2,10,10,128], index: 1, kind: input, shape index: {}, may-alias: {0,1,2}]
  %s2 = inlined_call_operand.vmem [shape: bf16[2,10,10,128], index: 2, kind: input, shape index: {}, may-alias: {0,1,2}]
  %s3 = inlined_call_operand.vmem [shape: bf16[3,384,128], index: 3, kind: input, shape index: {}]
  %s4 = inlined_call_operand.vmem [shape: bf16[2,8,8,128], index: 4, kind: output, shape index: {0}]
  %s5 = inlined_call_operand.vmem [shape: f32[2,8,2,128], index: 5, kind: output, shape index: {1}]
  %6 = xla_tuple %s4, %s5
  %s7 = sld [smem:[#allocation0]]
  $region57: #{down_forward.6} parent=0
    _
  %s9 = ssub.s32 1, %s7
  %s10 = scalar_select 0, %s9, %s7
  loop: start=0, step=1, limit=18
  $region2: #{down_forward.6} parent=0 // loop_pre_header
    _
  $region3: #{down_forward.6} parent=0 // loop_header
    %s12 = sphi 0, %s16
    %p13 = scmp.ge.s32.totalorder %s12, 18
    %s19 = sphi 0, %s31
    %s20 = sphi 0, %s27
    %s21 = sphi 0, %s19
    %s22 = sphi 0, %s20
    %s23 = sphi 0, %s21
    %s24 = sphi 0, %s22
    %s36 = sphi 0, %s38
    %s39 = sphi 0, %s36
    %s40 = sphi 0, %s39
    %s56 = sphi 0, %s40
    %s66 = sphi 0, %s68
    %s69 = sphi 0, %s66
    %s70 = sphi 0, %s69
    %s86 = sphi 0, %s70
    %s96 = sphi 0, %s98
    %s99 = sphi 0, %s96
    %s100 = sphi 0, %s99
    %s116 = sphi 0, %s100
    %s120 = sphi 0, %s120
    %s122 = sphi 0, %s120
    %s123 = sphi 0, %s122
    %s137 = sphi 0, %s123
    %s145 = sphi 0, %s147
    %s148 = sphi 0, %s145
    %s149 = sphi 0, %s148
    %s165 = sphi 0, %s149
    %s173 = sphi 0, %s175
    %s176 = sphi 0, %s173
    %s177 = sphi 0, %s176
    %s193 = sphi 0, %s177
  $region4: #{down_forward.6} parent=0 // loop_header_branch
    %15 = sbr.rel (%p13) target = $region8
  $region5: #{down_forward.6} parent=0 // loop_body
    %s17 = ssub.s32 %s12, 1
    %s18 = ssub.s32 %s12, 2
    %s25 = sadd.s32 1, %s20
    %p26 = scmp.ge.s32.totalorder %s25, 8
    %s27 = scalar_select %p26, 0, %s25
    %s28 = sadd.s32 1, %s19
    %s29 = scalar_select %p26, %s28, %s19
    %p30 = scmp.ge.s32.totalorder %s29, 2
    %s31 = scalar_select %p30, 0, %s29
    %s32 = ssub.s32 %s19, %s31
    %s33 = ssub.s32 %s20, %s27
    %s34 = sor.u32 %s32, %s33
    %p35 = scmp.eq.s32.totalorder %s34, 0
    %s37 = sadd.s32 %s36, 1
    %s38 = scalar_select %p35, %s36, %s37
    %p41 = pneg %p35
    %p42 = scmp.eq.s32.totalorder %s12, 15
    %p43 = por %p41, %p42
    %p44 = scmp.ne.s32.totalorder %s36, %s39
    %p45 = scmp.eq.s32.totalorder %s12, 0
    %p46 = por %p44, %p45
    %p47 = scmp.ne.s32.totalorder %s36, %s39
    %p48 = scmp.eq.s32.totalorder %s17, 15
    %p49 = por %p47, %p48
    %p50 = scmp.ne.s32.totalorder %s39, %s40
    %p51 = scmp.eq.s32.totalorder %s17, 0
    %p52 = por %p50, %p51
    %p53 = scmp.ne.s32.totalorder %s39, %s40
    %p54 = scmp.eq.s32.totalorder %s18, 15
    %p55 = por %p53, %p54
    %p57 = scmp.ne.s32.totalorder %s40, %s56
    %p58 = scmp.eq.s32.totalorder %s18, 0
    %p59 = por %p57, %p58
    %s60 = sadd.s32 %s20, 1
    %s61 = sadd.s32 %s27, 1
    %s62 = ssub.s32 %s19, %s31
    %s63 = ssub.s32 %s60, %s61
    %s64 = sor.u32 %s62, %s63
    %p65 = scmp.eq.s32.totalorder %s64, 0
    %s67 = sadd.s32 %s66, 1
    %s68 = scalar_select %p65, %s66, %s67
    %p71 = pneg %p65
    %p72 = scmp.eq.s32.totalorder %s12, 15
    %p73 = por %p71, %p72
    %p74 = scmp.ne.s32.totalorder %s66, %s69
    %p75 = scmp.eq.s32.totalorder %s12, 0
    %p76 = por %p74, %p75
    %p77 = scmp.ne.s32.totalorder %s66, %s69
    %p78 = scmp.eq.s32.totalorder %s17, 15
    %p79 = por %p77, %p78
    %p80 = scmp.ne.s32.totalorder %s69, %s70
    %p81 = scmp.eq.s32.totalorder %s17, 0
    %p82 = por %p80, %p81
    %p83 = scmp.ne.s32.totalorder %s69, %s70
    %p84 = scmp.eq.s32.totalorder %s18, 15
    %p85 = por %p83, %p84
    %p87 = scmp.ne.s32.totalorder %s70, %s86
    %p88 = scmp.eq.s32.totalorder %s18, 0
    %p89 = por %p87, %p88
    %s90 = sadd.s32 %s20, 2
    %s91 = sadd.s32 %s27, 2
    %s92 = ssub.s32 %s19, %s31
    %s93 = ssub.s32 %s90, %s91
    %s94 = sor.u32 %s92, %s93
    %p95 = scmp.eq.s32.totalorder %s94, 0
    %s97 = sadd.s32 %s96, 1
    %s98 = scalar_select %p95, %s96, %s97
    %p101 = pneg %p95
    %p102 = scmp.eq.s32.totalorder %s12, 15
    %p103 = por %p101, %p102
    %p104 = scmp.ne.s32.totalorder %s96, %s99
    %p105 = scmp.eq.s32.totalorder %s12, 0
    %p106 = por %p104, %p105
    %p107 = scmp.ne.s32.totalorder %s96, %s99
    %p108 = scmp.eq.s32.totalorder %s17, 15
    %p109 = por %p107, %p108
    %p110 = scmp.ne.s32.totalorder %s99, %s100
    %p111 = scmp.eq.s32.totalorder %s17, 0
    %p112 = por %p110, %p111
    %p113 = scmp.ne.s32.totalorder %s99, %s100
    %p114 = scmp.eq.s32.totalorder %s18, 15
    %p115 = por %p113, %p114
    %p117 = scmp.ne.s32.totalorder %s100, %s116
    %p118 = scmp.eq.s32.totalorder %s18, 0
    %p119 = por %p117, %p118
    %s121 = sadd.s32 %s120, 1
    %p124 = scmp.eq.s32.totalorder %s12, 15
    %p125 = scmp.ne.s32.totalorder %s120, %s122
    %p126 = scmp.eq.s32.totalorder %s12, 0
    %p127 = por %p125, %p126
    %p128 = scmp.ne.s32.totalorder %s120, %s122
    %p129 = scmp.eq.s32.totalorder %s17, 15
    %p130 = por %p128, %p129
    %p131 = scmp.ne.s32.totalorder %s122, %s123
    %p132 = scmp.eq.s32.totalorder %s17, 0
    %p133 = por %p131, %p132
    %p134 = scmp.ne.s32.totalorder %s122, %s123
    %p135 = scmp.eq.s32.totalorder %s18, 15
    %p136 = por %p134, %p135
    %p138 = scmp.ne.s32.totalorder %s123, %s137
    %p139 = scmp.eq.s32.totalorder %s18, 0
    %p140 = por %p138, %p139
    %s141 = ssub.s32 %s19, %s31
    %s142 = ssub.s32 %s20, %s27
    %s143 = sor.u32 %s141, %s142
    %p144 = scmp.eq.s32.totalorder %s143, 0
    %s146 = sadd.s32 %s145, 1
    %s147 = scalar_select %p144, %s145, %s146
    %p150 = pneg %p144
    %p151 = scmp.eq.s32.totalorder %s12, 15
    %p152 = por %p150, %p151
    %p153 = scmp.ne.s32.totalorder %s145, %s148
    %p154 = scmp.eq.s32.totalorder %s12, 0
    %p155 = por %p153, %p154
    %p156 = scmp.ne.s32.totalorder %s145, %s148
    %p157 = scmp.eq.s32.totalorder %s17, 15
    %p158 = por %p156, %p157
    %p159 = scmp.ne.s32.totalorder %s148, %s149
    %p160 = scmp.eq.s32.totalorder %s17, 0
    %p161 = por %p159, %p160
    %p162 = scmp.ne.s32.totalorder %s148, %s149
    %p163 = scmp.eq.s32.totalorder %s18, 15
    %p164 = por %p162, %p163
    %p166 = scmp.ne.s32.totalorder %s149, %s165
    %p167 = scmp.eq.s32.totalorder %s18, 0
    %p168 = por %p166, %p167
    %s169 = ssub.s32 %s19, %s31
    %s170 = ssub.s32 %s20, %s27
    %s171 = sor.u32 %s169, %s170
    %p172 = scmp.eq.s32.totalorder %s171, 0
    %s174 = sadd.s32 %s173, 1
    %s175 = scalar_select %p172, %s173, %s174
    %p178 = pneg %p172
    %p179 = scmp.eq.s32.totalorder %s12, 15
    %p180 = por %p178, %p179
    %p181 = scmp.ne.s32.totalorder %s173, %s176
    %p182 = scmp.eq.s32.totalorder %s12, 0
    %p183 = por %p181, %p182
    %p184 = scmp.ne.s32.totalorder %s173, %s176
    %p185 = scmp.eq.s32.totalorder %s17, 15
    %p186 = por %p184, %p185
    %p187 = scmp.ne.s32.totalorder %s176, %s177
    %p188 = scmp.eq.s32.totalorder %s17, 0
    %p189 = por %p187, %p188
    %p190 = scmp.ne.s32.totalorder %s176, %s177
    %p191 = scmp.eq.s32.totalorder %s18, 15
    %p192 = por %p190, %p191
    %p194 = scmp.ne.s32.totalorder %s177, %s193
    %p195 = scmp.eq.s32.totalorder %s18, 0
    %p196 = por %p194, %p195
    %p197 = scmp.le.s32.totalorder 1, %s12
    %p198 = scmp.lt.s32.totalorder %s12, 17
    %p199 = pnand %p197, %p198
    %p200 = pneg %p199
    // Predicated region
    $region9: #{down_forward.6} parent=5 // pred_check
      _
    $region10: #{down_forward.6} parent=5 // pred_check_branch
      %202 = sbr.rel (%p199) target = $region12
    $region11: #{down_forward.6} parent=5 // pred_region
      %s203 = ssub.s32 %s12, 1
      // Predicated region
      $region13: #{down_forward.6} parent=11 // pred_check
        %p204 = pneg %p133
      $region14: #{down_forward.6} parent=11 // pred_check_branch
        %206 = sbr.rel (%p204) target = $region16
      $region15: #{down_forward.6} parent=11 // pred_region
        _
      $region16: #{down_forward.6} parent=11 // pred_fallthru
        _
    $region12: #{down_forward.6} parent=5 // pred_fallthru
      _
    %p207 = scmp.lt.s32.totalorder %s12, 16
    // Predicated region
    $region17: #{down_forward.6} parent=5 // pred_check
      %p208 = pneg %p207
    $region18: #{down_forward.6} parent=5 // pred_check_branch
      %210 = sbr.rel (%p208) target = $region20
    $region19: #{down_forward.6} parent=5 // pred_region
      // Predicated region
      $region21: #{down_forward.6} parent=19 // pred_check
        %p211 = pneg %p46
      $region22: #{down_forward.6} parent=19 // pred_check_branch
        %213 = sbr.rel (%p211) target = $region24
      $region23: #{down_forward.6} parent=19 // pred_region
        %p214 = scmp.lt.s32.totalorder %s19, 1
        %s215 = scalar_select %p214, %s19, 1
        %p216 = scmp.lt.s32.totalorder %s20, 9
        %s217 = scalar_select %p216, %s20, 9
        %s218 = smul.addr %s217, 2
        %s219 = smul.addr %s215, 20
        %s220 = sadd.s32 %s218, %s219
        %s221 = smul.addr %s220, 4
        %s222 = scalar_lea.vmem %s0, %s221
      $region24: #{down_forward.6} parent=19 // pred_fallthru
        _
      // Predicated region
      $region25: #{down_forward.6} parent=19 // pred_check
        %p223 = pneg %p76
      $region26: #{down_forward.6} parent=19 // pred_check_branch
        %225 = sbr.rel (%p223) target = $region28
      $region27: #{down_forward.6} parent=19 // pred_region
        %s226 = sadd.s32 %s20, 1
        %p227 = scmp.lt.s32.totalorder %s19, 1
        %s228 = scalar_select %p227, %s19, 1
        %p229 = scmp.lt.s32.totalorder %s226, 9
        %s230 = scalar_select %p229, %s226, 9
        %s231 = smul.addr %s230, 2
        %s232 = smul.addr %s228, 20
        %s233 = sadd.s32 %s231, %s232
        %s234 = smul.addr %s233, 4
        %s235 = scalar_lea.vmem %s1, %s234
        %s236 = sadd.s32 %s20, 1
      $region28: #{down_forward.6} parent=19 // pred_fallthru
        _
      // Predicated region
      $region29: #{down_forward.6} parent=19 // pred_check
        %p237 = pneg %p106
      $region30: #{down_forward.6} parent=19 // pred_check_branch
        %239 = sbr.rel (%p237) target = $region32
      $region31: #{down_forward.6} parent=19 // pred_region
        %s240 = sadd.s32 %s20, 2
        %p241 = scmp.lt.s32.totalorder %s19, 1
        %s242 = scalar_select %p241, %s19, 1
        %p243 = scmp.lt.s32.totalorder %s240, 9
        %s244 = scalar_select %p243, %s240, 9
        %s245 = smul.addr %s244, 2
        %s246 = smul.addr %s242, 20
        %s247 = sadd.s32 %s245, %s246
        %s248 = smul.addr %s247, 4
        %s249 = scalar_lea.vmem %s2, %s248
        %s250 = sadd.s32 %s20, 2
      $region32: #{down_forward.6} parent=19 // pred_fallthru
        _
    $region20: #{down_forward.6} parent=5 // pred_fallthru
      _
    %p251 = scmp.le.s32.totalorder 1, %s12
    %p252 = scmp.lt.s32.totalorder %s12, 17
    %p253 = pnand %p251, %p252
    %p254 = pneg %p253
    // Predicated region
    $region33: #{down_forward.6} parent=5 // pred_check
      _
    $region34: #{down_forward.6} parent=5 // pred_check_branch
      %256 = sbr.rel (%p253) target = $region36
    $region35: #{down_forward.6} parent=5 // pred_region
      %s257 = ssub.s32 %s12, 1
      %p258 = scmp.lt.s32.totalorder %s21, 1
      %s259 = scalar_select %p258, %s21, 1
      %p260 = scmp.lt.s32.totalorder %s22, 9
      %s261 = scalar_select %p260, %s22, 9
      %s262 = smul.addr %s261, 2
      %s263 = smul.addr %s259, 20
      %s264 = sadd.s32 %s262, %s263
      %s265 = smul.addr %s264, 4
      %s266 = scalar_lea.vmem %s0, %s265
      %p267 = pneg %p52
      %p268 = pneg %p49
      %s269 = sadd.s32 %s22, 1
      %p270 = scmp.lt.s32.totalorder %s21, 1
      %s271 = scalar_select %p270, %s21, 1
      %p272 = scmp.lt.s32.totalorder %s269, 9
      %s273 = scalar_select %p272, %s269, 9
      %s274 = smul.addr %s273, 2
      %s275 = smul.addr %s271, 20
      %s276 = sadd.s32 %s274, %s275
      %s277 = smul.addr %s276, 4
      %s278 = scalar_lea.vmem %s1, %s277
      %p279 = pneg %p82
      %p280 = pneg %p79
      %s281 = sadd.s32 %s22, 2
      %p282 = scmp.lt.s32.totalorder %s21, 1
      %s283 = scalar_select %p282, %s21, 1
      %p284 = scmp.lt.s32.totalorder %s281, 9
      %s285 = scalar_select %p284, %s281, 9
      %s286 = smul.addr %s285, 2
      %s287 = smul.addr %s283, 20
      %s288 = sadd.s32 %s286, %s287
      %s289 = smul.addr %s288, 4
      %s290 = scalar_lea.vmem %s2, %s289
      %p291 = pneg %p112
      %p292 = pneg %p109
      %p293 = pneg %p133
      %p294 = pneg %p130
      %p295 = pneg %p161
      %p296 = pneg %p158
      %p297 = scmp.lt.s32.totalorder %s21, 1
      %s298 = scalar_select %p297, %s21, 1
      %p299 = scmp.lt.s32.totalorder %s22, 7
      %s300 = scalar_select %p299, %s22, 7
      %s301 = smul.addr %s298, 8
      %s302 = sadd.s32 %s300, %s301
      %s303 = smul.addr %s302, 4
      %s304 = scalar_lea.vmem %s4, %s303
      %p305 = pneg %p189
      %p306 = pneg %p186
      %p307 = scmp.lt.s32.totalorder %s21, 1
      %s308 = scalar_select %p307, %s21, 1
      %p309 = scmp.lt.s32.totalorder %s22, 7
      %s310 = scalar_select %p309, %s22, 7
      %s311 = smul.addr %s308, 8
      %s312 = sadd.s32 %s310, %s311
      %s313 = smul.addr %s312, 2
      %s314 = scalar_lea.vmem %s5, %s313
      %p315 = scmp.lt.s32.totalorder %s21, 1
      %s316 = scalar_select %p315, %s21, 1
      %p317 = scmp.lt.s32.totalorder %s22, 9
      %s318 = scalar_select %p317, %s22, 9
      %s319 = smul.addr %s318, 2
      %s320 = smul.addr %s316, 20
      %s321 = sadd.s32 %s319, %s320
      %s322 = smul.addr %s321, 4
      %s323 = scalar_lea.vmem %s0, %s322
      %s324 = sadd.s32 %s22, 1
      %p325 = scmp.lt.s32.totalorder %s21, 1
      %s326 = scalar_select %p325, %s21, 1
      %p327 = scmp.lt.s32.totalorder %s324, 9
      %s328 = scalar_select %p327, %s324, 9
      %s329 = smul.addr %s328, 2
      %s330 = smul.addr %s326, 20
      %s331 = sadd.s32 %s329, %s330
      %s332 = smul.addr %s331, 4
      %s333 = scalar_lea.vmem %s1, %s332
      %s334 = sadd.s32 %s22, 1
      %s335 = sadd.s32 %s22, 2
      %p336 = scmp.lt.s32.totalorder %s21, 1
      %s337 = scalar_select %p336, %s21, 1
      %p338 = scmp.lt.s32.totalorder %s335, 9
      %s339 = scalar_select %p338, %s335, 9
      %s340 = smul.addr %s339, 2
      %s341 = smul.addr %s337, 20
      %s342 = sadd.s32 %s340, %s341
      %s343 = smul.addr %s342, 4
      %s344 = scalar_lea.vmem %s2, %s343
      %s345 = sadd.s32 %s22, 2
      %p346 = scmp.lt.s32.totalorder %s21, 1
      %s347 = scalar_select %p346, %s21, 1
      %p348 = scmp.lt.s32.totalorder %s22, 7
      %s349 = scalar_select %p348, %s22, 7
      %s350 = smul.addr %s347, 8
      %s351 = sadd.s32 %s349, %s350
      %s352 = smul.addr %s351, 4
      %s353 = scalar_lea.vmem %s4, %s352
      %p354 = scmp.lt.s32.totalorder %s21, 1
      %s355 = scalar_select %p354, %s21, 1
      %p356 = scmp.lt.s32.totalorder %s22, 7
      %s357 = scalar_select %p356, %s22, 7
      %s358 = smul.addr %s355, 8
      %s359 = sadd.s32 %s357, %s358
      %s360 = smul.addr %s359, 2
      %s361 = scalar_lea.vmem %s5, %s360
      %v363 = vld [vmem:[%s323] sm:$0xf]
      %v364 = vld [vmem:[%s323 + $0x4] sm:$0x1]
      %v365 = vld [vmem:[%s333] sm:$0xf]
      %v366 = vld [vmem:[%s333 + $0x4] sm:$0x1]
      %v367 = vld [vmem:[%s344] sm:$0xf]
      %v368 = vld [vmem:[%s344 + $0x4] sm:$0x1]
      %v371 = vunpack.c.l.b16 %v363
      %v372 = vunpack.c.l.b16 %v364
      %v373 = vpack.c.b16 %v372, %v371
      %v377 = vunpack.c.l.b16 %v365
      %v378 = vunpack.c.l.b16 %v366
      %v379 = vpack.c.b16 %v378, %v377
      %v383 = vunpack.c.l.b16 %v367
      %v384 = vunpack.c.l.b16 %v368
      %v385 = vpack.c.b16 %v384, %v383
      %v387 = vld [vmem:[%s3] sm:$0xf]
      %v388 = vld [vmem:[%s3 + $0x4] sm:$0xf]
      %v389 = vld [vmem:[%s3 + $0x8] sm:$0xf]
      %v390 = vld [vmem:[%s3 + $0xc] sm:$0xf]
      %v391 = vld [vmem:[%s3 + $0x10] sm:$0xf]
      %v392 = vld [vmem:[%s3 + $0x14] sm:$0xf]
      %v393 = vld [vmem:[%s3 + $0x18] sm:$0xf]
      %v394 = vld [vmem:[%s3 + $0x1c] sm:$0xf]
      %v395 = vld [vmem:[%s3 + $0x20] sm:$0xf]
      %v396 = vld [vmem:[%s3 + $0x24] sm:$0xf]
      %v397 = vld [vmem:[%s3 + $0x28] sm:$0xf]
      %v398 = vld [vmem:[%s3 + $0x2c] sm:$0xf]
      %v399 = vld [vmem:[%s3 + $0x30] sm:$0xf]
      %v400 = vld [vmem:[%s3 + $0x34] sm:$0xf]
      %v401 = vld [vmem:[%s3 + $0x38] sm:$0xf]
      %v402 = vld [vmem:[%s3 + $0x3c] sm:$0xf]
      %v403 = vld [vmem:[%s3 + $0x40] sm:$0xf]
      %v404 = vld [vmem:[%s3 + $0x44] sm:$0xf]
      %v405 = vld [vmem:[%s3 + $0x48] sm:$0xf]
      %v406 = vld [vmem:[%s3 + $0x4c] sm:$0xf]
      %v407 = vld [vmem:[%s3 + $0x50] sm:$0xf]
      %v408 = vld [vmem:[%s3 + $0x54] sm:$0xf]
      %v409 = vld [vmem:[%s3 + $0x58] sm:$0xf]
      %v410 = vld [vmem:[%s3 + $0x5c] sm:$0xf]
      %v411 = vld [vmem:[%s3 + $0x60] sm:$0xf]
      %v412 = vld [vmem:[%s3 + $0x64] sm:$0xf]
      %v413 = vld [vmem:[%s3 + $0x68] sm:$0xf]
      %v414 = vld [vmem:[%s3 + $0x6c] sm:$0xf]
      %v415 = vld [vmem:[%s3 + $0x70] sm:$0xf]
      %v416 = vld [vmem:[%s3 + $0x74] sm:$0xf]
      %v417 = vld [vmem:[%s3 + $0x78] sm:$0xf]
      %v418 = vld [vmem:[%s3 + $0x7c] sm:$0xf]
      %v419 = vld [vmem:[%s3 + $0x80] sm:$0xf]
      %v420 = vld [vmem:[%s3 + $0x84] sm:$0xf]
      %v421 = vld [vmem:[%s3 + $0x88] sm:$0xf]
      %v422 = vld [vmem:[%s3 + $0x8c] sm:$0xf]
      %v423 = vld [vmem:[%s3 + $0x90] sm:$0xf]
      %v424 = vld [vmem:[%s3 + $0x94] sm:$0xf]
      %v425 = vld [vmem:[%s3 + $0x98] sm:$0xf]
      %v426 = vld [vmem:[%s3 + $0x9c] sm:$0xf]
      %v427 = vld [vmem:[%s3 + $0xa0] sm:$0xf]
      %v428 = vld [vmem:[%s3 + $0xa4] sm:$0xf]
      %v429 = vld [vmem:[%s3 + $0xa8] sm:$0xf]
      %v430 = vld [vmem:[%s3 + $0xac] sm:$0xf]
      %v431 = vld [vmem:[%s3 + $0xb0] sm:$0xf]
      %v432 = vld [vmem:[%s3 + $0xb4] sm:$0xf]
      %v433 = vld [vmem:[%s3 + $0xb8] sm:$0xf]
      %v434 = vld [vmem:[%s3 + $0xbc] sm:$0xf]
      %s435 = scalar_lea.vmem %s3, 192
      %v436 = vld [vmem:[%s435] sm:$0xf]
      %v437 = vld [vmem:[%s435 + $0x4] sm:$0xf]
      %v438 = vld [vmem:[%s435 + $0x8] sm:$0xf]
      %v439 = vld [vmem:[%s435 + $0xc] sm:$0xf]
      %v440 = vld [vmem:[%s435 + $0x10] sm:$0xf]
      %v441 = vld [vmem:[%s435 + $0x14] sm:$0xf]
      %v442 = vld [vmem:[%s435 + $0x18] sm:$0xf]
      %v443 = vld [vmem:[%s435 + $0x1c] sm:$0xf]
      %v444 = vld [vmem:[%s435 + $0x20] sm:$0xf]
      %v445 = vld [vmem:[%s435 + $0x24] sm:$0xf]
      %v446 = vld [vmem:[%s435 + $0x28] sm:$0xf]
      %v447 = vld [vmem:[%s435 + $0x2c] sm:$0xf]
      %v448 = vld [vmem:[%s435 + $0x30] sm:$0xf]
      %v449 = vld [vmem:[%s435 + $0x34] sm:$0xf]
      %v450 = vld [vmem:[%s435 + $0x38] sm:$0xf]
      %v451 = vld [vmem:[%s435 + $0x3c] sm:$0xf]
      %v452 = vld [vmem:[%s435 + $0x40] sm:$0xf]
      %v453 = vld [vmem:[%s435 + $0x44] sm:$0xf]
      %v454 = vld [vmem:[%s435 + $0x48] sm:$0xf]
      %v455 = vld [vmem:[%s435 + $0x4c] sm:$0xf]
      %v456 = vld [vmem:[%s435 + $0x50] sm:$0xf]
      %v457 = vld [vmem:[%s435 + $0x54] sm:$0xf]
      %v458 = vld [vmem:[%s435 + $0x58] sm:$0xf]
      %v459 = vld [vmem:[%s435 + $0x5c] sm:$0xf]
      %v460 = vld [vmem:[%s435 + $0x60] sm:$0xf]
      %v461 = vld [vmem:[%s435 + $0x64] sm:$0xf]
      %v462 = vld [vmem:[%s435 + $0x68] sm:$0xf]
      %v463 = vld [vmem:[%s435 + $0x6c] sm:$0xf]
      %v464 = vld [vmem:[%s435 + $0x70] sm:$0xf]
      %v465 = vld [vmem:[%s435 + $0x74] sm:$0xf]
      %v466 = vld [vmem:[%s435 + $0x78] sm:$0xf]
      %v467 = vld [vmem:[%s435 + $0x7c] sm:$0xf]
      %v468 = vld [vmem:[%s435 + $0x80] sm:$0xf]
      %v469 = vld [vmem:[%s435 + $0x84] sm:$0xf]
      %v470 = vld [vmem:[%s435 + $0x88] sm:$0xf]
      %v471 = vld [vmem:[%s435 + $0x8c] sm:$0xf]
      %v472 = vld [vmem:[%s435 + $0x90] sm:$0xf]
      %v473 = vld [vmem:[%s435 + $0x94] sm:$0xf]
      %v474 = vld [vmem:[%s435 + $0x98] sm:$0xf]
      %v475 = vld [vmem:[%s435 + $0x9c] sm:$0xf]
      %v476 = vld [vmem:[%s435 + $0xa0] sm:$0xf]
      %v477 = vld [vmem:[%s435 + $0xa4] sm:$0xf]
      %v478 = vld [vmem:[%s435 + $0xa8] sm:$0xf]
      %v479 = vld [vmem:[%s435 + $0xac] sm:$0xf]
      %v480 = vld [vmem:[%s435 + $0xb0] sm:$0xf]
      %v481 = vld [vmem:[%s435 + $0xb4] sm:$0xf]
      %v482 = vld [vmem:[%s435 + $0xb8] sm:$0xf]
      %v483 = vld [vmem:[%s435 + $0xbc] sm:$0xf]
      %v485 = vshrl.u32 %v373, 16
      %v487 = vshll.u32 %v373, 16
      %v489 = vrot.slane %v487, 1
      %v490 = vor.u32 %v485, %v489
      %v492 = vshrl.u32 %v379, 16
      %v494 = vshll.u32 %v379, 16
      %v496 = vrot.slane %v494, 1
      %v497 = vor.u32 %v492, %v496
      %v499 = vshrl.u32 %v385, 16
      %v501 = vshll.u32 %v385, 16
      %v503 = vrot.slane %v501, 1
      %v504 = vor.u32 %v499, %v503
      %v556 = vunpack.c.l.b16 %v436
      %v557 = vunpack.c.l.b16 %v437
      %v558 = vunpack.c.l.b16 %v438
      %v559 = vunpack.c.l.b16 %v439
      %v560 = vunpack.c.l.b16 %v440
      %v561 = vunpack.c.l.b16 %v441
      %v562 = vunpack.c.l.b16 %v442
      %v563 = vunpack.c.l.b16 %v443
      %v564 = vunpack.c.l.b16 %v444
      %v565 = vunpack.c.l.b16 %v445
      %v566 = vunpack.c.l.b16 %v446
      %v567 = vunpack.c.l.b16 %v447
      %v568 = vunpack.c.l.b16 %v448
      %v569 = vunpack.c.l.b16 %v449
      %v570 = vunpack.c.l.b16 %v450
      %v571 = vunpack.c.l.b16 %v451
      %v572 = vunpack.c.l.b16 %v452
      %v573 = vunpack.c.l.b16 %v453
      %v574 = vunpack.c.l.b16 %v454
      %v575 = vunpack.c.l.b16 %v455
      %v576 = vunpack.c.l.b16 %v456
      %v577 = vunpack.c.l.b16 %v457
      %v578 = vunpack.c.l.b16 %v458
      %v579 = vunpack.c.l.b16 %v459
      %v580 = vunpack.c.l.b16 %v460
      %v581 = vunpack.c.l.b16 %v461
      %v582 = vunpack.c.l.b16 %v462
      %v583 = vunpack.c.l.b16 %v463
      %v584 = vunpack.c.l.b16 %v464
      %v585 = vunpack.c.l.b16 %v465
      %v586 = vunpack.c.l.b16 %v466
      %v587 = vunpack.c.l.b16 %v467
      %v588 = vunpack.c.l.b16 %v468
      %v589 = vunpack.c.l.b16 %v469
      %v590 = vunpack.c.l.b16 %v470
      %v591 = vunpack.c.l.b16 %v471
      %v592 = vunpack.c.l.b16 %v472
      %v593 = vunpack.c.l.b16 %v473
      %v594 = vunpack.c.l.b16 %v474
      %v595 = vunpack.c.l.b16 %v475
      %v596 = vunpack.c.l.b16 %v476
      %v597 = vunpack.c.l.b16 %v477
      %v598 = vunpack.c.l.b16 %v478
      %v599 = vunpack.c.l.b16 %v479
      %v600 = vunpack.c.l.b16 %v480
      %v601 = vunpack.c.l.b16 %v481
      %v602 = vunpack.c.l.b16 %v482
      %v603 = vunpack.c.l.b16 %v483
      %v604 = vpack.c.b16 %v557, %v556
      %v605 = vpack.c.b16 %v559, %v558
      %v606 = vpack.c.b16 %v561, %v560
      %v607 = vpack.c.b16 %v563, %v562
      %v608 = vpack.c.b16 %v565, %v564
      %v609 = vpack.c.b16 %v567, %v566
      %v610 = vpack.c.b16 %v569, %v568
      %v611 = vpack.c.b16 %v571, %v570
      %v612 = vpack.c.b16 %v573, %v572
      %v613 = vpack.c.b16 %v575, %v574
      %v614 = vpack.c.b16 %v577, %v576
      %v615 = vpack.c.b16 %v579, %v578
      %v616 = vpack.c.b16 %v581, %v580
      %v617 = vpack.c.b16 %v583, %v582
      %v618 = vpack.c.b16 %v585, %v584
      %v619 = vpack.c.b16 %v587, %v586
      %v620 = vpack.c.b16 %v589, %v588
      %v621 = vpack.c.b16 %v591, %v590
      %v622 = vpack.c.b16 %v593, %v592
      %v623 = vpack.c.b16 %v595, %v594
      %v624 = vpack.c.b16 %v597, %v596
      %v625 = vpack.c.b16 %v599, %v598
      %v626 = vpack.c.b16 %v601, %v600
      %v627 = vpack.c.b16 %v603, %v602
      %652 = vmatprep.subr.bf16.mxu0 0
      %653 = vmatpush1.bf16.msra.mxu0 %v604
      %654 = vmatprep.subr.bf16.mxu0 0
      %655 = vmatpush1.bf16.msra.mxu0 %v605
      %656 = vmatprep.subr.bf16.mxu0 0
      %657 = vmatpush1.bf16.msra.mxu0 %v606
      %658 = vmatprep.subr.bf16.mxu0 0
      %659 = vmatpush1.bf16.msra.mxu0 %v607
      %660 = vmatprep.subr.bf16.mxu0 0
      %661 = vmatpush1.bf16.msra.mxu0 %v608
      %662 = vmatprep.subr.bf16.mxu0 0
      %663 = vmatpush1.bf16.msra.mxu0 %v609
      %664 = vmatprep.subr.bf16.mxu0 0
      %665 = vmatpush1.bf16.msra.mxu0 %v610
      %666 = vmatprep.subr.bf16.mxu0 0
      %667 = vmatpush1.bf16.msra.mxu0 %v611
      %668 = vmatprep.subr.bf16.mxu0 0
      %669 = vmatpush1.bf16.msra.mxu0 %v612
      %670 = vmatprep.subr.bf16.mxu0 0
      %671 = vmatpush1.bf16.msra.mxu0 %v613
      %672 = vmatprep.subr.bf16.mxu0 0
      %673 = vmatpush1.bf16.msra.mxu0 %v614
      %674 = vmatprep.subr.bf16.mxu0 0
      %675 = vmatpush1.bf16.msra.mxu0 %v615
      %676 = vmatprep.subr.bf16.mxu0 0
      %677 = vmatpush1.bf16.msra.mxu0 %v616
      %678 = vmatprep.subr.bf16.mxu0 0
      %679 = vmatpush1.bf16.msra.mxu0 %v617
      %680 = vmatprep.subr.bf16.mxu0 0
      %681 = vmatpush1.bf16.msra.mxu0 %v618
      %682 = vmatprep.subr.bf16.mxu0 0
      %683 = vmatpush1.bf16.msra.mxu0 %v619
      %684 = vmatprep.mubr.bf16.mxu0 %v497
      %685 = vmatmul.mubr.bf16.gmra.mrb[0].mxu0 %v490
      %v686 = vpop.f32.mrb[0].mxu0
      %v687 = vadd.f32 0.0, %v686
      %v688 = vpop.f32.mrb[0].mxu0
      %v689 = vpop.f32.mrb[0].mxu0
      %v690 = vpop.f32.mrb[0].mxu0
      %691 = vdwg.mxu0
      %692 = vmatprep.subr.bf16.mxu0 0
      %693 = vmatpush1.bf16.msra.mxu0 %v620
      %694 = vmatprep.subr.bf16.mxu0 0
      %695 = vmatpush1.bf16.msra.mxu0 %v621
      %696 = vmatprep.subr.bf16.mxu0 0
      %697 = vmatpush1.bf16.msra.mxu0 %v622
      %698 = vmatprep.subr.bf16.mxu0 0
      %699 = vmatpush1.bf16.msra.mxu0 %v623
      %700 = vmatprep.subr.bf16.mxu0 0
      %701 = vmatpush1.bf16.msra.mxu0 %v624
      %702 = vmatprep.subr.bf16.mxu0 0
      %703 = vmatpush1.bf16.msra.mxu0 %v625
      %704 = vmatprep.subr.bf16.mxu0 0
      %705 = vmatpush1.bf16.msra.mxu0 %v626
      %706 = vmatprep.subr.bf16.mxu0 0
      %707 = vmatpush1.bf16.msra.mxu0 %v627
      %708 = vmatprep.subr.bf16.mxu0 0
      %709 = vmatpush1.bf16.msra.mxu0 0
      %710 = vmatprep.subr.bf16.mxu0 0
      %711 = vmatpush1.bf16.msra.mxu0 0
      %712 = vmatprep.subr.bf16.mxu0 0
      %713 = vmatpush1.bf16.msra.mxu0 0
      %714 = vmatprep.subr.bf16.mxu0 0
      %715 = vmatpush1.bf16.msra.mxu0 0
      %716 = vmatprep.subr.bf16.mxu0 0
      %717 = vmatpush1.bf16.msra.mxu0 0
      %718 = vmatprep.subr.bf16.mxu0 0
      %719 = vmatpush1.bf16.msra.mxu0 0
      %720 = vmatprep.subr.bf16.mxu0 0
      %721 = vmatpush1.bf16.msra.mxu0 0
      %722 = vmatprep.subr.bf16.mxu0 0
      %723 = vmatpush1.bf16.msra.mxu0 0
      %724 = vmatprep.mubr.bf16.mxu0 0
      %725 = vmatmul.mubr.bf16.gmra.mrb[0].mxu0 %v504
      %v726 = vpop.f32.mrb[0].mxu0
      %v727 = vadd.f32 %v687, %v726
      %v728 = vpop.f32.mrb[0].mxu0
      %v729 = vpop.f32.mrb[0].mxu0
      %v730 = vpop.f32.mrb[0].mxu0
      %731 = vdwg.mxu0
      %v780 = vunpack.c.l.b16 %v387
      %v781 = vunpack.c.l.b16 %v388
      %v782 = vunpack.c.l.b16 %v389
      %v783 = vunpack.c.l.b16 %v390
      %v784 = vunpack.c.l.b16 %v391
      %v785 = vunpack.c.l.b16 %v392
      %v786 = vunpack.c.l.b16 %v393
      %v787 = vunpack.c.l.b16 %v394
      %v788 = vunpack.c.l.b16 %v395
      %v789 = vunpack.c.l.b16 %v396
      %v790 = vunpack.c.l.b16 %v397
      %v791 = vunpack.c.l.b16 %v398
      %v792 = vunpack.c.l.b16 %v399
      %v793 = vunpack.c.l.b16 %v400
      %v794 = vunpack.c.l.b16 %v401
      %v795 = vunpack.c.l.b16 %v402
      %v796 = vunpack.c.l.b16 %v403
      %v797 = vunpack.c.l.b16 %v404
      %v798 = vunpack.c.l.b16 %v405
      %v799 = vunpack.c.l.b16 %v406
      %v800 = vunpack.c.l.b16 %v407
      %v801 = vunpack.c.l.b16 %v408
      %v802 = vunpack.c.l.b16 %v409
      %v803 = vunpack.c.l.b16 %v410
      %v804 = vunpack.c.l.b16 %v411
      %v805 = vunpack.c.l.b16 %v412
      %v806 = vunpack.c.l.b16 %v413
      %v807 = vunpack.c.l.b16 %v414
      %v808 = vunpack.c.l.b16 %v415
      %v809 = vunpack.c.l.b16 %v416
      %v810 = vunpack.c.l.b16 %v417
      %v811 = vunpack.c.l.b16 %v418
      %v812 = vunpack.c.l.b16 %v419
      %v813 = vunpack.c.l.b16 %v420
      %v814 = vunpack.c.l.b16 %v421
      %v815 = vunpack.c.l.b16 %v422
      %v816 = vunpack.c.l.b16 %v423
      %v817 = vunpack.c.l.b16 %v424
      %v818 = vunpack.c.l.b16 %v425
      %v819 = vunpack.c.l.b16 %v426
      %v820 = vunpack.c.l.b16 %v427
      %v821 = vunpack.c.l.b16 %v428
      %v822 = vunpack.c.l.b16 %v429
      %v823 = vunpack.c.l.b16 %v430
      %v824 = vunpack.c.l.b16 %v431
      %v825 = vunpack.c.l.b16 %v432
      %v826 = vunpack.c.l.b16 %v433
      %v827 = vunpack.c.l.b16 %v434
      %v828 = vpack.c.b16 %v781, %v780
      %v829 = vpack.c.b16 %v783, %v782
      %v830 = vpack.c.b16 %v785, %v784
      %v831 = vpack.c.b16 %v787, %v786
      %v832 = vpack.c.b16 %v789, %v788
      %v833 = vpack.c.b16 %v791, %v790
      %v834 = vpack.c.b16 %v793, %v792
      %v835 = vpack.c.b16 %v795, %v794
      %v836 = vpack.c.b16 %v797, %v796
      %v837 = vpack.c.b16 %v799, %v798
      %v838 = vpack.c.b16 %v801, %v800
      %v839 = vpack.c.b16 %v803, %v802
      %v840 = vpack.c.b16 %v805, %v804
      %v841 = vpack.c.b16 %v807, %v806
      %v842 = vpack.c.b16 %v809, %v808
      %v843 = vpack.c.b16 %v811, %v810
      %v844 = vpack.c.b16 %v813, %v812
      %v845 = vpack.c.b16 %v815, %v814
      %v846 = vpack.c.b16 %v817, %v816
      %v847 = vpack.c.b16 %v819, %v818
      %v848 = vpack.c.b16 %v821, %v820
      %v849 = vpack.c.b16 %v823, %v822
      %v850 = vpack.c.b16 %v825, %v824
      %v851 = vpack.c.b16 %v827, %v826
      %876 = vmatprep.subr.bf16.mxu0 0
      %877 = vmatpush1.bf16.msra.mxu0 %v828
      %878 = vmatprep.subr.bf16.mxu0 0
      %879 = vmatpush1.bf16.msra.mxu0 %v829
      %880 = vmatprep.subr.bf16.mxu0 0
      %881 = vmatpush1.bf16.msra.mxu0 %v830
      %882 = vmatprep.subr.bf16.mxu0 0
      %883 = vmatpush1.bf16.msra.mxu0 %v831
      %884 = vmatprep.subr.bf16.mxu0 0
      %885 = vmatpush1.bf16.msra.mxu0 %v832
      %886 = vmatprep.subr.bf16.mxu0 0
      %887 = vmatpush1.bf16.msra.mxu0 %v833
      %888 = vmatprep.subr.bf16.mxu0 0
      %889 = vmatpush1.bf16.msra.mxu0 %v834
      %890 = vmatprep.subr.bf16.mxu0 0
      %891 = vmatpush1.bf16.msra.mxu0 %v835
      %892 = vmatprep.subr.bf16.mxu0 0
      %893 = vmatpush1.bf16.msra.mxu0 %v836
      %894 = vmatprep.subr.bf16.mxu0 0
      %895 = vmatpush1.bf16.msra.mxu0 %v837
      %896 = vmatprep.subr.bf16.mxu0 0
      %897 = vmatpush1.bf16.msra.mxu0 %v838
      %898 = vmatprep.subr.bf16.mxu0 0
      %899 = vmatpush1.bf16.msra.mxu0 %v839
      %900 = vmatprep.subr.bf16.mxu0 0
      %901 = vmatpush1.bf16.msra.mxu0 %v840
      %902 = vmatprep.subr.bf16.mxu0 0
      %903 = vmatpush1.bf16.msra.mxu0 %v841
      %904 = vmatprep.subr.bf16.mxu0 0
      %905 = vmatpush1.bf16.msra.mxu0 %v842
      %906 = vmatprep.subr.bf16.mxu0 0
      %907 = vmatpush1.bf16.msra.mxu0 %v843
      %908 = vmatprep.mubr.bf16.mxu0 %v379
      %909 = vmatmul.mubr.bf16.gmra.mrb[0].mxu0 %v373
      %v910 = vpop.f32.mrb[0].mxu0
      %v911 = vadd.f32 %v727, %v910
      %v912 = vpop.f32.mrb[0].mxu0
      %v913 = vpop.f32.mrb[0].mxu0
      %v914 = vpop.f32.mrb[0].mxu0
      %915 = vdwg.mxu0
      %916 = vmatprep.subr.bf16.mxu0 0
      %917 = vmatpush1.bf16.msra.mxu0 %v844
      %918 = vmatprep.subr.bf16.mxu0 0
      %919 = vmatpush1.bf16.msra.mxu0 %v845
      %920 = vmatprep.subr.bf16.mxu0 0
      %921 = vmatpush1.bf16.msra.mxu0 %v846
      %922 = vmatprep.subr.bf16.mxu0 0
      %923 = vmatpush1.bf16.msra.mxu0 %v847
      %924 = vmatprep.subr.bf16.mxu0 0
      %925 = vmatpush1.bf16.msra.mxu0 %v848
      %926 = vmatprep.subr.bf16.mxu0 0
      %927 = vmatpush1.bf16.msra.mxu0 %v849
      %928 = vmatprep.subr.bf16.mxu0 0
      %929 = vmatpush1.bf16.msra.mxu0 %v850
      %930 = vmatprep.subr.bf16.mxu0 0
      %931 = vmatpush1.bf16.msra.mxu0 %v851
      %932 = vmatprep.subr.bf16.mxu0 0
      %933 = vmatpush1.bf16.msra.mxu0 0
      %934 = vmatprep.subr.bf16.mxu0 0
      %935 = vmatpush1.bf16.msra.mxu0 0
      %936 = vmatprep.subr.bf16.mxu0 0
      %937 = vmatpush1.bf16.msra.mxu0 0
      %938 = vmatprep.subr.bf16.mxu0 0
      %939 = vmatpush1.bf16.msra.mxu0 0
      %940 = vmatprep.subr.bf16.mxu0 0
      %941 = vmatpush1.bf16.msra.mxu0 0
      %942 = vmatprep.subr.bf16.mxu0 0
      %943 = vmatpush1.bf16.msra.mxu0 0
      %944 = vmatprep.subr.bf16.mxu0 0
      %945 = vmatpush1.bf16.msra.mxu0 0
      %946 = vmatprep.subr.bf16.mxu0 0
      %947 = vmatpush1.bf16.msra.mxu0 0
      %948 = vmatprep.mubr.bf16.mxu0 0
      %949 = vmatmul.mubr.bf16.gmra.mrb[0].mxu0 %v385
      %v950 = vpop.f32.mrb[0].mxu0
      %v951 = vadd.f32 %v911, %v950
      %v952 = vpop.f32.mrb[0].mxu0
      %v953 = vpop.f32.mrb[0].mxu0
      %v954 = vpop.f32.mrb[0].mxu0
      %955 = vdwg.mxu0
      %s956 = scalar_lea.vmem %s3, 384
      %v957 = vld [vmem:[%s956] sm:$0xf]
      %v958 = vld [vmem:[%s956 + $0x4] sm:$0xf]
      %v959 = vld [vmem:[%s956 + $0x8] sm:$0xf]
      %v960 = vld [vmem:[%s956 + $0xc] sm:$0xf]
      %v961 = vld [vmem:[%s956 + $0x10] sm:$0xf]
      %v962 = vld [vmem:[%s956 + $0x14] sm:$0xf]
      %v963 = vld [vmem:[%s956 + $0x18] sm:$0xf]
      %v964 = vld [vmem:[%s956 + $0x1c] sm:$0xf]
      %v965 = vld [vmem:[%s956 + $0x20] sm:$0xf]
      %v966 = vld [vmem:[%s956 + $0x24] sm:$0xf]
      %v967 = vld [vmem:[%s956 + $0x28] sm:$0xf]
      %v968 = vld [vmem:[%s956 + $0x2c] sm:$0xf]
      %v969 = vld [vmem:[%s956 + $0x30] sm:$0xf]
      %v970 = vld [vmem:[%s956 + $0x34] sm:$0xf]
      %v971 = vld [vmem:[%s956 + $0x38] sm:$0xf]
      %v972 = vld [vmem:[%s956 + $0x3c] sm:$0xf]
      %v973 = vld [vmem:[%s956 + $0x40] sm:$0xf]
      %v974 = vld [vmem:[%s956 + $0x44] sm:$0xf]
      %v975 = vld [vmem:[%s956 + $0x48] sm:$0xf]
      %v976 = vld [vmem:[%s956 + $0x4c] sm:$0xf]
      %v977 = vld [vmem:[%s956 + $0x50] sm:$0xf]
      %v978 = vld [vmem:[%s956 + $0x54] sm:$0xf]
      %v979 = vld [vmem:[%s956 + $0x58] sm:$0xf]
      %v980 = vld [vmem:[%s956 + $0x5c] sm:$0xf]
      %v981 = vld [vmem:[%s956 + $0x60] sm:$0xf]
      %v982 = vld [vmem:[%s956 + $0x64] sm:$0xf]
      %v983 = vld [vmem:[%s956 + $0x68] sm:$0xf]
      %v984 = vld [vmem:[%s956 + $0x6c] sm:$0xf]
      %v985 = vld [vmem:[%s956 + $0x70] sm:$0xf]
      %v986 = vld [vmem:[%s956 + $0x74] sm:$0xf]
      %v987 = vld [vmem:[%s956 + $0x78] sm:$0xf]
      %v988 = vld [vmem:[%s956 + $0x7c] sm:$0xf]
      %v989 = vld [vmem:[%s956 + $0x80] sm:$0xf]
      %v990 = vld [vmem:[%s956 + $0x84] sm:$0xf]
      %v991 = vld [vmem:[%s956 + $0x88] sm:$0xf]
      %v992 = vld [vmem:[%s956 + $0x8c] sm:$0xf]
      %v993 = vld [vmem:[%s956 + $0x90] sm:$0xf]
      %v994 = vld [vmem:[%s956 + $0x94] sm:$0xf]
      %v995 = vld [vmem:[%s956 + $0x98] sm:$0xf]
      %v996 = vld [vmem:[%s956 + $0x9c] sm:$0xf]
      %v997 = vld [vmem:[%s956 + $0xa0] sm:$0xf]
      %v998 = vld [vmem:[%s956 + $0xa4] sm:$0xf]
      %v999 = vld [vmem:[%s956 + $0xa8] sm:$0xf]
      %v1000 = vld [vmem:[%s956 + $0xac] sm:$0xf]
      %v1001 = vld [vmem:[%s956 + $0xb0] sm:$0xf]
      %v1002 = vld [vmem:[%s956 + $0xb4] sm:$0xf]
      %v1003 = vld [vmem:[%s956 + $0xb8] sm:$0xf]
      %v1004 = vld [vmem:[%s956 + $0xbc] sm:$0xf]
      %v1005 = vrot.slane %v373, 1
      %v1006 = vrot.slane %v379, 1
      %v1007 = vrot.slane %v385, 1
      %v1059 = vunpack.c.l.b16 %v957
      %v1060 = vunpack.c.l.b16 %v958
      %v1061 = vunpack.c.l.b16 %v959
      %v1062 = vunpack.c.l.b16 %v960
      %v1063 = vunpack.c.l.b16 %v961
      %v1064 = vunpack.c.l.b16 %v962
      %v1065 = vunpack.c.l.b16 %v963
      %v1066 = vunpack.c.l.b16 %v964
      %v1067 = vunpack.c.l.b16 %v965
      %v1068 = vunpack.c.l.b16 %v966
      %v1069 = vunpack.c.l.b16 %v967
      %v1070 = vunpack.c.l.b16 %v968
      %v1071 = vunpack.c.l.b16 %v969
      %v1072 = vunpack.c.l.b16 %v970
      %v1073 = vunpack.c.l.b16 %v971
      %v1074 = vunpack.c.l.b16 %v972
      %v1075 = vunpack.c.l.b16 %v973
      %v1076 = vunpack.c.l.b16 %v974
      %v1077 = vunpack.c.l.b16 %v975
      %v1078 = vunpack.c.l.b16 %v976
      %v1079 = vunpack.c.l.b16 %v977
      %v1080 = vunpack.c.l.b16 %v978
      %v1081 = vunpack.c.l.b16 %v979
      %v1082 = vunpack.c.l.b16 %v980
      %v1083 = vunpack.c.l.b16 %v981
      %v1084 = vunpack.c.l.b16 %v982
      %v1085 = vunpack.c.l.b16 %v983
      %v1086 = vunpack.c.l.b16 %v984
      %v1087 = vunpack.c.l.b16 %v985
      %v1088 = vunpack.c.l.b16 %v986
      %v1089 = vunpack.c.l.b16 %v987
      %v1090 = vunpack.c.l.b16 %v988
      %v1091 = vunpack.c.l.b16 %v989
      %v1092 = vunpack.c.l.b16 %v990
      %v1093 = vunpack.c.l.b16 %v991
      %v1094 = vunpack.c.l.b16 %v992
      %v1095 = vunpack.c.l.b16 %v993
      %v1096 = vunpack.c.l.b16 %v994
      %v1097 = vunpack.c.l.b16 %v995
      %v1098 = vunpack.c.l.b16 %v996
      %v1099 = vunpack.c.l.b16 %v997
      %v1100 = vunpack.c.l.b16 %v998
      %v1101 = vunpack.c.l.b16 %v999
      %v1102 = vunpack.c.l.b16 %v1000
      %v1103 = vunpack.c.l.b16 %v1001
      %v1104 = vunpack.c.l.b16 %v1002
      %v1105 = vunpack.c.l.b16 %v1003
      %v1106 = vunpack.c.l.b16 %v1004
      %v1107 = vpack.c.b16 %v1060, %v1059
      %v1108 = vpack.c.b16 %v1062, %v1061
      %v1109 = vpack.c.b16 %v1064, %v1063
      %v1110 = vpack.c.b16 %v1066, %v1065
      %v1111 = vpack.c.b16 %v1068, %v1067
      %v1112 = vpack.c.b16 %v1070, %v1069
      %v1113 = vpack.c.b16 %v1072, %v1071
      %v1114 = vpack.c.b16 %v1074, %v1073
      %v1115 = vpack.c.b16 %v1076, %v1075
      %v1116 = vpack.c.b16 %v1078, %v1077
      %v1117 = vpack.c.b16 %v1080, %v1079
      %v1118 = vpack.c.b16 %v1082, %v1081
      %v1119 = vpack.c.b16 %v1084, %v1083
      %v1120 = vpack.c.b16 %v1086, %v1085
      %v1121 = vpack.c.b16 %v1088, %v1087
      %v1122 = vpack.c.b16 %v1090, %v1089
      %v1123 = vpack.c.b16 %v1092, %v1091
      %v1124 = vpack.c.b16 %v1094, %v1093
      %v1125 = vpack.c.b16 %v1096, %v1095
      %v1126 = vpack.c.b16 %v1098, %v1097
      %v1127 = vpack.c.b16 %v1100, %v1099
      %v1128 = vpack.c.b16 %v1102, %v1101
      %v1129 = vpack.c.b16 %v1104, %v1103
      %v1130 = vpack.c.b16 %v1106, %v1105
      %1155 = vmatprep.subr.bf16.mxu0 0
      %1156 = vmatpush1.bf16.msra.mxu0 %v1107
      %1157 = vmatprep.subr.bf16.mxu0 0
      %1158 = vmatpush1.bf16.msra.mxu0 %v1108
      %1159 = vmatprep.subr.bf16.mxu0 0
      %1160 = vmatpush1.bf16.msra.mxu0 %v1109
      %1161 = vmatprep.subr.bf16.mxu0 0
      %1162 = vmatpush1.bf16.msra.mxu0 %v1110
      %1163 = vmatprep.subr.bf16.mxu0 0
      %1164 = vmatpush1.bf16.msra.mxu0 %v1111
      %1165 = vmatprep.subr.bf16.mxu0 0
      %1166 = vmatpush1.bf16.msra.mxu0 %v1112
      %1167 = vmatprep.subr.bf16.mxu0 0
      %1168 = vmatpush1.bf16.msra.mxu0 %v1113
      %1169 = vmatprep.subr.bf16.mxu0 0
      %1170 = vmatpush1.bf16.msra.mxu0 %v1114
      %1171 = vmatprep.subr.bf16.mxu0 0
      %1172 = vmatpush1.bf16.msra.mxu0 %v1115
      %1173 = vmatprep.subr.bf16.mxu0 0
      %1174 = vmatpush1.bf16.msra.mxu0 %v1116
      %1175 = vmatprep.subr.bf16.mxu0 0
      %1176 = vmatpush1.bf16.msra.mxu0 %v1117
      %1177 = vmatprep.subr.bf16.mxu0 0
      %1178 = vmatpush1.bf16.msra.mxu0 %v1118
      %1179 = vmatprep.subr.bf16.mxu0 0
      %1180 = vmatpush1.bf16.msra.mxu0 %v1119
      %1181 = vmatprep.subr.bf16.mxu0 0
      %1182 = vmatpush1.bf16.msra.mxu0 %v1120
      %1183 = vmatprep.subr.bf16.mxu0 0
      %1184 = vmatpush1.bf16.msra.mxu0 %v1121
      %1185 = vmatprep.subr.bf16.mxu0 0
      %1186 = vmatpush1.bf16.msra.mxu0 %v1122
      %1187 = vmatprep.mubr.bf16.mxu0 %v1006
      %1188 = vmatmul.mubr.bf16.gmra.mrb[0].mxu0 %v1005
      %v1189 = vpop.f32.mrb[0].mxu0
      %v1190 = vadd.f32 0.0, %v1189
      %v1191 = vpop.f32.mrb[0].mxu0
      %v1192 = vpop.f32.mrb[0].mxu0
      %v1193 = vpop.f32.mrb[0].mxu0
      %1194 = vdwg.mxu0
      %1195 = vmatprep.subr.bf16.mxu0 0
      %1196 = vmatpush1.bf16.msra.mxu0 %v1123
      %1197 = vmatprep.subr.bf16.mxu0 0
      %1198 = vmatpush1.bf16.msra.mxu0 %v1124
      %1199 = vmatprep.subr.bf16.mxu0 0
      %1200 = vmatpush1.bf16.msra.mxu0 %v1125
      %1201 = vmatprep.subr.bf16.mxu0 0
      %1202 = vmatpush1.bf16.msra.mxu0 %v1126
      %1203 = vmatprep.subr.bf16.mxu0 0
      %1204 = vmatpush1.bf16.msra.mxu0 %v1127
      %1205 = vmatprep.subr.bf16.mxu0 0
      %1206 = vmatpush1.bf16.msra.mxu0 %v1128
      %1207 = vmatprep.subr.bf16.mxu0 0
      %1208 = vmatpush1.bf16.msra.mxu0 %v1129
      %1209 = vmatprep.subr.bf16.mxu0 0
      %1210 = vmatpush1.bf16.msra.mxu0 %v1130
      %1211 = vmatprep.subr.bf16.mxu0 0
      %1212 = vmatpush1.bf16.msra.mxu0 0
      %1213 = vmatprep.subr.bf16.mxu0 0
      %1214 = vmatpush1.bf16.msra.mxu0 0
      %1215 = vmatprep.subr.bf16.mxu0 0
      %1216 = vmatpush1.bf16.msra.mxu0 0
      %1217 = vmatprep.subr.bf16.mxu0 0
      %1218 = vmatpush1.bf16.msra.mxu0 0
      %1219 = vmatprep.subr.bf16.mxu0 0
      %1220 = vmatpush1.bf16.msra.mxu0 0
      %1221 = vmatprep.subr.bf16.mxu0 0
      %1222 = vmatpush1.bf16.msra.mxu0 0
      %1223 = vmatprep.subr.bf16.mxu0 0
      %1224 = vmatpush1.bf16.msra.mxu0 0
      %1225 = vmatprep.subr.bf16.mxu0 0
      %1226 = vmatpush1.bf16.msra.mxu0 0
      %1227 = vmatprep.mubr.bf16.mxu0 0
      %1228 = vmatmul.mubr.bf16.gmra.mrb[0].mxu0 %v1007
      %v1229 = vpop.f32.mrb[0].mxu0
      %v1230 = vadd.f32 %v1190, %v1229
      %v1231 = vpop.f32.mrb[0].mxu0
      %v1232 = vpop.f32.mrb[0].mxu0
      %v1233 = vpop.f32.mrb[0].mxu0
      %1234 = vdwg.mxu0
      %v1235 = vadd.f32 %v951, %v1230
      %v1236 = vpack.c.bf16 %v1235, %v1235
      %1237 = vst [vmem:[%s353] sm:$0xf] %v1236
      %v1238 = vrot.slane %v1235, 4
      %v1239 = vadd.f32 %v1235, %v1238
      %v1240 = vrot.slane %v1239, 2
      %v1241 = vadd.f32 %v1239, %v1240
      %v1242 = vrot.slane %v1241, 1
      %v1243 = vadd.f32 %v1241, %v1242
      %v1244 = vmul.f32 %v1235, %v1235
      %v1245 = vrot.slane %v1244, 4
      %v1246 = vadd.f32 %v1244, %v1245
      %v1247 = vrot.slane %v1246, 2
      %v1248 = vadd.f32 %v1246, %v1247
      %v1249 = vrot.slane %v1248, 1
      %v1250 = vadd.f32 %v1248, %v1249
      %vm1251 = vcmask 1040384
      %v1252 = vsel %vm1251, %v1243, %v1250
      %1253 = vst [vmem:[%s361] sm:$0x3] %v1252
      %p1254 = scmp.lt.s32.totalorder %s21, 1
      %s1255 = scalar_select %p1254, %s21, 1
      %p1256 = scmp.lt.s32.totalorder %s22, 7
      %s1257 = scalar_select %p1256, %s22, 7
      %s1258 = smul.addr %s1255, 8
      %s1259 = sadd.s32 %s1257, %s1258
      %s1260 = smul.addr %s1259, 4
      %s1261 = scalar_lea.vmem %s4, %s1260
      %p1262 = scmp.lt.s32.totalorder %s21, 1
      %s1263 = scalar_select %p1262, %s21, 1
      %p1264 = scmp.lt.s32.totalorder %s22, 7
      %s1265 = scalar_select %p1264, %s22, 7
      %s1266 = smul.addr %s1263, 8
      %s1267 = sadd.s32 %s1265, %s1266
      %s1268 = smul.addr %s1267, 2
      %s1269 = scalar_lea.vmem %s5, %s1268
      // Predicated region
      $region37: #{down_forward.6} parent=35 // pred_check
        %p1270 = pneg %p158
      $region38: #{down_forward.6} parent=35 // pred_check_branch
        %1272 = sbr.rel (%p1270) target = $region40
      $region39: #{down_forward.6} parent=35 // pred_region
        _
      $region40: #{down_forward.6} parent=35 // pred_fallthru
        _
      // Predicated region
      $region41: #{down_forward.6} parent=35 // pred_check
        %p1273 = pneg %p186
      $region42: #{down_forward.6} parent=35 // pred_check_branch
        %1275 = sbr.rel (%p1273) target = $region44
      $region43: #{down_forward.6} parent=35 // pred_region
        _
      $region44: #{down_forward.6} parent=35 // pred_fallthru
        _
    $region36: #{down_forward.6} parent=5 // pred_fallthru
      _
    %p1276 = scmp.le.s32.totalorder 2, %s12
    // Predicated region
    $region45: #{down_forward.6} parent=5 // pred_check
      %p1277 = pneg %p1276
    $region46: #{down_forward.6} parent=5 // pred_check_branch
      %1279 = sbr.rel (%p1277) target = $region48
    $region47: #{down_forward.6} parent=5 // pred_region
      %s1280 = ssub.s32 %s12, 2
      // Predicated region
      $region49: #{down_forward.6} parent=47 // pred_check
        %p1281 = pneg %p164
      $region50: #{down_forward.6} parent=47 // pred_check_branch
        %1283 = sbr.rel (%p1281) target = $region52
      $region51: #{down_forward.6} parent=47 // pred_region
        %p1284 = scmp.lt.s32.totalorder %s23, 1
        %s1285 = scalar_select %p1284, %s23, 1
        %p1286 = scmp.lt.s32.totalorder %s24, 7
        %s1287 = scalar_select %p1286, %s24, 7
        %s1288 = smul.addr %s1285, 8
        %s1289 = sadd.s32 %s1287, %s1288
        %s1290 = smul.addr %s1289, 4
        %s1291 = scalar_lea.vmem %s4, %s1290
      $region52: #{down_forward.6} parent=47 // pred_fallthru
        _
      // Predicated region
      $region53: #{down_forward.6} parent=47 // pred_check
        %p1292 = pneg %p192
      $region54: #{down_forward.6} parent=47 // pred_check_branch
        %1294 = sbr.rel (%p1292) target = $region56
      $region55: #{down_forward.6} parent=47 // pred_region
        %p1295 = scmp.lt.s32.totalorder %s23, 1
        %s1296 = scalar_select %p1295, %s23, 1
        %p1297 = scmp.lt.s32.totalorder %s24, 7
        %s1298 = scalar_select %p1297, %s24, 7
        %s1299 = smul.addr %s1296, 8
        %s1300 = sadd.s32 %s1298, %s1299
        %s1301 = smul.addr %s1300, 2
        %s1302 = scalar_lea.vmem %s5, %s1301
      $region56: #{down_forward.6} parent=47 // pred_fallthru
        _
    $region48: #{down_forward.6} parent=5 // pred_fallthru
      _
  $region6: #{down_forward.6} parent=0 // loop_footer
    %s16 = sadd.s32 1, %s12
  $region7: #{down_forward.6} parent=0 // loop_footer_branch
    %11 = sbr.rel target = $region3
  $region8: #{down_forward.6} parent=0 // loop_exit
    _

</llo_original>
